<compile_context>
chip_gen: v5e
topology: v5e:2x2
jax: 0.10.0
libtpu: 0.0.40
codegen_flags: <defaults>
</compile_context>

<pallas_src>
import jax
import jax.numpy as jnp
from jax.experimental import pallas as pl
from jax.experimental.pallas import tpu as pltpu

_VMEM_LIMIT = 32 * 1024 * 1024   # explicit cap (review item); actual usage ~4 MB / call


# ----------------------------- Pallas kernels ------------------------------

def _conv_stack_kernel(p_ref, w1_ref, b1_ref, w2_ref, b2_ref, out_ref):
    """Fused conv1+BN+ReLU+pool1 + conv2+BN+ReLU+pool2 for ONE sample.

    p_ref  : (1, 4, 144, 32) f32   conv1 im2col patches, pool-phase major; row r = i*12+j
                                   indexes the 12x12 pool1 grid, tap t = di*5+dj (25->32 pad).
    w1_ref : (32, 32)        f32   BN-folded conv1 weights [tap, out_ch] (taps padded).
    b1_ref : (1, 32)         f32
    w2_ref : (800, 64)       bf16  BN-folded conv2 weights [(di*5+dj)*32 + c, out_ch].
    b2_ref : (1, 64)         f32
    out_ref: (1, 16, 64)     f32   pool2 output, rows ordered (h, w), channels in lanes.
    """
    # ---- conv1 (one MXU matmul per pooling phase) + bias + ReLU, pool1 = max of phases ----
    w1 = w1_ref[...]
    b1 = b1_ref[...]
    p1 = None
    for ph in range(4):
        y = jnp.dot(p_ref[0, ph, :, :], w1,
                    preferred_element_type=jnp.float32)          # (144, 32)
        y = jnp.maximum(y + b1, 0.0)
        p1 = y if p1 is None else jnp.maximum(p1, y)
    # p1: (144, 32) = pool1 output, row r = spatial (r // 12, r % 12), channels in lanes.

    # ---- conv2: in-VMEM im2col via lane-concat, one MXU matmul per output row ----
    w2 = w2_ref[...]                                             # (800, 64) bf16
    b2 = b2_ref[...]                                             # (1, 64)   f32
    y2_rows = []
    for i in range(8):                                           # conv2 output rows
        pieces = []
        for di in range(5):
            base = (i + di) * 12
            for dj in range(5):
                pieces.append(p1[base + dj: base + dj + 8, :])   # (8, 32) f32 slice
        xrow = jnp.concatenate(pieces, axis=1).astype(jnp.bfloat16)   # (8, 800) bf16
        acc = jnp.dot(xrow, w2, preferred_element_type=jnp.float32)   # (8, 64)  f32
        y2_rows.append(jnp.maximum(acc + b2, 0.0))

    # ---- pool2 (2x2) + (h, w, c) flatten (fc1 weight rows are permuted to match) ----
    chunks = []
    for u in range(4):
        rm = jnp.maximum(y2_rows[2 * u], y2_rows[2 * u + 1])     # (8, 64) max over row pair
        for v in range(4):
            chunks.append(jnp.maximum(rm[2 * v: 2 * v + 1, :],
                                      rm[2 * v + 1: 2 * v + 2, :]))   # (1, 64)
    out_ref[...] = jnp.concatenate(chunks, axis=0)[None, :, :]        # (1, 16, 64)


def _fc_kernel(x_ref, w1_ref, b1_ref, w2_ref, b2_ref, o_ref):
    """Fused fc1 + ReLU + fc2 on one row tile; bf16 MXU operands, f32 accumulation."""
    x = x_ref[...].astype(jnp.bfloat16)                                   # (tm, 1024)
    h = jnp.dot(x, w1_ref[...], preferred_element_type=jnp.float32)       # (tm, 512)
    h = jnp.maximum(h + b1_ref[...], 0.0).astype(jnp.bfloat16)
    o = jnp.dot(h, w2_ref[...], preferred_element_type=jnp.float32)       # (tm, 128)
    o_ref[...] = o + b2_ref[...]                                          # lane-dense store


# ------------------------------- wrappers -----------------------------------

def _conv1_patches(x):
    """x: (N, 28, 28) f32 -> (N, 4, 144, 32) pool-phase-ordered conv1 im2col patches.

    phase = pi*2 + pj (parity of the conv1 output coords), so pool1 becomes a plain
    elementwise max of the 4 phase results inside the kernel.  This touches only the
    6 KB input (conv2's much larger im2col is built in VMEM inside the kernel).
    """
    n = x.shape[0]
    phases = []
    for pi in range(2):
        for pj in range(2):
            taps = []
            for di in range(5):
                for dj in range(5):
                    taps.append(x[:, pi + di::2, pj + dj::2][:, :12, :12])  # (N,12,12)
            phases.append(jnp.stack(taps, axis=-1).reshape(n, 144, 25))
    p = jnp.stack(phases, axis=1)                          # (N, 4, 144, 25)
    return jnp.pad(p, ((0, 0), (0, 0), (0, 0), (0, 7)))    # pad taps 25 -> 32


def _conv_stack(patches, w1, b1, w2, b2):
    n = patches.shape[0]
    return pl.pallas_call(
        _conv_stack_kernel,
        out_shape=jax.ShapeDtypeStruct((n, 16, 64), jnp.float32),
        grid_spec=pltpu.PrefetchScalarGridSpec(
            num_scalar_prefetch=0,
            grid=(n,),
            in_specs=[
                pl.BlockSpec((1, 4, 144, 32), lambda i: (i, 0, 0, 0)),
                pl.BlockSpec((32, 32), lambda i: (0, 0)),
                pl.BlockSpec((1, 32), lambda i: (0, 0)),
                pl.BlockSpec((800, 64), lambda i: (0, 0)),
                pl.BlockSpec((1, 64), lambda i: (0, 0)),
            ],
            out_specs=pl.BlockSpec((1, 16, 64), lambda i: (i, 0, 0)),
        ),
        compiler_params=pltpu.CompilerParams(
            dimension_semantics=("parallel",),
            vmem_limit_bytes=_VMEM_LIMIT),
    )(patches, w1, b1, w2, b2)


def _fc_stack(h0, fc1_w, fc1_b, fc2_w, fc2_b):
    m = h0.shape[0]
    # cdiv-style row tiling with zero-padded M (replaces the old tm = M fallback).
    tm = 128 if m >= 128 else ((m + 7) // 8) * 8
    m_pad = ((m + tm - 1) // tm) * tm
    if m_pad != m:
        h0 = jnp.pad(h0, ((0, m_pad - m), (0, 0)))
    out = pl.pallas_call(
        _fc_kernel,
        out_shape=jax.ShapeDtypeStruct((m_pad, 128), jnp.float32),
        grid_spec=pltpu.PrefetchScalarGridSpec(
            num_scalar_prefetch=0,
            grid=(m_pad // tm,),
            in_specs=[
                pl.BlockSpec((tm, 1024), lambda i: (i, 0)),
                pl.BlockSpec((1024, 512), lambda i: (0, 0)),
                pl.BlockSpec((1, 512), lambda i: (0, 0)),
                pl.BlockSpec((512, 128), lambda i: (0, 0)),
                pl.BlockSpec((1, 128), lambda i: (0, 0)),
            ],
            out_specs=pl.BlockSpec((tm, 128), lambda i: (i, 0)),
        ),
        compiler_params=pltpu.CompilerParams(
            dimension_semantics=("parallel",),
            vmem_limit_bytes=_VMEM_LIMIT),
    )(h0, fc1_w, fc1_b, fc2_w, fc2_b)
    return out[:m, :10]


def cnn_mnist_forward(x_nchw, prep):
    n, c = x_nchw.shape[0], x_nchw.shape[1]
    assert c == 1, "kernel is specialized for in_channels=1 (MNIST)"
    x = x_nchw.reshape(n, 28, 28).astype(jnp.float32)
    patches = _conv1_patches(x)                                        # (N, 4, 144, 32)
    pooled = _conv_stack(patches, prep["w1"], prep["b1"],
                         prep["w2"], prep["b2"])                       # (N, 16, 64)
    h0 = pooled.reshape(n, 1024)        # (h, w, c) order; fc1 rows were permuted to match
    return _fc_stack(h0, prep["fc1_w"], prep["fc1_b"],
                     prep["fc2_w"], prep["fc2_b"])                     # (N, 10)


# ------------------------- parameter prep / init -----------------------------

def prepare_params(p, eps=1e-5):
    """One-time prep: fold eval-mode BatchNorm into the convs and pre-pack all weights
    (pre-transposed fc weights, bf16 MXU operands, fc2 padded to 128 output lanes)."""
    s1 = p["g1"] / jnp.sqrt(p["v1"] + eps)
    w1 = p["w1"] * s1[:, None, None, None]                      # (32, 1, 5, 5)
    b1 = (p["b1"] - p["m1"]) * s1 + p["be1"]
    s2 = p["g2"] / jnp.sqrt(p["v2"] + eps)
    w2 = p["w2"] * s2[:, None, None, None]                      # (64, 32, 5, 5)
    b2 = (p["b2"] - p["m2"]) * s2 + p["be2"]

    # conv1: OIHW -> [tap=(di,dj), out_ch], taps padded 25 -> 32 (matches patch padding).
    w1m = jnp.pad(jnp.transpose(w1[:, 0], (1, 2, 0)).reshape(25, 32), ((0, 7), (0, 0)))
    # conv2: OIHW -> [(di,dj,c), out_ch], bf16.
    w2m = jnp.transpose(w2, (2, 3, 1, 0)).reshape(800, 64).astype(jnp.bfloat16)
    # fc1: PyTorch (out, in) with `in` ordered (c,h,w)  ->  (`in` ordered (h,w,c), out), bf16.
    fc1 = jnp.transpose(p["fc1_w"].reshape(512, 64, 4, 4), (2, 3, 1, 0))
    fc1 = fc1.reshape(1024, 512).astype(jnp.bfloat16)
    # fc2: (out, in) -> (in, out), output channels padded 10 -> 128 (lane-dense stores).
    fc2 = jnp.pad(p["fc2_w"].T, ((0, 0), (0, 118))).astype(jnp.bfloat16)
    fc2_b = jnp.pad(p["fc2_b"], (0, 118))
    return dict(
        w1=w1m, b1=b1.reshape(1, 32),
        w2=w2m, b2=b2.reshape(1, 64),
        fc1_w=fc1, fc1_b=p["fc1_b"].reshape(1, 512),
        fc2_w=fc2, fc2_b=fc2_b.reshape(1, 128),
    )


def init_params(key, in_channels=1, out_classes=10):
    ks = jax.random.split(key, 16)
    nrm = lambda k, shape, s=0.05: s * jax.random.normal(k, shape, jnp.float32)
    return dict(
        w1=nrm(ks[0], (32, in_channels, 5, 5)),
        b1=nrm(ks[1], (32,)),
        g1=1.0 + 0.1 * jax.random.normal(ks[2], (32,), jnp.float32),
        be1=nrm(ks[3], (32,)),
        m1=nrm(ks[4], (32,)),
        v1=0.5 + jax.random.uniform(ks[5], (32,), jnp.float32),
        w2=nrm(ks[6], (64, 32, 5, 5)),
        b2=nrm(ks[7], (64,)),
        g2=1.0 + 0.1 * jax.random.normal(ks[8], (64,), jnp.float32),
        be2=nrm(ks[9], (64,)),
        m2=nrm(ks[10], (64,)),
        v2=0.5 + jax.random.uniform(ks[11], (64,), jnp.float32),
        fc1_w=nrm(ks[12], (512, 64 * 4 * 4)),
        fc1_b=nrm(ks[13], (512,)),
        fc2_w=nrm(ks[14], (out_classes, 512)),
        fc2_b=nrm(ks[15], (out_classes,)),
    )


# ----------------------------- pure-JAX reference ----------------------------

def reference_forward(x_nchw, p, eps=1e-5):
    x = x_nchw.astype(jnp.float32)

    def conv_bn_relu(x, w, b, g, be, m, v):
        y = jax.lax.conv_general_dilated(
            x, w, (1, 1), "VALID", dimension_numbers=("NCHW", "OIHW", "NCHW"))
        y = y + b[None, :, None, None]
        y = (y - m[None, :, None, None]) / jnp.sqrt(v[None, :, None, None] + eps)
        y = y * g[None, :, None, None] + be[None, :, None, None]
        return jnp.maximum(y, 0.0)

    def pool(x):
        return jax.lax.reduce_window(x, -jnp.inf, jax.lax.max,
                                     (1, 1, 2, 2), (1, 1, 2, 2), "VALID")

    x = pool(conv_bn_relu(x, p["w1"], p["b1"], p["g1"], p["be1"], p["m1"], p["v1"]))
    x = pool(conv_bn_relu(x, p["w2"], p["b2"], p["g2"], p["be2"], p["m2"], p["v2"]))
    x = x.reshape(x.shape[0], -1)
    h = jnp.maximum(x @ p["fc1_w"].T + p["fc1_b"], 0.0)
    return h @ p["fc2_w"].T + p["fc2_b"]


# ----------------------------------- main ------------------------------------

if __name__ == "__main__":
    key = jax.random.PRNGKey(0)
    k_x, k_p = jax.random.split(key)
    # MNIST geometry is fixed by fc1 (64*4*4): spatial must be 28x28, in_channels=1.
    x = jax.random.normal(k_x, (2, 1, 28, 28), jnp.float32)   # NCHW, batch=2
    params = init_params(k_p)
    prep = prepare_params(params)                             # one-time weight prep

    fwd = jax.jit(cnn_mnist_forward)
    out = jax.block_until_ready(fwd(x, prep))
    assert out.shape == (2, 10) and out.dtype == jnp.float32

    ref = reference_forward(x, params)
    err = float(jnp.max(jnp.abs(out - ref)))
    assert err < 0.08, f"mismatch vs pure-JAX reference: {err}"   # bf16 matmul tolerance
    print("KERNEL_OK")
</pallas_src>

<mosaic_0001>
module attributes {stable_mosaic.version = 11 : i64} {
  func.func @_conv_stack_kernel(%arg0: i32, %arg1: memref<1x4x144x32xf32, #tpu.memory_space<vmem>>, %arg2: memref<32x32xf32, #tpu.memory_space<vmem>>, %arg3: memref<1x32xf32, #tpu.memory_space<vmem>>, %arg4: memref<800x64xbf16, #tpu.memory_space<vmem>>, %arg5: memref<1x64xf32, #tpu.memory_space<vmem>>, %arg6: memref<1x16x64xf32, #tpu.memory_space<vmem>>) attributes {dimension_semantics = [#tpu.dimension_semantics<parallel>], iteration_bounds = array<i64: 2>, scalar_prefetch = 0 : i64, scratch_operands = 0 : i64, tpu.core_type = #tpu.core_type<tc>, window_params = [{transform_indices = @transform_0, window_bounds = array<i64: 1, 4, 144, 32>}, {pipeline_mode = #tpu.pipeline_mode<synchronous>, transform_indices = @transform_1, window_bounds = array<i64: 32, 32>}, {pipeline_mode = #tpu.pipeline_mode<synchronous>, transform_indices = @transform_2, window_bounds = array<i64: 1, 32>}, {pipeline_mode = #tpu.pipeline_mode<synchronous>, transform_indices = @transform_3, window_bounds = array<i64: 800, 64>}, {pipeline_mode = #tpu.pipeline_mode<synchronous>, transform_indices = @transform_4, window_bounds = array<i64: 1, 64>}, {transform_indices = @transform_5, window_bounds = array<i64: 1, 16, 64>}]} {
    %c0 = arith.constant 0 : index
    %c0_0 = arith.constant 0 : index
    %0 = vector.load %arg2[%c0, %c0_0] : memref<32x32xf32, #tpu.memory_space<vmem>>, vector<32x32xf32>
    %c0_1 = arith.constant 0 : index
    %c0_2 = arith.constant 0 : index
    %1 = vector.load %arg3[%c0_1, %c0_2] : memref<1x32xf32, #tpu.memory_space<vmem>>, vector<1x32xf32>
    %c0_3 = arith.constant 0 : index
    %c0_4 = arith.constant 0 : index
    %c0_5 = arith.constant 0 : index
    %c0_6 = arith.constant 0 : index
    %2 = vector.load %arg1[%c0_3, %c0_4, %c0_5, %c0_6] : memref<1x4x144x32xf32, #tpu.memory_space<vmem>>, vector<1x1x144x32xf32>
    %3 = vector.shape_cast %2 : vector<1x1x144x32xf32> to vector<144x32xf32>
    %cst = arith.constant dense<0.000000e+00> : vector<144x32xf32>
    %4 = tpu.matmul %3, %0, %cst {dimension_numbers = #tpu.dot_dimension_numbers<[1], [0], [0], [1], [0, 0, 1, 1], [], []>} : vector<144x32xf32>, vector<32x32xf32>, vector<144x32xf32> -> vector<144x32xf32>
    %5 = vector.broadcast %1 : vector<1x32xf32> to vector<144x32xf32>
    %6 = arith.addf %4, %5 : vector<144x32xf32>
    %cst_7 = arith.constant 0.000000e+00 : f32
    %7 = vector.broadcast %cst_7 : f32 to vector<144x32xf32>
    %8 = arith.maximumf %6, %7 : vector<144x32xf32>
    %c0_8 = arith.constant 0 : index
    %c1 = arith.constant 1 : index
    %c0_9 = arith.constant 0 : index
    %c0_10 = arith.constant 0 : index
    %9 = vector.load %arg1[%c0_8, %c1, %c0_9, %c0_10] : memref<1x4x144x32xf32, #tpu.memory_space<vmem>>, vector<1x1x144x32xf32>
    %10 = vector.shape_cast %9 : vector<1x1x144x32xf32> to vector<144x32xf32>
    %cst_11 = arith.constant dense<0.000000e+00> : vector<144x32xf32>
    %11 = tpu.matmul %10, %0, %cst_11 {dimension_numbers = #tpu.dot_dimension_numbers<[1], [0], [0], [1], [0, 0, 1, 1], [], []>} : vector<144x32xf32>, vector<32x32xf32>, vector<144x32xf32> -> vector<144x32xf32>
    %12 = vector.broadcast %1 : vector<1x32xf32> to vector<144x32xf32>
    %13 = arith.addf %11, %12 : vector<144x32xf32>
    %cst_12 = arith.constant 0.000000e+00 : f32
    %14 = vector.broadcast %cst_12 : f32 to vector<144x32xf32>
    %15 = arith.maximumf %13, %14 : vector<144x32xf32>
    %16 = arith.maximumf %8, %15 : vector<144x32xf32>
    %c0_13 = arith.constant 0 : index
    %c2 = arith.constant 2 : index
    %c0_14 = arith.constant 0 : index
    %c0_15 = arith.constant 0 : index
    %17 = vector.load %arg1[%c0_13, %c2, %c0_14, %c0_15] : memref<1x4x144x32xf32, #tpu.memory_space<vmem>>, vector<1x1x144x32xf32>
    %18 = vector.shape_cast %17 : vector<1x1x144x32xf32> to vector<144x32xf32>
    %cst_16 = arith.constant dense<0.000000e+00> : vector<144x32xf32>
    %19 = tpu.matmul %18, %0, %cst_16 {dimension_numbers = #tpu.dot_dimension_numbers<[1], [0], [0], [1], [0, 0, 1, 1], [], []>} : vector<144x32xf32>, vector<32x32xf32>, vector<144x32xf32> -> vector<144x32xf32>
    %20 = vector.broadcast %1 : vector<1x32xf32> to vector<144x32xf32>
    %21 = arith.addf %19, %20 : vector<144x32xf32>
    %cst_17 = arith.constant 0.000000e+00 : f32
    %22 = vector.broadcast %cst_17 : f32 to vector<144x32xf32>
    %23 = arith.maximumf %21, %22 : vector<144x32xf32>
    %24 = arith.maximumf %16, %23 : vector<144x32xf32>
    %c0_18 = arith.constant 0 : index
    %c3 = arith.constant 3 : index
    %c0_19 = arith.constant 0 : index
    %c0_20 = arith.constant 0 : index
    %25 = vector.load %arg1[%c0_18, %c3, %c0_19, %c0_20] : memref<1x4x144x32xf32, #tpu.memory_space<vmem>>, vector<1x1x144x32xf32>
    %26 = vector.shape_cast %25 : vector<1x1x144x32xf32> to vector<144x32xf32>
    %cst_21 = arith.constant dense<0.000000e+00> : vector<144x32xf32>
    %27 = tpu.matmul %26, %0, %cst_21 {dimension_numbers = #tpu.dot_dimension_numbers<[1], [0], [0], [1], [0, 0, 1, 1], [], []>} : vector<144x32xf32>, vector<32x32xf32>, vector<144x32xf32> -> vector<144x32xf32>
    %28 = vector.broadcast %1 : vector<1x32xf32> to vector<144x32xf32>
    %29 = arith.addf %27, %28 : vector<144x32xf32>
    %cst_22 = arith.constant 0.000000e+00 : f32
    %30 = vector.broadcast %cst_22 : f32 to vector<144x32xf32>
    %31 = arith.maximumf %29, %30 : vector<144x32xf32>
    %32 = arith.maximumf %24, %31 : vector<144x32xf32>
    %c0_23 = arith.constant 0 : index
    %c0_24 = arith.constant 0 : index
    %33 = vector.load %arg4[%c0_23, %c0_24] : memref<800x64xbf16, #tpu.memory_space<vmem>>, vector<800x64xbf16>
    %c0_25 = arith.constant 0 : index
    %c0_26 = arith.constant 0 : index
    %34 = vector.load %arg5[%c0_25, %c0_26] : memref<1x64xf32, #tpu.memory_space<vmem>>, vector<1x64xf32>
    %35 = vector.extract_strided_slice %32 {offsets = [0, 0], sizes = [8, 32], strides = [1, 1]} : vector<144x32xf32> to vector<8x32xf32>
    %36 = vector.extract_strided_slice %32 {offsets = [1, 0], sizes = [8, 32], strides = [1, 1]} : vector<144x32xf32> to vector<8x32xf32>
    %37 = vector.extract_strided_slice %32 {offsets = [2, 0], sizes = [8, 32], strides = [1, 1]} : vector<144x32xf32> to vector<8x32xf32>
    %38 = vector.extract_strided_slice %32 {offsets = [3, 0], sizes = [8, 32], strides = [1, 1]} : vector<144x32xf32> to vector<8x32xf32>
    %39 = vector.extract_strided_slice %32 {offsets = [4, 0], sizes = [8, 32], strides = [1, 1]} : vector<144x32xf32> to vector<8x32xf32>
    %40 = vector.extract_strided_slice %32 {offsets = [12, 0], sizes = [8, 32], strides = [1, 1]} : vector<144x32xf32> to vector<8x32xf32>
    %41 = vector.extract_strided_slice %32 {offsets = [13, 0], sizes = [8, 32], strides = [1, 1]} : vector<144x32xf32> to vector<8x32xf32>
    %42 = vector.extract_strided_slice %32 {offsets = [14, 0], sizes = [8, 32], strides = [1, 1]} : vector<144x32xf32> to vector<8x32xf32>
    %43 = vector.extract_strided_slice %32 {offsets = [15, 0], sizes = [8, 32], strides = [1, 1]} : vector<144x32xf32> to vector<8x32xf32>
    %44 = vector.extract_strided_slice %32 {offsets = [16, 0], sizes = [8, 32], strides = [1, 1]} : vector<144x32xf32> to vector<8x32xf32>
    %45 = vector.extract_strided_slice %32 {offsets = [24, 0], sizes = [8, 32], strides = [1, 1]} : vector<144x32xf32> to vector<8x32xf32>
    %46 = vector.extract_strided_slice %32 {offsets = [25, 0], sizes = [8, 32], strides = [1, 1]} : vector<144x32xf32> to vector<8x32xf32>
    %47 = vector.extract_strided_slice %32 {offsets = [26, 0], sizes = [8, 32], strides = [1, 1]} : vector<144x32xf32> to vector<8x32xf32>
    %48 = vector.extract_strided_slice %32 {offsets = [27, 0], sizes = [8, 32], strides = [1, 1]} : vector<144x32xf32> to vector<8x32xf32>
    %49 = vector.extract_strided_slice %32 {offsets = [28, 0], sizes = [8, 32], strides = [1, 1]} : vector<144x32xf32> to vector<8x32xf32>
    %50 = vector.extract_strided_slice %32 {offsets = [36, 0], sizes = [8, 32], strides = [1, 1]} : vector<144x32xf32> to vector<8x32xf32>
    %51 = vector.extract_strided_slice %32 {offsets = [37, 0], sizes = [8, 32], strides = [1, 1]} : vector<144x32xf32> to vector<8x32xf32>
    %52 = vector.extract_strided_slice %32 {offsets = [38, 0], sizes = [8, 32], strides = [1, 1]} : vector<144x32xf32> to vector<8x32xf32>
    %53 = vector.extract_strided_slice %32 {offsets = [39, 0], sizes = [8, 32], strides = [1, 1]} : vector<144x32xf32> to vector<8x32xf32>
    %54 = vector.extract_strided_slice %32 {offsets = [40, 0], sizes = [8, 32], strides = [1, 1]} : vector<144x32xf32> to vector<8x32xf32>
    %55 = vector.extract_strided_slice %32 {offsets = [48, 0], sizes = [8, 32], strides = [1, 1]} : vector<144x32xf32> to vector<8x32xf32>
    %56 = vector.extract_strided_slice %32 {offsets = [49, 0], sizes = [8, 32], strides = [1, 1]} : vector<144x32xf32> to vector<8x32xf32>
    %57 = vector.extract_strided_slice %32 {offsets = [50, 0], sizes = [8, 32], strides = [1, 1]} : vector<144x32xf32> to vector<8x32xf32>
    %58 = vector.extract_strided_slice %32 {offsets = [51, 0], sizes = [8, 32], strides = [1, 1]} : vector<144x32xf32> to vector<8x32xf32>
    %59 = vector.extract_strided_slice %32 {offsets = [52, 0], sizes = [8, 32], strides = [1, 1]} : vector<144x32xf32> to vector<8x32xf32>
    %60 = tpu.concatenate %35, %36, %37, %38, %39, %40, %41, %42, %43, %44, %45, %46, %47, %48, %49, %50 in 1 : vector<8x32xf32>, vector<8x32xf32>, vector<8x32xf32>, vector<8x32xf32>, vector<8x32xf32>, vector<8x32xf32>, vector<8x32xf32>, vector<8x32xf32>, vector<8x32xf32>, vector<8x32xf32>, vector<8x32xf32>, vector<8x32xf32>, vector<8x32xf32>, vector<8x32xf32>, vector<8x32xf32>, vector<8x32xf32> -> vector<8x512xf32>
    %61 = tpu.concatenate %51, %52, %53, %54, %55, %56, %57, %58, %59 in 1 : vector<8x32xf32>, vector<8x32xf32>, vector<8x32xf32>, vector<8x32xf32>, vector<8x32xf32>, vector<8x32xf32>, vector<8x32xf32>, vector<8x32xf32>, vector<8x32xf32> -> vector<8x288xf32>
    %62 = tpu.concatenate %60, %61 in 1 : vector<8x512xf32>, vector<8x288xf32> -> vector<8x800xf32>
    %63 = arith.truncf %62 : vector<8x800xf32> to vector<8x800xbf16>
    %cst_27 = arith.constant dense<0.000000e+00> : vector<8x64xf32>
    %64 = tpu.matmul %63, %33, %cst_27 {dimension_numbers = #tpu.dot_dimension_numbers<[1], [0], [0], [1], [0, 0, 1, 1], [], []>} : vector<8x800xbf16>, vector<800x64xbf16>, vector<8x64xf32> -> vector<8x64xf32>
    %65 = vector.broadcast %34 : vector<1x64xf32> to vector<8x64xf32>
    %66 = arith.addf %64, %65 : vector<8x64xf32>
    %cst_28 = arith.constant 0.000000e+00 : f32
    %67 = vector.broadcast %cst_28 : f32 to vector<8x64xf32>
    %68 = arith.maximumf %66, %67 : vector<8x64xf32>
    %69 = vector.extract_strided_slice %32 {offsets = [12, 0], sizes = [8, 32], strides = [1, 1]} : vector<144x32xf32> to vector<8x32xf32>
    %70 = vector.extract_strided_slice %32 {offsets = [13, 0], sizes = [8, 32], strides = [1, 1]} : vector<144x32xf32> to vector<8x32xf32>
    %71 = vector.extract_strided_slice %32 {offsets = [14, 0], sizes = [8, 32], strides = [1, 1]} : vector<144x32xf32> to vector<8x32xf32>
    %72 = vector.extract_strided_slice %32 {offsets = [15, 0], sizes = [8, 32], strides = [1, 1]} : vector<144x32xf32> to vector<8x32xf32>
    %73 = vector.extract_strided_slice %32 {offsets = [16, 0], sizes = [8, 32], strides = [1, 1]} : vector<144x32xf32> to vector<8x32xf32>
    %74 = vector.extract_strided_slice %32 {offsets = [24, 0], sizes = [8, 32], strides = [1, 1]} : vector<144x32xf32> to vector<8x32xf32>
    %75 = vector.extract_strided_slice %32 {offsets = [25, 0], sizes = [8, 32], strides = [1, 1]} : vector<144x32xf32> to vector<8x32xf32>
    %76 = vector.extract_strided_slice %32 {offsets = [26, 0], sizes = [8, 32], strides = [1, 1]} : vector<144x32xf32> to vector<8x32xf32>
    %77 = vector.extract_strided_slice %32 {offsets = [27, 0], sizes = [8, 32], strides = [1, 1]} : vector<144x32xf32> to vector<8x32xf32>
    %78 = vector.extract_strided_slice %32 {offsets = [28, 0], sizes = [8, 32], strides = [1, 1]} : vector<144x32xf32> to vector<8x32xf32>
    %79 = vector.extract_strided_slice %32 {offsets = [36, 0], sizes = [8, 32], strides = [1, 1]} : vector<144x32xf32> to vector<8x32xf32>
    %80 = vector.extract_strided_slice %32 {offsets = [37, 0], sizes = [8, 32], strides = [1, 1]} : vector<144x32xf32> to vector<8x32xf32>
    %81 = vector.extract_strided_slice %32 {offsets = [38, 0], sizes = [8, 32], strides = [1, 1]} : vector<144x32xf32> to vector<8x32xf32>
    %82 = vector.extract_strided_slice %32 {offsets = [39, 0], sizes = [8, 32], strides = [1, 1]} : vector<144x32xf32> to vector<8x32xf32>
    %83 = vector.extract_strided_slice %32 {offsets = [40, 0], sizes = [8, 32], strides = [1, 1]} : vector<144x32xf32> to vector<8x32xf32>
    %84 = vector.extract_strided_slice %32 {offsets = [48, 0], sizes = [8, 32], strides = [1, 1]} : vector<144x32xf32> to vector<8x32xf32>
    %85 = vector.extract_strided_slice %32 {offsets = [49, 0], sizes = [8, 32], strides = [1, 1]} : vector<144x32xf32> to vector<8x32xf32>
    %86 = vector.extract_strided_slice %32 {offsets = [50, 0], sizes = [8, 32], strides = [1, 1]} : vector<144x32xf32> to vector<8x32xf32>
    %87 = vector.extract_strided_slice %32 {offsets = [51, 0], sizes = [8, 32], strides = [1, 1]} : vector<144x32xf32> to vector<8x32xf32>
    %88 = vector.extract_strided_slice %32 {offsets = [52, 0], sizes = [8, 32], strides = [1, 1]} : vector<144x32xf32> to vector<8x32xf32>
    %89 = vector.extract_strided_slice %32 {offsets = [60, 0], sizes = [8, 32], strides = [1, 1]} : vector<144x32xf32> to vector<8x32xf32>
    %90 = vector.extract_strided_slice %32 {offsets = [61, 0], sizes = [8, 32], strides = [1, 1]} : vector<144x32xf32> to vector<8x32xf32>
    %91 = vector.extract_strided_slice %32 {offsets = [62, 0], sizes = [8, 32], strides = [1, 1]} : vector<144x32xf32> to vector<8x32xf32>
    %92 = vector.extract_strided_slice %32 {offsets = [63, 0], sizes = [8, 32], strides = [1, 1]} : vector<144x32xf32> to vector<8x32xf32>
    %93 = vector.extract_strided_slice %32 {offsets = [64, 0], sizes = [8, 32], strides = [1, 1]} : vector<144x32xf32> to vector<8x32xf32>
    %94 = tpu.concatenate %69, %70, %71, %72, %73, %74, %75, %76, %77, %78, %79, %80, %81, %82, %83, %84 in 1 : vector<8x32xf32>, vector<8x32xf32>, vector<8x32xf32>, vector<8x32xf32>, vector<8x32xf32>, vector<8x32xf32>, vector<8x32xf32>, vector<8x32xf32>, vector<8x32xf32>, vector<8x32xf32>, vector<8x32xf32>, vector<8x32xf32>, vector<8x32xf32>, vector<8x32xf32>, vector<8x32xf32>, vector<8x32xf32> -> vector<8x512xf32>
    %95 = tpu.concatenate %85, %86, %87, %88, %89, %90, %91, %92, %93 in 1 : vector<8x32xf32>, vector<8x32xf32>, vector<8x32xf32>, vector<8x32xf32>, vector<8x32xf32>, vector<8x32xf32>, vector<8x32xf32>, vector<8x32xf32>, vector<8x32xf32> -> vector<8x288xf32>
    %96 = tpu.concatenate %94, %95 in 1 : vector<8x512xf32>, vector<8x288xf32> -> vector<8x800xf32>
    %97 = arith.truncf %96 : vector<8x800xf32> to vector<8x800xbf16>
    %cst_29 = arith.constant dense<0.000000e+00> : vector<8x64xf32>
    %98 = tpu.matmul %97, %33, %cst_29 {dimension_numbers = #tpu.dot_dimension_numbers<[1], [0], [0], [1], [0, 0, 1, 1], [], []>} : vector<8x800xbf16>, vector<800x64xbf16>, vector<8x64xf32> -> vector<8x64xf32>
    %99 = vector.broadcast %34 : vector<1x64xf32> to vector<8x64xf32>
    %100 = arith.addf %98, %99 : vector<8x64xf32>
    %cst_30 = arith.constant 0.000000e+00 : f32
    %101 = vector.broadcast %cst_30 : f32 to vector<8x64xf32>
    %102 = arith.maximumf %100, %101 : vector<8x64xf32>
    %103 = vector.extract_strided_slice %32 {offsets = [24, 0], sizes = [8, 32], strides = [1, 1]} : vector<144x32xf32> to vector<8x32xf32>
    %104 = vector.extract_strided_slice %32 {offsets = [25, 0], sizes = [8, 32], strides = [1, 1]} : vector<144x32xf32> to vector<8x32xf32>
    %105 = vector.extract_strided_slice %32 {offsets = [26, 0], sizes = [8, 32], strides = [1, 1]} : vector<144x32xf32> to vector<8x32xf32>
    %106 = vector.extract_strided_slice %32 {offsets = [27, 0], sizes = [8, 32], strides = [1, 1]} : vector<144x32xf32> to vector<8x32xf32>
    %107 = vector.extract_strided_slice %32 {offsets = [28, 0], sizes = [8, 32], strides = [1, 1]} : vector<144x32xf32> to vector<8x32xf32>
    %108 = vector.extract_strided_slice %32 {offsets = [36, 0], sizes = [8, 32], strides = [1, 1]} : vector<144x32xf32> to vector<8x32xf32>
    %109 = vector.extract_strided_slice %32 {offsets = [37, 0], sizes = [8, 32], strides = [1, 1]} : vector<144x32xf32> to vector<8x32xf32>
    %110 = vector.extract_strided_slice %32 {offsets = [38, 0], sizes = [8, 32], strides = [1, 1]} : vector<144x32xf32> to vector<8x32xf32>
    %111 = vector.extract_strided_slice %32 {offsets = [39, 0], sizes = [8, 32], strides = [1, 1]} : vector<144x32xf32> to vector<8x32xf32>
    %112 = vector.extract_strided_slice %32 {offsets = [40, 0], sizes = [8, 32], strides = [1, 1]} : vector<144x32xf32> to vector<8x32xf32>
    %113 = vector.extract_strided_slice %32 {offsets = [48, 0], sizes = [8, 32], strides = [1, 1]} : vector<144x32xf32> to vector<8x32xf32>
    %114 = vector.extract_strided_slice %32 {offsets = [49, 0], sizes = [8, 32], strides = [1, 1]} : vector<144x32xf32> to vector<8x32xf32>
    %115 = vector.extract_strided_slice %32 {offsets = [50, 0], sizes = [8, 32], strides = [1, 1]} : vector<144x32xf32> to vector<8x32xf32>
    %116 = vector.extract_strided_slice %32 {offsets = [51, 0], sizes = [8, 32], strides = [1, 1]} : vector<144x32xf32> to vector<8x32xf32>
    %117 = vector.extract_strided_slice %32 {offsets = [52, 0], sizes = [8, 32], strides = [1, 1]} : vector<144x32xf32> to vector<8x32xf32>
    %118 = vector.extract_strided_slice %32 {offsets = [60, 0], sizes = [8, 32], strides = [1, 1]} : vector<144x32xf32> to vector<8x32xf32>
    %119 = vector.extract_strided_slice %32 {offsets = [61, 0], sizes = [8, 32], strides = [1, 1]} : vector<144x32xf32> to vector<8x32xf32>
    %120 = vector.extract_strided_slice %32 {offsets = [62, 0], sizes = [8, 32], strides = [1, 1]} : vector<144x32xf32> to vector<8x32xf32>
    %121 = vector.extract_strided_slice %32 {offsets = [63, 0], sizes = [8, 32], strides = [1, 1]} : vector<144x32xf32> to vector<8x32xf32>
    %122 = vector.extract_strided_slice %32 {offsets = [64, 0], sizes = [8, 32], strides = [1, 1]} : vector<144x32xf32> to vector<8x32xf32>
    %123 = vector.extract_strided_slice %32 {offsets = [72, 0], sizes = [8, 32], strides = [1, 1]} : vector<144x32xf32> to vector<8x32xf32>
    %124 = vector.extract_strided_slice %32 {offsets = [73, 0], sizes = [8, 32], strides = [1, 1]} : vector<144x32xf32> to vector<8x32xf32>
    %125 = vector.extract_strided_slice %32 {offsets = [74, 0], sizes = [8, 32], strides = [1, 1]} : vector<144x32xf32> to vector<8x32xf32>
    %126 = vector.extract_strided_slice %32 {offsets = [75, 0], sizes = [8, 32], strides = [1, 1]} : vector<144x32xf32> to vector<8x32xf32>
    %127 = vector.extract_strided_slice %32 {offsets = [76, 0], sizes = [8, 32], strides = [1, 1]} : vector<144x32xf32> to vector<8x32xf32>
    %128 = tpu.concatenate %103, %104, %105, %106, %107, %108, %109, %110, %111, %112, %113, %114, %115, %116, %117, %118 in 1 : vector<8x32xf32>, vector<8x32xf32>, vector<8x32xf32>, vector<8x32xf32>, vector<8x32xf32>, vector<8x32xf32>, vector<8x32xf32>, vector<8x32xf32>, vector<8x32xf32>, vector<8x32xf32>, vector<8x32xf32>, vector<8x32xf32>, vector<8x32xf32>, vector<8x32xf32>, vector<8x32xf32>, vector<8x32xf32> -> vector<8x512xf32>
    %129 = tpu.concatenate %119, %120, %121, %122, %123, %124, %125, %126, %127 in 1 : vector<8x32xf32>, vector<8x32xf32>, vector<8x32xf32>, vector<8x32xf32>, vector<8x32xf32>, vector<8x32xf32>, vector<8x32xf32>, vector<8x32xf32>, vector<8x32xf32> -> vector<8x288xf32>
    %130 = tpu.concatenate %128, %129 in 1 : vector<8x512xf32>, vector<8x288xf32> -> vector<8x800xf32>
    %131 = arith.truncf %130 : vector<8x800xf32> to vector<8x800xbf16>
    %cst_31 = arith.constant dense<0.000000e+00> : vector<8x64xf32>
    %132 = tpu.matmul %131, %33, %cst_31 {dimension_numbers = #tpu.dot_dimension_numbers<[1], [0], [0], [1], [0, 0, 1, 1], [], []>} : vector<8x800xbf16>, vector<800x64xbf16>, vector<8x64xf32> -> vector<8x64xf32>
    %133 = vector.broadcast %34 : vector<1x64xf32> to vector<8x64xf32>
    %134 = arith.addf %132, %133 : vector<8x64xf32>
    %cst_32 = arith.constant 0.000000e+00 : f32
    %135 = vector.broadcast %cst_32 : f32 to vector<8x64xf32>
    %136 = arith.maximumf %134, %135 : vector<8x64xf32>
    %137 = vector.extract_strided_slice %32 {offsets = [36, 0], sizes = [8, 32], strides = [1, 1]} : vector<144x32xf32> to vector<8x32xf32>
    %138 = vector.extract_strided_slice %32 {offsets = [37, 0], sizes = [8, 32], strides = [1, 1]} : vector<144x32xf32> to vector<8x32xf32>
    %139 = vector.extract_strided_slice %32 {offsets = [38, 0], sizes = [8, 32], strides = [1, 1]} : vector<144x32xf32> to vector<8x32xf32>
    %140 = vector.extract_strided_slice %32 {offsets = [39, 0], sizes = [8, 32], strides = [1, 1]} : vector<144x32xf32> to vector<8x32xf32>
    %141 = vector.extract_strided_slice %32 {offsets = [40, 0], sizes = [8, 32], strides = [1, 1]} : vector<144x32xf32> to vector<8x32xf32>
    %142 = vector.extract_strided_slice %32 {offsets = [48, 0], sizes = [8, 32], strides = [1, 1]} : vector<144x32xf32> to vector<8x32xf32>
    %143 = vector.extract_strided_slice %32 {offsets = [49, 0], sizes = [8, 32], strides = [1, 1]} : vector<144x32xf32> to vector<8x32xf32>
    %144 = vector.extract_strided_slice %32 {offsets = [50, 0], sizes = [8, 32], strides = [1, 1]} : vector<144x32xf32> to vector<8x32xf32>
    %145 = vector.extract_strided_slice %32 {offsets = [51, 0], sizes = [8, 32], strides = [1, 1]} : vector<144x32xf32> to vector<8x32xf32>
    %146 = vector.extract_strided_slice %32 {offsets = [52, 0], sizes = [8, 32], strides = [1, 1]} : vector<144x32xf32> to vector<8x32xf32>
    %147 = vector.extract_strided_slice %32 {offsets = [60, 0], sizes = [8, 32], strides = [1, 1]} : vector<144x32xf32> to vector<8x32xf32>
    %148 = vector.extract_strided_slice %32 {offsets = [61, 0], sizes = [8, 32], strides = [1, 1]} : vector<144x32xf32> to vector<8x32xf32>
    %149 = vector.extract_strided_slice %32 {offsets = [62, 0], sizes = [8, 32], strides = [1, 1]} : vector<144x32xf32> to vector<8x32xf32>
    %150 = vector.extract_strided_slice %32 {offsets = [63, 0], sizes = [8, 32], strides = [1, 1]} : vector<144x32xf32> to vector<8x32xf32>
    %151 = vector.extract_strided_slice %32 {offsets = [64, 0], sizes = [8, 32], strides = [1, 1]} : vector<144x32xf32> to vector<8x32xf32>
    %152 = vector.extract_strided_slice %32 {offsets = [72, 0], sizes = [8, 32], strides = [1, 1]} : vector<144x32xf32> to vector<8x32xf32>
    %153 = vector.extract_strided_slice %32 {offsets = [73, 0], sizes = [8, 32], strides = [1, 1]} : vector<144x32xf32> to vector<8x32xf32>
    %154 = vector.extract_strided_slice %32 {offsets = [74, 0], sizes = [8, 32], strides = [1, 1]} : vector<144x32xf32> to vector<8x32xf32>
    %155 = vector.extract_strided_slice %32 {offsets = [75, 0], sizes = [8, 32], strides = [1, 1]} : vector<144x32xf32> to vector<8x32xf32>
    %156 = vector.extract_strided_slice %32 {offsets = [76, 0], sizes = [8, 32], strides = [1, 1]} : vector<144x32xf32> to vector<8x32xf32>
    %157 = vector.extract_strided_slice %32 {offsets = [84, 0], sizes = [8, 32], strides = [1, 1]} : vector<144x32xf32> to vector<8x32xf32>
    %158 = vector.extract_strided_slice %32 {offsets = [85, 0], sizes = [8, 32], strides = [1, 1]} : vector<144x32xf32> to vector<8x32xf32>
    %159 = vector.extract_strided_slice %32 {offsets = [86, 0], sizes = [8, 32], strides = [1, 1]} : vector<144x32xf32> to vector<8x32xf32>
    %160 = vector.extract_strided_slice %32 {offsets = [87, 0], sizes = [8, 32], strides = [1, 1]} : vector<144x32xf32> to vector<8x32xf32>
    %161 = vector.extract_strided_slice %32 {offsets = [88, 0], sizes = [8, 32], strides = [1, 1]} : vector<144x32xf32> to vector<8x32xf32>
    %162 = tpu.concatenate %137, %138, %139, %140, %141, %142, %143, %144, %145, %146, %147, %148, %149, %150, %151, %152 in 1 : vector<8x32xf32>, vector<8x32xf32>, vector<8x32xf32>, vector<8x32xf32>, vector<8x32xf32>, vector<8x32xf32>, vector<8x32xf32>, vector<8x32xf32>, vector<8x32xf32>, vector<8x32xf32>, vector<8x32xf32>, vector<8x32xf32>, vector<8x32xf32>, vector<8x32xf32>, vector<8x32xf32>, vector<8x32xf32> -> vector<8x512xf32>
    %163 = tpu.concatenate %153, %154, %155, %156, %157, %158, %159, %160, %161 in 1 : vector<8x32xf32>, vector<8x32xf32>, vector<8x32xf32>, vector<8x32xf32>, vector<8x32xf32>, vector<8x32xf32>, vector<8x32xf32>, vector<8x32xf32>, vector<8x32xf32> -> vector<8x288xf32>
    %164 = tpu.concatenate %162, %163 in 1 : vector<8x512xf32>, vector<8x288xf32> -> vector<8x800xf32>
    %165 = arith.truncf %164 : vector<8x800xf32> to vector<8x800xbf16>
    %cst_33 = arith.constant dense<0.000000e+00> : vector<8x64xf32>
    %166 = tpu.matmul %165, %33, %cst_33 {dimension_numbers = #tpu.dot_dimension_numbers<[1], [0], [0], [1], [0, 0, 1, 1], [], []>} : vector<8x800xbf16>, vector<800x64xbf16>, vector<8x64xf32> -> vector<8x64xf32>
    %167 = vector.broadcast %34 : vector<1x64xf32> to vector<8x64xf32>
    %168 = arith.addf %166, %167 : vector<8x64xf32>
    %cst_34 = arith.constant 0.000000e+00 : f32
    %169 = vector.broadcast %cst_34 : f32 to vector<8x64xf32>
    %170 = arith.maximumf %168, %169 : vector<8x64xf32>
    %171 = vector.extract_strided_slice %32 {offsets = [48, 0], sizes = [8, 32], strides = [1, 1]} : vector<144x32xf32> to vector<8x32xf32>
    %172 = vector.extract_strided_slice %32 {offsets = [49, 0], sizes = [8, 32], strides = [1, 1]} : vector<144x32xf32> to vector<8x32xf32>
    %173 = vector.extract_strided_slice %32 {offsets = [50, 0], sizes = [8, 32], strides = [1, 1]} : vector<144x32xf32> to vector<8x32xf32>
    %174 = vector.extract_strided_slice %32 {offsets = [51, 0], sizes = [8, 32], strides = [1, 1]} : vector<144x32xf32> to vector<8x32xf32>
    %175 = vector.extract_strided_slice %32 {offsets = [52, 0], sizes = [8, 32], strides = [1, 1]} : vector<144x32xf32> to vector<8x32xf32>
    %176 = vector.extract_strided_slice %32 {offsets = [60, 0], sizes = [8, 32], strides = [1, 1]} : vector<144x32xf32> to vector<8x32xf32>
    %177 = vector.extract_strided_slice %32 {offsets = [61, 0], sizes = [8, 32], strides = [1, 1]} : vector<144x32xf32> to vector<8x32xf32>
    %178 = vector.extract_strided_slice %32 {offsets = [62, 0], sizes = [8, 32], strides = [1, 1]} : vector<144x32xf32> to vector<8x32xf32>
    %179 = vector.extract_strided_slice %32 {offsets = [63, 0], sizes = [8, 32], strides = [1, 1]} : vector<144x32xf32> to vector<8x32xf32>
    %180 = vector.extract_strided_slice %32 {offsets = [64, 0], sizes = [8, 32], strides = [1, 1]} : vector<144x32xf32> to vector<8x32xf32>
    %181 = vector.extract_strided_slice %32 {offsets = [72, 0], sizes = [8, 32], strides = [1, 1]} : vector<144x32xf32> to vector<8x32xf32>
    %182 = vector.extract_strided_slice %32 {offsets = [73, 0], sizes = [8, 32], strides = [1, 1]} : vector<144x32xf32> to vector<8x32xf32>
    %183 = vector.extract_strided_slice %32 {offsets = [74, 0], sizes = [8, 32], strides = [1, 1]} : vector<144x32xf32> to vector<8x32xf32>
    %184 = vector.extract_strided_slice %32 {offsets = [75, 0], sizes = [8, 32], strides = [1, 1]} : vector<144x32xf32> to vector<8x32xf32>
    %185 = vector.extract_strided_slice %32 {offsets = [76, 0], sizes = [8, 32], strides = [1, 1]} : vector<144x32xf32> to vector<8x32xf32>
    %186 = vector.extract_strided_slice %32 {offsets = [84, 0], sizes = [8, 32], strides = [1, 1]} : vector<144x32xf32> to vector<8x32xf32>
    %187 = vector.extract_strided_slice %32 {offsets = [85, 0], sizes = [8, 32], strides = [1, 1]} : vector<144x32xf32> to vector<8x32xf32>
    %188 = vector.extract_strided_slice %32 {offsets = [86, 0], sizes = [8, 32], strides = [1, 1]} : vector<144x32xf32> to vector<8x32xf32>
    %189 = vector.extract_strided_slice %32 {offsets = [87, 0], sizes = [8, 32], strides = [1, 1]} : vector<144x32xf32> to vector<8x32xf32>
    %190 = vector.extract_strided_slice %32 {offsets = [88, 0], sizes = [8, 32], strides = [1, 1]} : vector<144x32xf32> to vector<8x32xf32>
    %191 = vector.extract_strided_slice %32 {offsets = [96, 0], sizes = [8, 32], strides = [1, 1]} : vector<144x32xf32> to vector<8x32xf32>
    %192 = vector.extract_strided_slice %32 {offsets = [97, 0], sizes = [8, 32], strides = [1, 1]} : vector<144x32xf32> to vector<8x32xf32>
    %193 = vector.extract_strided_slice %32 {offsets = [98, 0], sizes = [8, 32], strides = [1, 1]} : vector<144x32xf32> to vector<8x32xf32>
    %194 = vector.extract_strided_slice %32 {offsets = [99, 0], sizes = [8, 32], strides = [1, 1]} : vector<144x32xf32> to vector<8x32xf32>
    %195 = vector.extract_strided_slice %32 {offsets = [100, 0], sizes = [8, 32], strides = [1, 1]} : vector<144x32xf32> to vector<8x32xf32>
    %196 = tpu.concatenate %171, %172, %173, %174, %175, %176, %177, %178, %179, %180, %181, %182, %183, %184, %185, %186 in 1 : vector<8x32xf32>, vector<8x32xf32>, vector<8x32xf32>, vector<8x32xf32>, vector<8x32xf32>, vector<8x32xf32>, vector<8x32xf32>, vector<8x32xf32>, vector<8x32xf32>, vector<8x32xf32>, vector<8x32xf32>, vector<8x32xf32>, vector<8x32xf32>, vector<8x32xf32>, vector<8x32xf32>, vector<8x32xf32> -> vector<8x512xf32>
    %197 = tpu.concatenate %187, %188, %189, %190, %191, %192, %193, %194, %195 in 1 : vector<8x32xf32>, vector<8x32xf32>, vector<8x32xf32>, vector<8x32xf32>, vector<8x32xf32>, vector<8x32xf32>, vector<8x32xf32>, vector<8x32xf32>, vector<8x32xf32> -> vector<8x288xf32>
    %198 = tpu.concatenate %196, %197 in 1 : vector<8x512xf32>, vector<8x288xf32> -> vector<8x800xf32>
    %199 = arith.truncf %198 : vector<8x800xf32> to vector<8x800xbf16>
    %cst_35 = arith.constant dense<0.000000e+00> : vector<8x64xf32>
    %200 = tpu.matmul %199, %33, %cst_35 {dimension_numbers = #tpu.dot_dimension_numbers<[1], [0], [0], [1], [0, 0, 1, 1], [], []>} : vector<8x800xbf16>, vector<800x64xbf16>, vector<8x64xf32> -> vector<8x64xf32>
    %201 = vector.broadcast %34 : vector<1x64xf32> to vector<8x64xf32>
    %202 = arith.addf %200, %201 : vector<8x64xf32>
    %cst_36 = arith.constant 0.000000e+00 : f32
    %203 = vector.broadcast %cst_36 : f32 to vector<8x64xf32>
    %204 = arith.maximumf %202, %203 : vector<8x64xf32>
    %205 = vector.extract_strided_slice %32 {offsets = [60, 0], sizes = [8, 32], strides = [1, 1]} : vector<144x32xf32> to vector<8x32xf32>
    %206 = vector.extract_strided_slice %32 {offsets = [61, 0], sizes = [8, 32], strides = [1, 1]} : vector<144x32xf32> to vector<8x32xf32>
    %207 = vector.extract_strided_slice %32 {offsets = [62, 0], sizes = [8, 32], strides = [1, 1]} : vector<144x32xf32> to vector<8x32xf32>
    %208 = vector.extract_strided_slice %32 {offsets = [63, 0], sizes = [8, 32], strides = [1, 1]} : vector<144x32xf32> to vector<8x32xf32>
    %209 = vector.extract_strided_slice %32 {offsets = [64, 0], sizes = [8, 32], strides = [1, 1]} : vector<144x32xf32> to vector<8x32xf32>
    %210 = vector.extract_strided_slice %32 {offsets = [72, 0], sizes = [8, 32], strides = [1, 1]} : vector<144x32xf32> to vector<8x32xf32>
    %211 = vector.extract_strided_slice %32 {offsets = [73, 0], sizes = [8, 32], strides = [1, 1]} : vector<144x32xf32> to vector<8x32xf32>
    %212 = vector.extract_strided_slice %32 {offsets = [74, 0], sizes = [8, 32], strides = [1, 1]} : vector<144x32xf32> to vector<8x32xf32>
    %213 = vector.extract_strided_slice %32 {offsets = [75, 0], sizes = [8, 32], strides = [1, 1]} : vector<144x32xf32> to vector<8x32xf32>
    %214 = vector.extract_strided_slice %32 {offsets = [76, 0], sizes = [8, 32], strides = [1, 1]} : vector<144x32xf32> to vector<8x32xf32>
    %215 = vector.extract_strided_slice %32 {offsets = [84, 0], sizes = [8, 32], strides = [1, 1]} : vector<144x32xf32> to vector<8x32xf32>
    %216 = vector.extract_strided_slice %32 {offsets = [85, 0], sizes = [8, 32], strides = [1, 1]} : vector<144x32xf32> to vector<8x32xf32>
    %217 = vector.extract_strided_slice %32 {offsets = [86, 0], sizes = [8, 32], strides = [1, 1]} : vector<144x32xf32> to vector<8x32xf32>
    %218 = vector.extract_strided_slice %32 {offsets = [87, 0], sizes = [8, 32], strides = [1, 1]} : vector<144x32xf32> to vector<8x32xf32>
    %219 = vector.extract_strided_slice %32 {offsets = [88, 0], sizes = [8, 32], strides = [1, 1]} : vector<144x32xf32> to vector<8x32xf32>
    %220 = vector.extract_strided_slice %32 {offsets = [96, 0], sizes = [8, 32], strides = [1, 1]} : vector<144x32xf32> to vector<8x32xf32>
    %221 = vector.extract_strided_slice %32 {offsets = [97, 0], sizes = [8, 32], strides = [1, 1]} : vector<144x32xf32> to vector<8x32xf32>
    %222 = vector.extract_strided_slice %32 {offsets = [98, 0], sizes = [8, 32], strides = [1, 1]} : vector<144x32xf32> to vector<8x32xf32>
    %223 = vector.extract_strided_slice %32 {offsets = [99, 0], sizes = [8, 32], strides = [1, 1]} : vector<144x32xf32> to vector<8x32xf32>
    %224 = vector.extract_strided_slice %32 {offsets = [100, 0], sizes = [8, 32], strides = [1, 1]} : vector<144x32xf32> to vector<8x32xf32>
    %225 = vector.extract_strided_slice %32 {offsets = [108, 0], sizes = [8, 32], strides = [1, 1]} : vector<144x32xf32> to vector<8x32xf32>
    %226 = vector.extract_strided_slice %32 {offsets = [109, 0], sizes = [8, 32], strides = [1, 1]} : vector<144x32xf32> to vector<8x32xf32>
    %227 = vector.extract_strided_slice %32 {offsets = [110, 0], sizes = [8, 32], strides = [1, 1]} : vector<144x32xf32> to vector<8x32xf32>
    %228 = vector.extract_strided_slice %32 {offsets = [111, 0], sizes = [8, 32], strides = [1, 1]} : vector<144x32xf32> to vector<8x32xf32>
    %229 = vector.extract_strided_slice %32 {offsets = [112, 0], sizes = [8, 32], strides = [1, 1]} : vector<144x32xf32> to vector<8x32xf32>
    %230 = tpu.concatenate %205, %206, %207, %208, %209, %210, %211, %212, %213, %214, %215, %216, %217, %218, %219, %220 in 1 : vector<8x32xf32>, vector<8x32xf32>, vector<8x32xf32>, vector<8x32xf32>, vector<8x32xf32>, vector<8x32xf32>, vector<8x32xf32>, vector<8x32xf32>, vector<8x32xf32>, vector<8x32xf32>, vector<8x32xf32>, vector<8x32xf32>, vector<8x32xf32>, vector<8x32xf32>, vector<8x32xf32>, vector<8x32xf32> -> vector<8x512xf32>
    %231 = tpu.concatenate %221, %222, %223, %224, %225, %226, %227, %228, %229 in 1 : vector<8x32xf32>, vector<8x32xf32>, vector<8x32xf32>, vector<8x32xf32>, vector<8x32xf32>, vector<8x32xf32>, vector<8x32xf32>, vector<8x32xf32>, vector<8x32xf32> -> vector<8x288xf32>
    %232 = tpu.concatenate %230, %231 in 1 : vector<8x512xf32>, vector<8x288xf32> -> vector<8x800xf32>
    %233 = arith.truncf %232 : vector<8x800xf32> to vector<8x800xbf16>
    %cst_37 = arith.constant dense<0.000000e+00> : vector<8x64xf32>
    %234 = tpu.matmul %233, %33, %cst_37 {dimension_numbers = #tpu.dot_dimension_numbers<[1], [0], [0], [1], [0, 0, 1, 1], [], []>} : vector<8x800xbf16>, vector<800x64xbf16>, vector<8x64xf32> -> vector<8x64xf32>
    %235 = vector.broadcast %34 : vector<1x64xf32> to vector<8x64xf32>
    %236 = arith.addf %234, %235 : vector<8x64xf32>
    %cst_38 = arith.constant 0.000000e+00 : f32
    %237 = vector.broadcast %cst_38 : f32 to vector<8x64xf32>
    %238 = arith.maximumf %236, %237 : vector<8x64xf32>
    %239 = vector.extract_strided_slice %32 {offsets = [72, 0], sizes = [8, 32], strides = [1, 1]} : vector<144x32xf32> to vector<8x32xf32>
    %240 = vector.extract_strided_slice %32 {offsets = [73, 0], sizes = [8, 32], strides = [1, 1]} : vector<144x32xf32> to vector<8x32xf32>
    %241 = vector.extract_strided_slice %32 {offsets = [74, 0], sizes = [8, 32], strides = [1, 1]} : vector<144x32xf32> to vector<8x32xf32>
    %242 = vector.extract_strided_slice %32 {offsets = [75, 0], sizes = [8, 32], strides = [1, 1]} : vector<144x32xf32> to vector<8x32xf32>
    %243 = vector.extract_strided_slice %32 {offsets = [76, 0], sizes = [8, 32], strides = [1, 1]} : vector<144x32xf32> to vector<8x32xf32>
    %244 = vector.extract_strided_slice %32 {offsets = [84, 0], sizes = [8, 32], strides = [1, 1]} : vector<144x32xf32> to vector<8x32xf32>
    %245 = vector.extract_strided_slice %32 {offsets = [85, 0], sizes = [8, 32], strides = [1, 1]} : vector<144x32xf32> to vector<8x32xf32>
    %246 = vector.extract_strided_slice %32 {offsets = [86, 0], sizes = [8, 32], strides = [1, 1]} : vector<144x32xf32> to vector<8x32xf32>
    %247 = vector.extract_strided_slice %32 {offsets = [87, 0], sizes = [8, 32], strides = [1, 1]} : vector<144x32xf32> to vector<8x32xf32>
    %248 = vector.extract_strided_slice %32 {offsets = [88, 0], sizes = [8, 32], strides = [1, 1]} : vector<144x32xf32> to vector<8x32xf32>
    %249 = vector.extract_strided_slice %32 {offsets = [96, 0], sizes = [8, 32], strides = [1, 1]} : vector<144x32xf32> to vector<8x32xf32>
    %250 = vector.extract_strided_slice %32 {offsets = [97, 0], sizes = [8, 32], strides = [1, 1]} : vector<144x32xf32> to vector<8x32xf32>
    %251 = vector.extract_strided_slice %32 {offsets = [98, 0], sizes = [8, 32], strides = [1, 1]} : vector<144x32xf32> to vector<8x32xf32>
    %252 = vector.extract_strided_slice %32 {offsets = [99, 0], sizes = [8, 32], strides = [1, 1]} : vector<144x32xf32> to vector<8x32xf32>
    %253 = vector.extract_strided_slice %32 {offsets = [100, 0], sizes = [8, 32], strides = [1, 1]} : vector<144x32xf32> to vector<8x32xf32>
    %254 = vector.extract_strided_slice %32 {offsets = [108, 0], sizes = [8, 32], strides = [1, 1]} : vector<144x32xf32> to vector<8x32xf32>
    %255 = vector.extract_strided_slice %32 {offsets = [109, 0], sizes = [8, 32], strides = [1, 1]} : vector<144x32xf32> to vector<8x32xf32>
    %256 = vector.extract_strided_slice %32 {offsets = [110, 0], sizes = [8, 32], strides = [1, 1]} : vector<144x32xf32> to vector<8x32xf32>
    %257 = vector.extract_strided_slice %32 {offsets = [111, 0], sizes = [8, 32], strides = [1, 1]} : vector<144x32xf32> to vector<8x32xf32>
    %258 = vector.extract_strided_slice %32 {offsets = [112, 0], sizes = [8, 32], strides = [1, 1]} : vector<144x32xf32> to vector<8x32xf32>
    %259 = vector.extract_strided_slice %32 {offsets = [120, 0], sizes = [8, 32], strides = [1, 1]} : vector<144x32xf32> to vector<8x32xf32>
    %260 = vector.extract_strided_slice %32 {offsets = [121, 0], sizes = [8, 32], strides = [1, 1]} : vector<144x32xf32> to vector<8x32xf32>
    %261 = vector.extract_strided_slice %32 {offsets = [122, 0], sizes = [8, 32], strides = [1, 1]} : vector<144x32xf32> to vector<8x32xf32>
    %262 = vector.extract_strided_slice %32 {offsets = [123, 0], sizes = [8, 32], strides = [1, 1]} : vector<144x32xf32> to vector<8x32xf32>
    %263 = vector.extract_strided_slice %32 {offsets = [124, 0], sizes = [8, 32], strides = [1, 1]} : vector<144x32xf32> to vector<8x32xf32>
    %264 = tpu.concatenate %239, %240, %241, %242, %243, %244, %245, %246, %247, %248, %249, %250, %251, %252, %253, %254 in 1 : vector<8x32xf32>, vector<8x32xf32>, vector<8x32xf32>, vector<8x32xf32>, vector<8x32xf32>, vector<8x32xf32>, vector<8x32xf32>, vector<8x32xf32>, vector<8x32xf32>, vector<8x32xf32>, vector<8x32xf32>, vector<8x32xf32>, vector<8x32xf32>, vector<8x32xf32>, vector<8x32xf32>, vector<8x32xf32> -> vector<8x512xf32>
    %265 = tpu.concatenate %255, %256, %257, %258, %259, %260, %261, %262, %263 in 1 : vector<8x32xf32>, vector<8x32xf32>, vector<8x32xf32>, vector<8x32xf32>, vector<8x32xf32>, vector<8x32xf32>, vector<8x32xf32>, vector<8x32xf32>, vector<8x32xf32> -> vector<8x288xf32>
    %266 = tpu.concatenate %264, %265 in 1 : vector<8x512xf32>, vector<8x288xf32> -> vector<8x800xf32>
    %267 = arith.truncf %266 : vector<8x800xf32> to vector<8x800xbf16>
    %cst_39 = arith.constant dense<0.000000e+00> : vector<8x64xf32>
    %268 = tpu.matmul %267, %33, %cst_39 {dimension_numbers = #tpu.dot_dimension_numbers<[1], [0], [0], [1], [0, 0, 1, 1], [], []>} : vector<8x800xbf16>, vector<800x64xbf16>, vector<8x64xf32> -> vector<8x64xf32>
    %269 = vector.broadcast %34 : vector<1x64xf32> to vector<8x64xf32>
    %270 = arith.addf %268, %269 : vector<8x64xf32>
    %cst_40 = arith.constant 0.000000e+00 : f32
    %271 = vector.broadcast %cst_40 : f32 to vector<8x64xf32>
    %272 = arith.maximumf %270, %271 : vector<8x64xf32>
    %273 = vector.extract_strided_slice %32 {offsets = [84, 0], sizes = [8, 32], strides = [1, 1]} : vector<144x32xf32> to vector<8x32xf32>
    %274 = vector.extract_strided_slice %32 {offsets = [85, 0], sizes = [8, 32], strides = [1, 1]} : vector<144x32xf32> to vector<8x32xf32>
    %275 = vector.extract_strided_slice %32 {offsets = [86, 0], sizes = [8, 32], strides = [1, 1]} : vector<144x32xf32> to vector<8x32xf32>
    %276 = vector.extract_strided_slice %32 {offsets = [87, 0], sizes = [8, 32], strides = [1, 1]} : vector<144x32xf32> to vector<8x32xf32>
    %277 = vector.extract_strided_slice %32 {offsets = [88, 0], sizes = [8, 32], strides = [1, 1]} : vector<144x32xf32> to vector<8x32xf32>
    %278 = vector.extract_strided_slice %32 {offsets = [96, 0], sizes = [8, 32], strides = [1, 1]} : vector<144x32xf32> to vector<8x32xf32>
    %279 = vector.extract_strided_slice %32 {offsets = [97, 0], sizes = [8, 32], strides = [1, 1]} : vector<144x32xf32> to vector<8x32xf32>
    %280 = vector.extract_strided_slice %32 {offsets = [98, 0], sizes = [8, 32], strides = [1, 1]} : vector<144x32xf32> to vector<8x32xf32>
    %281 = vector.extract_strided_slice %32 {offsets = [99, 0], sizes = [8, 32], strides = [1, 1]} : vector<144x32xf32> to vector<8x32xf32>
    %282 = vector.extract_strided_slice %32 {offsets = [100, 0], sizes = [8, 32], strides = [1, 1]} : vector<144x32xf32> to vector<8x32xf32>
    %283 = vector.extract_strided_slice %32 {offsets = [108, 0], sizes = [8, 32], strides = [1, 1]} : vector<144x32xf32> to vector<8x32xf32>
    %284 = vector.extract_strided_slice %32 {offsets = [109, 0], sizes = [8, 32], strides = [1, 1]} : vector<144x32xf32> to vector<8x32xf32>
    %285 = vector.extract_strided_slice %32 {offsets = [110, 0], sizes = [8, 32], strides = [1, 1]} : vector<144x32xf32> to vector<8x32xf32>
    %286 = vector.extract_strided_slice %32 {offsets = [111, 0], sizes = [8, 32], strides = [1, 1]} : vector<144x32xf32> to vector<8x32xf32>
    %287 = vector.extract_strided_slice %32 {offsets = [112, 0], sizes = [8, 32], strides = [1, 1]} : vector<144x32xf32> to vector<8x32xf32>
    %288 = vector.extract_strided_slice %32 {offsets = [120, 0], sizes = [8, 32], strides = [1, 1]} : vector<144x32xf32> to vector<8x32xf32>
    %289 = vector.extract_strided_slice %32 {offsets = [121, 0], sizes = [8, 32], strides = [1, 1]} : vector<144x32xf32> to vector<8x32xf32>
    %290 = vector.extract_strided_slice %32 {offsets = [122, 0], sizes = [8, 32], strides = [1, 1]} : vector<144x32xf32> to vector<8x32xf32>
    %291 = vector.extract_strided_slice %32 {offsets = [123, 0], sizes = [8, 32], strides = [1, 1]} : vector<144x32xf32> to vector<8x32xf32>
    %292 = vector.extract_strided_slice %32 {offsets = [124, 0], sizes = [8, 32], strides = [1, 1]} : vector<144x32xf32> to vector<8x32xf32>
    %293 = vector.extract_strided_slice %32 {offsets = [132, 0], sizes = [8, 32], strides = [1, 1]} : vector<144x32xf32> to vector<8x32xf32>
    %294 = vector.extract_strided_slice %32 {offsets = [133, 0], sizes = [8, 32], strides = [1, 1]} : vector<144x32xf32> to vector<8x32xf32>
    %295 = vector.extract_strided_slice %32 {offsets = [134, 0], sizes = [8, 32], strides = [1, 1]} : vector<144x32xf32> to vector<8x32xf32>
    %296 = vector.extract_strided_slice %32 {offsets = [135, 0], sizes = [8, 32], strides = [1, 1]} : vector<144x32xf32> to vector<8x32xf32>
    %297 = vector.extract_strided_slice %32 {offsets = [136, 0], sizes = [8, 32], strides = [1, 1]} : vector<144x32xf32> to vector<8x32xf32>
    %298 = tpu.concatenate %273, %274, %275, %276, %277, %278, %279, %280, %281, %282, %283, %284, %285, %286, %287, %288 in 1 : vector<8x32xf32>, vector<8x32xf32>, vector<8x32xf32>, vector<8x32xf32>, vector<8x32xf32>, vector<8x32xf32>, vector<8x32xf32>, vector<8x32xf32>, vector<8x32xf32>, vector<8x32xf32>, vector<8x32xf32>, vector<8x32xf32>, vector<8x32xf32>, vector<8x32xf32>, vector<8x32xf32>, vector<8x32xf32> -> vector<8x512xf32>
    %299 = tpu.concatenate %289, %290, %291, %292, %293, %294, %295, %296, %297 in 1 : vector<8x32xf32>, vector<8x32xf32>, vector<8x32xf32>, vector<8x32xf32>, vector<8x32xf32>, vector<8x32xf32>, vector<8x32xf32>, vector<8x32xf32>, vector<8x32xf32> -> vector<8x288xf32>
    %300 = tpu.concatenate %298, %299 in 1 : vector<8x512xf32>, vector<8x288xf32> -> vector<8x800xf32>
    %301 = arith.truncf %300 : vector<8x800xf32> to vector<8x800xbf16>
    %cst_41 = arith.constant dense<0.000000e+00> : vector<8x64xf32>
    %302 = tpu.matmul %301, %33, %cst_41 {dimension_numbers = #tpu.dot_dimension_numbers<[1], [0], [0], [1], [0, 0, 1, 1], [], []>} : vector<8x800xbf16>, vector<800x64xbf16>, vector<8x64xf32> -> vector<8x64xf32>
    %303 = vector.broadcast %34 : vector<1x64xf32> to vector<8x64xf32>
    %304 = arith.addf %302, %303 : vector<8x64xf32>
    %cst_42 = arith.constant 0.000000e+00 : f32
    %305 = vector.broadcast %cst_42 : f32 to vector<8x64xf32>
    %306 = arith.maximumf %304, %305 : vector<8x64xf32>
    %307 = arith.maximumf %68, %102 : vector<8x64xf32>
    %308 = vector.extract_strided_slice %307 {offsets = [0, 0], sizes = [1, 64], strides = [1, 1]} : vector<8x64xf32> to vector<1x64xf32>
    %309 = vector.extract_strided_slice %307 {offsets = [1, 0], sizes = [1, 64], strides = [1, 1]} : vector<8x64xf32> to vector<1x64xf32>
    %310 = arith.maximumf %308, %309 : vector<1x64xf32>
    %311 = vector.extract_strided_slice %307 {offsets = [2, 0], sizes = [1, 64], strides = [1, 1]} : vector<8x64xf32> to vector<1x64xf32>
    %312 = vector.extract_strided_slice %307 {offsets = [3, 0], sizes = [1, 64], strides = [1, 1]} : vector<8x64xf32> to vector<1x64xf32>
    %313 = arith.maximumf %311, %312 : vector<1x64xf32>
    %314 = vector.extract_strided_slice %307 {offsets = [4, 0], sizes = [1, 64], strides = [1, 1]} : vector<8x64xf32> to vector<1x64xf32>
    %315 = vector.extract_strided_slice %307 {offsets = [5, 0], sizes = [1, 64], strides = [1, 1]} : vector<8x64xf32> to vector<1x64xf32>
    %316 = arith.maximumf %314, %315 : vector<1x64xf32>
    %317 = vector.extract_strided_slice %307 {offsets = [6, 0], sizes = [1, 64], strides = [1, 1]} : vector<8x64xf32> to vector<1x64xf32>
    %318 = vector.extract_strided_slice %307 {offsets = [7, 0], sizes = [1, 64], strides = [1, 1]} : vector<8x64xf32> to vector<1x64xf32>
    %319 = arith.maximumf %317, %318 : vector<1x64xf32>
    %320 = arith.maximumf %136, %170 : vector<8x64xf32>
    %321 = vector.extract_strided_slice %320 {offsets = [0, 0], sizes = [1, 64], strides = [1, 1]} : vector<8x64xf32> to vector<1x64xf32>
    %322 = vector.extract_strided_slice %320 {offsets = [1, 0], sizes = [1, 64], strides = [1, 1]} : vector<8x64xf32> to vector<1x64xf32>
    %323 = arith.maximumf %321, %322 : vector<1x64xf32>
    %324 = vector.extract_strided_slice %320 {offsets = [2, 0], sizes = [1, 64], strides = [1, 1]} : vector<8x64xf32> to vector<1x64xf32>
    %325 = vector.extract_strided_slice %320 {offsets = [3, 0], sizes = [1, 64], strides = [1, 1]} : vector<8x64xf32> to vector<1x64xf32>
    %326 = arith.maximumf %324, %325 : vector<1x64xf32>
    %327 = vector.extract_strided_slice %320 {offsets = [4, 0], sizes = [1, 64], strides = [1, 1]} : vector<8x64xf32> to vector<1x64xf32>
    %328 = vector.extract_strided_slice %320 {offsets = [5, 0], sizes = [1, 64], strides = [1, 1]} : vector<8x64xf32> to vector<1x64xf32>
    %329 = arith.maximumf %327, %328 : vector<1x64xf32>
    %330 = vector.extract_strided_slice %320 {offsets = [6, 0], sizes = [1, 64], strides = [1, 1]} : vector<8x64xf32> to vector<1x64xf32>
    %331 = vector.extract_strided_slice %320 {offsets = [7, 0], sizes = [1, 64], strides = [1, 1]} : vector<8x64xf32> to vector<1x64xf32>
    %332 = arith.maximumf %330, %331 : vector<1x64xf32>
    %333 = arith.maximumf %204, %238 : vector<8x64xf32>
    %334 = vector.extract_strided_slice %333 {offsets = [0, 0], sizes = [1, 64], strides = [1, 1]} : vector<8x64xf32> to vector<1x64xf32>
    %335 = vector.extract_strided_slice %333 {offsets = [1, 0], sizes = [1, 64], strides = [1, 1]} : vector<8x64xf32> to vector<1x64xf32>
    %336 = arith.maximumf %334, %335 : vector<1x64xf32>
    %337 = vector.extract_strided_slice %333 {offsets = [2, 0], sizes = [1, 64], strides = [1, 1]} : vector<8x64xf32> to vector<1x64xf32>
    %338 = vector.extract_strided_slice %333 {offsets = [3, 0], sizes = [1, 64], strides = [1, 1]} : vector<8x64xf32> to vector<1x64xf32>
    %339 = arith.maximumf %337, %338 : vector<1x64xf32>
    %340 = vector.extract_strided_slice %333 {offsets = [4, 0], sizes = [1, 64], strides = [1, 1]} : vector<8x64xf32> to vector<1x64xf32>
    %341 = vector.extract_strided_slice %333 {offsets = [5, 0], sizes = [1, 64], strides = [1, 1]} : vector<8x64xf32> to vector<1x64xf32>
    %342 = arith.maximumf %340, %341 : vector<1x64xf32>
    %343 = vector.extract_strided_slice %333 {offsets = [6, 0], sizes = [1, 64], strides = [1, 1]} : vector<8x64xf32> to vector<1x64xf32>
    %344 = vector.extract_strided_slice %333 {offsets = [7, 0], sizes = [1, 64], strides = [1, 1]} : vector<8x64xf32> to vector<1x64xf32>
    %345 = arith.maximumf %343, %344 : vector<1x64xf32>
    %346 = arith.maximumf %272, %306 : vector<8x64xf32>
    %347 = vector.extract_strided_slice %346 {offsets = [0, 0], sizes = [1, 64], strides = [1, 1]} : vector<8x64xf32> to vector<1x64xf32>
    %348 = vector.extract_strided_slice %346 {offsets = [1, 0], sizes = [1, 64], strides = [1, 1]} : vector<8x64xf32> to vector<1x64xf32>
    %349 = arith.maximumf %347, %348 : vector<1x64xf32>
    %350 = vector.extract_strided_slice %346 {offsets = [2, 0], sizes = [1, 64], strides = [1, 1]} : vector<8x64xf32> to vector<1x64xf32>
    %351 = vector.extract_strided_slice %346 {offsets = [3, 0], sizes = [1, 64], strides = [1, 1]} : vector<8x64xf32> to vector<1x64xf32>
    %352 = arith.maximumf %350, %351 : vector<1x64xf32>
    %353 = vector.extract_strided_slice %346 {offsets = [4, 0], sizes = [1, 64], strides = [1, 1]} : vector<8x64xf32> to vector<1x64xf32>
    %354 = vector.extract_strided_slice %346 {offsets = [5, 0], sizes = [1, 64], strides = [1, 1]} : vector<8x64xf32> to vector<1x64xf32>
    %355 = arith.maximumf %353, %354 : vector<1x64xf32>
    %356 = vector.extract_strided_slice %346 {offsets = [6, 0], sizes = [1, 64], strides = [1, 1]} : vector<8x64xf32> to vector<1x64xf32>
    %357 = vector.extract_strided_slice %346 {offsets = [7, 0], sizes = [1, 64], strides = [1, 1]} : vector<8x64xf32> to vector<1x64xf32>
    %358 = arith.maximumf %356, %357 : vector<1x64xf32>
    %359 = tpu.concatenate %310, %313, %316, %319, %323, %326, %329, %332, %336, %339, %342, %345, %349, %352, %355, %358 in 0 : vector<1x64xf32>, vector<1x64xf32>, vector<1x64xf32>, vector<1x64xf32>, vector<1x64xf32>, vector<1x64xf32>, vector<1x64xf32>, vector<1x64xf32>, vector<1x64xf32>, vector<1x64xf32>, vector<1x64xf32>, vector<1x64xf32>, vector<1x64xf32>, vector<1x64xf32>, vector<1x64xf32>, vector<1x64xf32> -> vector<16x64xf32>
    %360 = vector.shape_cast %359 : vector<16x64xf32> to vector<1x16x64xf32>
    %c0_43 = arith.constant 0 : index
    %c0_44 = arith.constant 0 : index
    %c0_45 = arith.constant 0 : index
    %361 = vector.load %arg6[%c0_43, %c0_44, %c0_45] : memref<1x16x64xf32, #tpu.memory_space<vmem>>, vector<1x16x64xf32>
    tpu.vector_store %arg6[%c0_43, %c0_44, %c0_45], %360 {strides = array<i32>} : memref<1x16x64xf32, #tpu.memory_space<vmem>>, vector<1x16x64xf32>,
    return
  }
  func.func @transform_0(%arg0: i32) -> (i32, i32, i32, i32) {
    %c0_i32 = arith.constant 0 : i32
    %c0_i32_0 = arith.constant 0 : i32
    %c0_i32_1 = arith.constant 0 : i32
    %c0_i32_2 = arith.constant 0 : i32
    return %arg0, %c0_i32, %c0_i32_0, %c0_i32_1 : i32, i32, i32, i32
  }
  func.func @transform_1(%arg0: i32) -> (i32, i32) {
    %c0_i32 = arith.constant 0 : i32
    %c0_i32_0 = arith.constant 0 : i32
    %c0_i32_1 = arith.constant 0 : i32
    return %c0_i32, %c0_i32_0 : i32, i32
  }
  func.func @transform_2(%arg0: i32) -> (i32, i32) {
    %c0_i32 = arith.constant 0 : i32
    %c0_i32_0 = arith.constant 0 : i32
    %c0_i32_1 = arith.constant 0 : i32
    return %c0_i32, %c0_i32_0 : i32, i32
  }
  func.func @transform_3(%arg0: i32) -> (i32, i32) {
    %c0_i32 = arith.constant 0 : i32
    %c0_i32_0 = arith.constant 0 : i32
    %c0_i32_1 = arith.constant 0 : i32
    return %c0_i32, %c0_i32_0 : i32, i32
  }
  func.func @transform_4(%arg0: i32) -> (i32, i32) {
    %c0_i32 = arith.constant 0 : i32
    %c0_i32_0 = arith.constant 0 : i32
    %c0_i32_1 = arith.constant 0 : i32
    return %c0_i32, %c0_i32_0 : i32, i32
  }
  func.func @transform_5(%arg0: i32) -> (i32, i32, i32) {
    %c0_i32 = arith.constant 0 : i32
    %c0_i32_0 = arith.constant 0 : i32
    %c0_i32_1 = arith.constant 0 : i32
    return %arg0, %c0_i32, %c0_i32_0 : i32, i32, i32
  }
}

module attributes {stable_mosaic.version = 11 : i64} {
  func.func @_fc_kernel(%arg0: i32, %arg1: memref<8x1024xf32, #tpu.memory_space<vmem>>, %arg2: memref<1024x512xbf16, #tpu.memory_space<vmem>>, %arg3: memref<1x512xf32, #tpu.memory_space<vmem>>, %arg4: memref<512x128xbf16, #tpu.memory_space<vmem>>, %arg5: memref<1x128xf32, #tpu.memory_space<vmem>>, %arg6: memref<8x128xf32, #tpu.memory_space<vmem>>) attributes {dimension_semantics = [#tpu.dimension_semantics<parallel>], iteration_bounds = array<i64: 1>, scalar_prefetch = 0 : i64, scratch_operands = 0 : i64, tpu.core_type = #tpu.core_type<tc>, window_params = [{transform_indices = @transform_0, window_bounds = array<i64: 8, 1024>}, {pipeline_mode = #tpu.pipeline_mode<synchronous>, transform_indices = @transform_1, window_bounds = array<i64: 1024, 512>}, {pipeline_mode = #tpu.pipeline_mode<synchronous>, transform_indices = @transform_2, window_bounds = array<i64: 1, 512>}, {pipeline_mode = #tpu.pipeline_mode<synchronous>, transform_indices = @transform_3, window_bounds = array<i64: 512, 128>}, {pipeline_mode = #tpu.pipeline_mode<synchronous>, transform_indices = @transform_4, window_bounds = array<i64: 1, 128>}, {transform_indices = @transform_5, window_bounds = array<i64: 8, 128>}]} {
    %c0 = arith.constant 0 : index
    %c0_0 = arith.constant 0 : index
    %0 = vector.load %arg1[%c0, %c0_0] : memref<8x1024xf32, #tpu.memory_space<vmem>>, vector<8x1024xf32>
    %1 = arith.truncf %0 : vector<8x1024xf32> to vector<8x1024xbf16>
    %c0_1 = arith.constant 0 : index
    %c0_2 = arith.constant 0 : index
    %2 = vector.load %arg2[%c0_1, %c0_2] : memref<1024x512xbf16, #tpu.memory_space<vmem>>, vector<1024x512xbf16>
    %cst = arith.constant dense<0.000000e+00> : vector<8x512xf32>
    %3 = tpu.matmul %1, %2, %cst {dimension_numbers = #tpu.dot_dimension_numbers<[1], [0], [0], [1], [0, 0, 1, 1], [], []>} : vector<8x1024xbf16>, vector<1024x512xbf16>, vector<8x512xf32> -> vector<8x512xf32>
    %c0_3 = arith.constant 0 : index
    %c0_4 = arith.constant 0 : index
    %4 = vector.load %arg3[%c0_3, %c0_4] : memref<1x512xf32, #tpu.memory_space<vmem>>, vector<1x512xf32>
    %5 = vector.broadcast %4 : vector<1x512xf32> to vector<8x512xf32>
    %6 = arith.addf %3, %5 : vector<8x512xf32>
    %cst_5 = arith.constant 0.000000e+00 : f32
    %7 = vector.broadcast %cst_5 : f32 to vector<8x512xf32>
    %8 = arith.maximumf %6, %7 : vector<8x512xf32>
    %9 = arith.truncf %8 : vector<8x512xf32> to vector<8x512xbf16>
    %c0_6 = arith.constant 0 : index
    %c0_7 = arith.constant 0 : index
    %10 = vector.load %arg4[%c0_6, %c0_7] : memref<512x128xbf16, #tpu.memory_space<vmem>>, vector<512x128xbf16>
    %cst_8 = arith.constant dense<0.000000e+00> : vector<8x128xf32>
    %11 = tpu.matmul %9, %10, %cst_8 {dimension_numbers = #tpu.dot_dimension_numbers<[1], [0], [0], [1], [0, 0, 1, 1], [], []>} : vector<8x512xbf16>, vector<512x128xbf16>, vector<8x128xf32> -> vector<8x128xf32>
    %c0_9 = arith.constant 0 : index
    %c0_10 = arith.constant 0 : index
    %12 = vector.load %arg5[%c0_9, %c0_10] : memref<1x128xf32, #tpu.memory_space<vmem>>, vector<1x128xf32>
    %13 = vector.broadcast %12 : vector<1x128xf32> to vector<8x128xf32>
    %14 = arith.addf %11, %13 : vector<8x128xf32>
    %c0_11 = arith.constant 0 : index
    %c0_12 = arith.constant 0 : index
    %15 = vector.load %arg6[%c0_11, %c0_12] : memref<8x128xf32, #tpu.memory_space<vmem>>, vector<8x128xf32>
    tpu.vector_store %arg6[%c0_11, %c0_12], %14 {strides = array<i32>} : memref<8x128xf32, #tpu.memory_space<vmem>>, vector<8x128xf32>,
    return
  }
  func.func @transform_0(%arg0: i32) -> (i32, i32) {
    %c0_i32 = arith.constant 0 : i32
    %c0_i32_0 = arith.constant 0 : i32
    return %arg0, %c0_i32 : i32, i32
  }
  func.func @transform_1(%arg0: i32) -> (i32, i32) {
    %c0_i32 = arith.constant 0 : i32
    %c0_i32_0 = arith.constant 0 : i32
    %c0_i32_1 = arith.constant 0 : i32
    return %c0_i32, %c0_i32_0 : i32, i32
  }
  func.func @transform_2(%arg0: i32) -> (i32, i32) {
    %c0_i32 = arith.constant 0 : i32
    %c0_i32_0 = arith.constant 0 : i32
    %c0_i32_1 = arith.constant 0 : i32
    return %c0_i32, %c0_i32_0 : i32, i32
  }
  func.func @transform_3(%arg0: i32) -> (i32, i32) {
    %c0_i32 = arith.constant 0 : i32
    %c0_i32_0 = arith.constant 0 : i32
    %c0_i32_1 = arith.constant 0 : i32
    return %c0_i32, %c0_i32_0 : i32, i32
  }
  func.func @transform_4(%arg0: i32) -> (i32, i32) {
    %c0_i32 = arith.constant 0 : i32
    %c0_i32_0 = arith.constant 0 : i32
    %c0_i32_1 = arith.constant 0 : i32
    return %c0_i32, %c0_i32_0 : i32, i32
  }
  func.func @transform_5(%arg0: i32) -> (i32, i32) {
    %c0_i32 = arith.constant 0 : i32
    %c0_i32_0 = arith.constant 0 : i32
    return %arg0, %c0_i32 : i32, i32
  }
}

</mosaic_0001>

<llo_original>
// kernel: cnn_mnist_forward.3
$region0: #{cnn_mnist_forward.3}
  #allocation0 [shape = 'u32[]', space=smem, size = 0x4, offset = 0x4, fixed_abs, tag = 'smem constant byte address 0x4 - core index']
  #allocation1 [shape = 'u32[72,128]{1,0:T(1,128)}', space=vmem, size = 0x9000, scoped, tag = 'internal scratch']
  %s0 = inlined_call_operand.vmem [shape: f32[8,1024], index: 0, kind: input, shape index: {}]
  %s1 = inlined_call_operand.vmem [shape: bf16[1024,512], index: 1, kind: input, shape index: {}]
  %s2 = inlined_call_operand.vmem [shape: f32[1,512], index: 2, kind: input, shape index: {}]
  %s3 = inlined_call_operand.vmem [shape: bf16[512,128], index: 3, kind: input, shape index: {}]
  %s4 = inlined_call_operand.vmem [shape: f32[1,128], index: 4, kind: input, shape index: {}]
  %s5 = inlined_call_operand.vmem [shape: f32[8,128], index: 5, kind: output, shape index: {}]
  %s6 = sld [smem:[#allocation0]]
  $region30: #{cnn_mnist_forward.3} parent=0
    _
  %s8 = ssub.s32 1, %s6
  %s9 = scalar_select 0, %s8, %s6
  // Predicated region
  $region2: #{cnn_mnist_forward.3} parent=0 // pred_check
    _
  $region3: #{cnn_mnist_forward.3} parent=0 // pred_check_branch
    %11 = sbr.rel (0) target = $region5
  $region4: #{cnn_mnist_forward.3} parent=0 // pred_region
    _
  $region5: #{cnn_mnist_forward.3} parent=0 // pred_fallthru
    _
  // Predicated region
  $region6: #{cnn_mnist_forward.3} parent=0 // pred_check
    _
  $region7: #{cnn_mnist_forward.3} parent=0 // pred_check_branch
    %13 = sbr.rel (0) target = $region9
  $region8: #{cnn_mnist_forward.3} parent=0 // pred_region
    _
  $region9: #{cnn_mnist_forward.3} parent=0 // pred_fallthru
    _
  // Predicated region
  $region10: #{cnn_mnist_forward.3} parent=0 // pred_check
    _
  $region11: #{cnn_mnist_forward.3} parent=0 // pred_check_branch
    %15 = sbr.rel (0) target = $region13
  $region12: #{cnn_mnist_forward.3} parent=0 // pred_region
    _
  $region13: #{cnn_mnist_forward.3} parent=0 // pred_fallthru
    _
  // Predicated region
  $region14: #{cnn_mnist_forward.3} parent=0 // pred_check
    _
  $region15: #{cnn_mnist_forward.3} parent=0 // pred_check_branch
    %17 = sbr.rel (0) target = $region17
  $region16: #{cnn_mnist_forward.3} parent=0 // pred_region
    _
  $region17: #{cnn_mnist_forward.3} parent=0 // pred_fallthru
    _
  // Predicated region
  $region18: #{cnn_mnist_forward.3} parent=0 // pred_check
    _
  $region19: #{cnn_mnist_forward.3} parent=0 // pred_check_branch
    %19 = sbr.rel (0) target = $region21
  $region20: #{cnn_mnist_forward.3} parent=0 // pred_region
    _
  $region21: #{cnn_mnist_forward.3} parent=0 // pred_fallthru
    _
  %v20 = vld [vmem:[%s0] sm:$0xff]
  %v21 = vld [vmem:[%s0 + $0x8] sm:$0xff]
  %v22 = vld [vmem:[%s0 + $0x10] sm:$0xff]
  %v23 = vld [vmem:[%s0 + $0x18] sm:$0xff]
  %v24 = vld [vmem:[%s0 + $0x20] sm:$0xff]
  %v25 = vld [vmem:[%s0 + $0x28] sm:$0xff]
  %v26 = vld [vmem:[%s0 + $0x30] sm:$0xff]
  %v27 = vld [vmem:[%s0 + $0x38] sm:$0xff]
  %v28 = vpack.c.bf16 %v20, %v20
  %v29 = vpack.c.bf16 %v21, %v21
  %v30 = vpack.c.bf16 %v22, %v22
  %v31 = vpack.c.bf16 %v23, %v23
  %v32 = vpack.c.bf16 %v24, %v24
  %v33 = vpack.c.bf16 %v25, %v25
  %v34 = vpack.c.bf16 %v26, %v26
  %v35 = vpack.c.bf16 %v27, %v27
  %v36 = vld [vmem:[%s1] sm:$0xff]
  %v37 = vld [vmem:[%s1 + $0x8] sm:$0xff]
  %v38 = vld [vmem:[%s1 + $0x10] sm:$0xff]
  %v39 = vld [vmem:[%s1 + $0x18] sm:$0xff]
  %v40 = vld [vmem:[%s1 + $0x20] sm:$0xff]
  %v41 = vld [vmem:[%s1 + $0x28] sm:$0xff]
  %v42 = vld [vmem:[%s1 + $0x30] sm:$0xff]
  %v43 = vld [vmem:[%s1 + $0x38] sm:$0xff]
  %v44 = vld [vmem:[%s1 + $0x40] sm:$0xff]
  %v45 = vld [vmem:[%s1 + $0x48] sm:$0xff]
  %v46 = vld [vmem:[%s1 + $0x50] sm:$0xff]
  %v47 = vld [vmem:[%s1 + $0x58] sm:$0xff]
  %v48 = vld [vmem:[%s1 + $0x60] sm:$0xff]
  %v49 = vld [vmem:[%s1 + $0x68] sm:$0xff]
  %v50 = vld [vmem:[%s1 + $0x70] sm:$0xff]
  %v51 = vld [vmem:[%s1 + $0x78] sm:$0xff]
  %v52 = vld [vmem:[%s1 + $0x80] sm:$0xff]
  %v53 = vld [vmem:[%s1 + $0x88] sm:$0xff]
  %v54 = vld [vmem:[%s1 + $0x90] sm:$0xff]
  %v55 = vld [vmem:[%s1 + $0x98] sm:$0xff]
  %v56 = vld [vmem:[%s1 + $0xa0] sm:$0xff]
  %v57 = vld [vmem:[%s1 + $0xa8] sm:$0xff]
  %v58 = vld [vmem:[%s1 + $0xb0] sm:$0xff]
  %v59 = vld [vmem:[%s1 + $0xb8] sm:$0xff]
  %v60 = vld [vmem:[%s1 + $0xc0] sm:$0xff]
  %v61 = vld [vmem:[%s1 + $0xc8] sm:$0xff]
  %v62 = vld [vmem:[%s1 + $0xd0] sm:$0xff]
  %v63 = vld [vmem:[%s1 + $0xd8] sm:$0xff]
  %v64 = vld [vmem:[%s1 + $0xe0] sm:$0xff]
  %v65 = vld [vmem:[%s1 + $0xe8] sm:$0xff]
  %v66 = vld [vmem:[%s1 + $0xf0] sm:$0xff]
  %v67 = vld [vmem:[%s1 + $0xf8] sm:$0xff]
  %v68 = vld [vmem:[%s1 + $0x100] sm:$0xff]
  %v69 = vld [vmem:[%s1 + $0x108] sm:$0xff]
  %v70 = vld [vmem:[%s1 + $0x110] sm:$0xff]
  %v71 = vld [vmem:[%s1 + $0x118] sm:$0xff]
  %v72 = vld [vmem:[%s1 + $0x120] sm:$0xff]
  %v73 = vld [vmem:[%s1 + $0x128] sm:$0xff]
  %v74 = vld [vmem:[%s1 + $0x130] sm:$0xff]
  %v75 = vld [vmem:[%s1 + $0x138] sm:$0xff]
  %v76 = vld [vmem:[%s1 + $0x140] sm:$0xff]
  %v77 = vld [vmem:[%s1 + $0x148] sm:$0xff]
  %v78 = vld [vmem:[%s1 + $0x150] sm:$0xff]
  %v79 = vld [vmem:[%s1 + $0x158] sm:$0xff]
  %v80 = vld [vmem:[%s1 + $0x160] sm:$0xff]
  %v81 = vld [vmem:[%s1 + $0x168] sm:$0xff]
  %v82 = vld [vmem:[%s1 + $0x170] sm:$0xff]
  %v83 = vld [vmem:[%s1 + $0x178] sm:$0xff]
  %v84 = vld [vmem:[%s1 + $0x180] sm:$0xff]
  %v85 = vld [vmem:[%s1 + $0x188] sm:$0xff]
  %v86 = vld [vmem:[%s1 + $0x190] sm:$0xff]
  %v87 = vld [vmem:[%s1 + $0x198] sm:$0xff]
  %v88 = vld [vmem:[%s1 + $0x1a0] sm:$0xff]
  %v89 = vld [vmem:[%s1 + $0x1a8] sm:$0xff]
  %v90 = vld [vmem:[%s1 + $0x1b0] sm:$0xff]
  %v91 = vld [vmem:[%s1 + $0x1b8] sm:$0xff]
  %v92 = vld [vmem:[%s1 + $0x1c0] sm:$0xff]
  %v93 = vld [vmem:[%s1 + $0x1c8] sm:$0xff]
  %v94 = vld [vmem:[%s1 + $0x1d0] sm:$0xff]
  %v95 = vld [vmem:[%s1 + $0x1d8] sm:$0xff]
  %v96 = vld [vmem:[%s1 + $0x1e0] sm:$0xff]
  %v97 = vld [vmem:[%s1 + $0x1e8] sm:$0xff]
  %v98 = vld [vmem:[%s1 + $0x1f0] sm:$0xff]
  %v99 = vld [vmem:[%s1 + $0x1f8] sm:$0xff]
  %v100 = vld [vmem:[%s1 + $0x200] sm:$0xff]
  %v101 = vld [vmem:[%s1 + $0x208] sm:$0xff]
  %v102 = vld [vmem:[%s1 + $0x210] sm:$0xff]
  %v103 = vld [vmem:[%s1 + $0x218] sm:$0xff]
  %v104 = vld [vmem:[%s1 + $0x220] sm:$0xff]
  %v105 = vld [vmem:[%s1 + $0x228] sm:$0xff]
  %v106 = vld [vmem:[%s1 + $0x230] sm:$0xff]
  %v107 = vld [vmem:[%s1 + $0x238] sm:$0xff]
  %v108 = vld [vmem:[%s1 + $0x240] sm:$0xff]
  %v109 = vld [vmem:[%s1 + $0x248] sm:$0xff]
  %v110 = vld [vmem:[%s1 + $0x250] sm:$0xff]
  %v111 = vld [vmem:[%s1 + $0x258] sm:$0xff]
  %v112 = vld [vmem:[%s1 + $0x260] sm:$0xff]
  %v113 = vld [vmem:[%s1 + $0x268] sm:$0xff]
  %v114 = vld [vmem:[%s1 + $0x270] sm:$0xff]
  %v115 = vld [vmem:[%s1 + $0x278] sm:$0xff]
  %v116 = vld [vmem:[%s1 + $0x280] sm:$0xff]
  %v117 = vld [vmem:[%s1 + $0x288] sm:$0xff]
  %v118 = vld [vmem:[%s1 + $0x290] sm:$0xff]
  %v119 = vld [vmem:[%s1 + $0x298] sm:$0xff]
  %v120 = vld [vmem:[%s1 + $0x2a0] sm:$0xff]
  %v121 = vld [vmem:[%s1 + $0x2a8] sm:$0xff]
  %v122 = vld [vmem:[%s1 + $0x2b0] sm:$0xff]
  %v123 = vld [vmem:[%s1 + $0x2b8] sm:$0xff]
  %v124 = vld [vmem:[%s1 + $0x2c0] sm:$0xff]
  %v125 = vld [vmem:[%s1 + $0x2c8] sm:$0xff]
  %v126 = vld [vmem:[%s1 + $0x2d0] sm:$0xff]
  %v127 = vld [vmem:[%s1 + $0x2d8] sm:$0xff]
  %v128 = vld [vmem:[%s1 + $0x2e0] sm:$0xff]
  %v129 = vld [vmem:[%s1 + $0x2e8] sm:$0xff]
  %v130 = vld [vmem:[%s1 + $0x2f0] sm:$0xff]
  %v131 = vld [vmem:[%s1 + $0x2f8] sm:$0xff]
  %v132 = vld [vmem:[%s1 + $0x300] sm:$0xff]
  %v133 = vld [vmem:[%s1 + $0x308] sm:$0xff]
  %v134 = vld [vmem:[%s1 + $0x310] sm:$0xff]
  %v135 = vld [vmem:[%s1 + $0x318] sm:$0xff]
  %v136 = vld [vmem:[%s1 + $0x320] sm:$0xff]
  %v137 = vld [vmem:[%s1 + $0x328] sm:$0xff]
  %v138 = vld [vmem:[%s1 + $0x330] sm:$0xff]
  %v139 = vld [vmem:[%s1 + $0x338] sm:$0xff]
  %v140 = vld [vmem:[%s1 + $0x340] sm:$0xff]
  %v141 = vld [vmem:[%s1 + $0x348] sm:$0xff]
  %v142 = vld [vmem:[%s1 + $0x350] sm:$0xff]
  %v143 = vld [vmem:[%s1 + $0x358] sm:$0xff]
  %v144 = vld [vmem:[%s1 + $0x360] sm:$0xff]
  %v145 = vld [vmem:[%s1 + $0x368] sm:$0xff]
  %v146 = vld [vmem:[%s1 + $0x370] sm:$0xff]
  %v147 = vld [vmem:[%s1 + $0x378] sm:$0xff]
  %v148 = vld [vmem:[%s1 + $0x380] sm:$0xff]
  %v149 = vld [vmem:[%s1 + $0x388] sm:$0xff]
  %v150 = vld [vmem:[%s1 + $0x390] sm:$0xff]
  %v151 = vld [vmem:[%s1 + $0x398] sm:$0xff]
  %v152 = vld [vmem:[%s1 + $0x3a0] sm:$0xff]
  %v153 = vld [vmem:[%s1 + $0x3a8] sm:$0xff]
  %v154 = vld [vmem:[%s1 + $0x3b0] sm:$0xff]
  %v155 = vld [vmem:[%s1 + $0x3b8] sm:$0xff]
  %v156 = vld [vmem:[%s1 + $0x3c0] sm:$0xff]
  %v157 = vld [vmem:[%s1 + $0x3c8] sm:$0xff]
  %v158 = vld [vmem:[%s1 + $0x3d0] sm:$0xff]
  %v159 = vld [vmem:[%s1 + $0x3d8] sm:$0xff]
  %v160 = vld [vmem:[%s1 + $0x3e0] sm:$0xff]
  %v161 = vld [vmem:[%s1 + $0x3e8] sm:$0xff]
  %v162 = vld [vmem:[%s1 + $0x3f0] sm:$0xff]
  %v163 = vld [vmem:[%s1 + $0x3f8] sm:$0xff]
  %v164 = vld [vmem:[%s1 + $0x400] sm:$0xff]
  %v165 = vld [vmem:[%s1 + $0x408] sm:$0xff]
  %v166 = vld [vmem:[%s1 + $0x410] sm:$0xff]
  %v167 = vld [vmem:[%s1 + $0x418] sm:$0xff]
  %v168 = vld [vmem:[%s1 + $0x420] sm:$0xff]
  %v169 = vld [vmem:[%s1 + $0x428] sm:$0xff]
  %v170 = vld [vmem:[%s1 + $0x430] sm:$0xff]
  %v171 = vld [vmem:[%s1 + $0x438] sm:$0xff]
  %v172 = vld [vmem:[%s1 + $0x440] sm:$0xff]
  %v173 = vld [vmem:[%s1 + $0x448] sm:$0xff]
  %v174 = vld [vmem:[%s1 + $0x450] sm:$0xff]
  %v175 = vld [vmem:[%s1 + $0x458] sm:$0xff]
  %v176 = vld [vmem:[%s1 + $0x460] sm:$0xff]
  %v177 = vld [vmem:[%s1 + $0x468] sm:$0xff]
  %v178 = vld [vmem:[%s1 + $0x470] sm:$0xff]
  %v179 = vld [vmem:[%s1 + $0x478] sm:$0xff]
  %v180 = vld [vmem:[%s1 + $0x480] sm:$0xff]
  %v181 = vld [vmem:[%s1 + $0x488] sm:$0xff]
  %v182 = vld [vmem:[%s1 + $0x490] sm:$0xff]
  %v183 = vld [vmem:[%s1 + $0x498] sm:$0xff]
  %v184 = vld [vmem:[%s1 + $0x4a0] sm:$0xff]
  %v185 = vld [vmem:[%s1 + $0x4a8] sm:$0xff]
  %v186 = vld [vmem:[%s1 + $0x4b0] sm:$0xff]
  %v187 = vld [vmem:[%s1 + $0x4b8] sm:$0xff]
  %v188 = vld [vmem:[%s1 + $0x4c0] sm:$0xff]
  %v189 = vld [vmem:[%s1 + $0x4c8] sm:$0xff]
  %v190 = vld [vmem:[%s1 + $0x4d0] sm:$0xff]
  %v191 = vld [vmem:[%s1 + $0x4d8] sm:$0xff]
  %v192 = vld [vmem:[%s1 + $0x4e0] sm:$0xff]
  %v193 = vld [vmem:[%s1 + $0x4e8] sm:$0xff]
  %v194 = vld [vmem:[%s1 + $0x4f0] sm:$0xff]
  %v195 = vld [vmem:[%s1 + $0x4f8] sm:$0xff]
  %v196 = vld [vmem:[%s1 + $0x500] sm:$0xff]
  %v197 = vld [vmem:[%s1 + $0x508] sm:$0xff]
  %v198 = vld [vmem:[%s1 + $0x510] sm:$0xff]
  %v199 = vld [vmem:[%s1 + $0x518] sm:$0xff]
  %v200 = vld [vmem:[%s1 + $0x520] sm:$0xff]
  %v201 = vld [vmem:[%s1 + $0x528] sm:$0xff]
  %v202 = vld [vmem:[%s1 + $0x530] sm:$0xff]
  %v203 = vld [vmem:[%s1 + $0x538] sm:$0xff]
  %v204 = vld [vmem:[%s1 + $0x540] sm:$0xff]
  %v205 = vld [vmem:[%s1 + $0x548] sm:$0xff]
  %v206 = vld [vmem:[%s1 + $0x550] sm:$0xff]
  %v207 = vld [vmem:[%s1 + $0x558] sm:$0xff]
  %v208 = vld [vmem:[%s1 + $0x560] sm:$0xff]
  %v209 = vld [vmem:[%s1 + $0x568] sm:$0xff]
  %v210 = vld [vmem:[%s1 + $0x570] sm:$0xff]
  %v211 = vld [vmem:[%s1 + $0x578] sm:$0xff]
  %v212 = vld [vmem:[%s1 + $0x580] sm:$0xff]
  %v213 = vld [vmem:[%s1 + $0x588] sm:$0xff]
  %v214 = vld [vmem:[%s1 + $0x590] sm:$0xff]
  %v215 = vld [vmem:[%s1 + $0x598] sm:$0xff]
  %v216 = vld [vmem:[%s1 + $0x5a0] sm:$0xff]
  %v217 = vld [vmem:[%s1 + $0x5a8] sm:$0xff]
  %v218 = vld [vmem:[%s1 + $0x5b0] sm:$0xff]
  %v219 = vld [vmem:[%s1 + $0x5b8] sm:$0xff]
  %v220 = vld [vmem:[%s1 + $0x5c0] sm:$0xff]
  %v221 = vld [vmem:[%s1 + $0x5c8] sm:$0xff]
  %v222 = vld [vmem:[%s1 + $0x5d0] sm:$0xff]
  %v223 = vld [vmem:[%s1 + $0x5d8] sm:$0xff]
  %v224 = vld [vmem:[%s1 + $0x5e0] sm:$0xff]
  %v225 = vld [vmem:[%s1 + $0x5e8] sm:$0xff]
  %v226 = vld [vmem:[%s1 + $0x5f0] sm:$0xff]
  %v227 = vld [vmem:[%s1 + $0x5f8] sm:$0xff]
  %v228 = vld [vmem:[%s1 + $0x600] sm:$0xff]
  %v229 = vld [vmem:[%s1 + $0x608] sm:$0xff]
  %v230 = vld [vmem:[%s1 + $0x610] sm:$0xff]
  %v231 = vld [vmem:[%s1 + $0x618] sm:$0xff]
  %v232 = vld [vmem:[%s1 + $0x620] sm:$0xff]
  %v233 = vld [vmem:[%s1 + $0x628] sm:$0xff]
  %v234 = vld [vmem:[%s1 + $0x630] sm:$0xff]
  %v235 = vld [vmem:[%s1 + $0x638] sm:$0xff]
  %v236 = vld [vmem:[%s1 + $0x640] sm:$0xff]
  %v237 = vld [vmem:[%s1 + $0x648] sm:$0xff]
  %v238 = vld [vmem:[%s1 + $0x650] sm:$0xff]
  %v239 = vld [vmem:[%s1 + $0x658] sm:$0xff]
  %v240 = vld [vmem:[%s1 + $0x660] sm:$0xff]
  %v241 = vld [vmem:[%s1 + $0x668] sm:$0xff]
  %v242 = vld [vmem:[%s1 + $0x670] sm:$0xff]
  %v243 = vld [vmem:[%s1 + $0x678] sm:$0xff]
  %v244 = vld [vmem:[%s1 + $0x680] sm:$0xff]
  %v245 = vld [vmem:[%s1 + $0x688] sm:$0xff]
  %v246 = vld [vmem:[%s1 + $0x690] sm:$0xff]
  %v247 = vld [vmem:[%s1 + $0x698] sm:$0xff]
  %v248 = vld [vmem:[%s1 + $0x6a0] sm:$0xff]
  %v249 = vld [vmem:[%s1 + $0x6a8] sm:$0xff]
  %v250 = vld [vmem:[%s1 + $0x6b0] sm:$0xff]
  %v251 = vld [vmem:[%s1 + $0x6b8] sm:$0xff]
  %v252 = vld [vmem:[%s1 + $0x6c0] sm:$0xff]
  %v253 = vld [vmem:[%s1 + $0x6c8] sm:$0xff]
  %v254 = vld [vmem:[%s1 + $0x6d0] sm:$0xff]
  %v255 = vld [vmem:[%s1 + $0x6d8] sm:$0xff]
  %v256 = vld [vmem:[%s1 + $0x6e0] sm:$0xff]
  %v257 = vld [vmem:[%s1 + $0x6e8] sm:$0xff]
  %v258 = vld [vmem:[%s1 + $0x6f0] sm:$0xff]
  %v259 = vld [vmem:[%s1 + $0x6f8] sm:$0xff]
  %v260 = vld [vmem:[%s1 + $0x700] sm:$0xff]
  %v261 = vld [vmem:[%s1 + $0x708] sm:$0xff]
  %v262 = vld [vmem:[%s1 + $0x710] sm:$0xff]
  %v263 = vld [vmem:[%s1 + $0x718] sm:$0xff]
  %v264 = vld [vmem:[%s1 + $0x720] sm:$0xff]
  %v265 = vld [vmem:[%s1 + $0x728] sm:$0xff]
  %v266 = vld [vmem:[%s1 + $0x730] sm:$0xff]
  %v267 = vld [vmem:[%s1 + $0x738] sm:$0xff]
  %v268 = vld [vmem:[%s1 + $0x740] sm:$0xff]
  %v269 = vld [vmem:[%s1 + $0x748] sm:$0xff]
  %v270 = vld [vmem:[%s1 + $0x750] sm:$0xff]
  %v271 = vld [vmem:[%s1 + $0x758] sm:$0xff]
  %v272 = vld [vmem:[%s1 + $0x760] sm:$0xff]
  %v273 = vld [vmem:[%s1 + $0x768] sm:$0xff]
  %v274 = vld [vmem:[%s1 + $0x770] sm:$0xff]
  %v275 = vld [vmem:[%s1 + $0x778] sm:$0xff]
  %v276 = vld [vmem:[%s1 + $0x780] sm:$0xff]
  %v277 = vld [vmem:[%s1 + $0x788] sm:$0xff]
  %v278 = vld [vmem:[%s1 + $0x790] sm:$0xff]
  %v279 = vld [vmem:[%s1 + $0x798] sm:$0xff]
  %v280 = vld [vmem:[%s1 + $0x7a0] sm:$0xff]
  %v281 = vld [vmem:[%s1 + $0x7a8] sm:$0xff]
  %v282 = vld [vmem:[%s1 + $0x7b0] sm:$0xff]
  %v283 = vld [vmem:[%s1 + $0x7b8] sm:$0xff]
  %v284 = vld [vmem:[%s1 + $0x7c0] sm:$0xff]
  %v285 = vld [vmem:[%s1 + $0x7c8] sm:$0xff]
  %v286 = vld [vmem:[%s1 + $0x7d0] sm:$0xff]
  %v287 = vld [vmem:[%s1 + $0x7d8] sm:$0xff]
  %v288 = vld [vmem:[%s1 + $0x7e0] sm:$0xff]
  %v289 = vld [vmem:[%s1 + $0x7e8] sm:$0xff]
  %v290 = vld [vmem:[%s1 + $0x7f0] sm:$0xff]
  %v291 = vld [vmem:[%s1 + $0x7f8] sm:$0xff]
  %v292 = vld [vmem:[%s2] sm:$0xf]
  %v294 = vperm.slane %v292, 0
  %v295 = vperm.slane %v292, 1
  %v296 = vperm.slane %v292, 2
  %v297 = vperm.slane %v292, 3
  %v558 = vunpack.c.l.b16 %v36
  %v559 = vunpack.c.h.b16 %v36
  %v560 = vunpack.c.l.b16 %v37
  %v561 = vunpack.c.h.b16 %v37
  %v562 = vunpack.c.l.b16 %v38
  %v563 = vunpack.c.h.b16 %v38
  %v564 = vunpack.c.l.b16 %v39
  %v565 = vunpack.c.h.b16 %v39
  %v566 = vunpack.c.l.b16 %v40
  %v567 = vunpack.c.h.b16 %v40
  %v568 = vunpack.c.l.b16 %v41
  %v569 = vunpack.c.h.b16 %v41
  %v570 = vunpack.c.l.b16 %v42
  %v571 = vunpack.c.h.b16 %v42
  %v572 = vunpack.c.l.b16 %v43
  %v573 = vunpack.c.h.b16 %v43
  %v574 = vunpack.c.l.b16 %v44
  %v575 = vunpack.c.h.b16 %v44
  %v576 = vunpack.c.l.b16 %v45
  %v577 = vunpack.c.h.b16 %v45
  %v578 = vunpack.c.l.b16 %v46
  %v579 = vunpack.c.h.b16 %v46
  %v580 = vunpack.c.l.b16 %v47
  %v581 = vunpack.c.h.b16 %v47
  %v582 = vunpack.c.l.b16 %v48
  %v583 = vunpack.c.h.b16 %v48
  %v584 = vunpack.c.l.b16 %v49
  %v585 = vunpack.c.h.b16 %v49
  %v586 = vunpack.c.l.b16 %v50
  %v587 = vunpack.c.h.b16 %v50
  %v588 = vunpack.c.l.b16 %v51
  %v589 = vunpack.c.h.b16 %v51
  %v590 = vunpack.c.l.b16 %v52
  %v591 = vunpack.c.h.b16 %v52
  %v592 = vunpack.c.l.b16 %v53
  %v593 = vunpack.c.h.b16 %v53
  %v594 = vunpack.c.l.b16 %v54
  %v595 = vunpack.c.h.b16 %v54
  %v596 = vunpack.c.l.b16 %v55
  %v597 = vunpack.c.h.b16 %v55
  %v598 = vunpack.c.l.b16 %v56
  %v599 = vunpack.c.h.b16 %v56
  %v600 = vunpack.c.l.b16 %v57
  %v601 = vunpack.c.h.b16 %v57
  %v602 = vunpack.c.l.b16 %v58
  %v603 = vunpack.c.h.b16 %v58
  %v604 = vunpack.c.l.b16 %v59
  %v605 = vunpack.c.h.b16 %v59
  %v606 = vunpack.c.l.b16 %v60
  %v607 = vunpack.c.h.b16 %v60
  %v608 = vunpack.c.l.b16 %v61
  %v609 = vunpack.c.h.b16 %v61
  %v610 = vunpack.c.l.b16 %v62
  %v611 = vunpack.c.h.b16 %v62
  %v612 = vunpack.c.l.b16 %v63
  %v613 = vunpack.c.h.b16 %v63
  %v614 = vunpack.c.l.b16 %v64
  %v615 = vunpack.c.h.b16 %v64
  %v616 = vunpack.c.l.b16 %v65
  %v617 = vunpack.c.h.b16 %v65
  %v618 = vunpack.c.l.b16 %v66
  %v619 = vunpack.c.h.b16 %v66
  %v620 = vunpack.c.l.b16 %v67
  %v621 = vunpack.c.h.b16 %v67
  %v622 = vunpack.c.l.b16 %v68
  %v623 = vunpack.c.h.b16 %v68
  %v624 = vunpack.c.l.b16 %v69
  %v625 = vunpack.c.h.b16 %v69
  %v626 = vunpack.c.l.b16 %v70
  %v627 = vunpack.c.h.b16 %v70
  %v628 = vunpack.c.l.b16 %v71
  %v629 = vunpack.c.h.b16 %v71
  %v630 = vunpack.c.l.b16 %v72
  %v631 = vunpack.c.h.b16 %v72
  %v632 = vunpack.c.l.b16 %v73
  %v633 = vunpack.c.h.b16 %v73
  %v634 = vunpack.c.l.b16 %v74
  %v635 = vunpack.c.h.b16 %v74
  %v636 = vunpack.c.l.b16 %v75
  %v637 = vunpack.c.h.b16 %v75
  %v638 = vunpack.c.l.b16 %v76
  %v639 = vunpack.c.h.b16 %v76
  %v640 = vunpack.c.l.b16 %v77
  %v641 = vunpack.c.h.b16 %v77
  %v642 = vunpack.c.l.b16 %v78
  %v643 = vunpack.c.h.b16 %v78
  %v644 = vunpack.c.l.b16 %v79
  %v645 = vunpack.c.h.b16 %v79
  %v646 = vunpack.c.l.b16 %v80
  %v647 = vunpack.c.h.b16 %v80
  %v648 = vunpack.c.l.b16 %v81
  %v649 = vunpack.c.h.b16 %v81
  %v650 = vunpack.c.l.b16 %v82
  %v651 = vunpack.c.h.b16 %v82
  %v652 = vunpack.c.l.b16 %v83
  %v653 = vunpack.c.h.b16 %v83
  %v654 = vunpack.c.l.b16 %v84
  %v655 = vunpack.c.h.b16 %v84
  %v656 = vunpack.c.l.b16 %v85
  %v657 = vunpack.c.h.b16 %v85
  %v658 = vunpack.c.l.b16 %v86
  %v659 = vunpack.c.h.b16 %v86
  %v660 = vunpack.c.l.b16 %v87
  %v661 = vunpack.c.h.b16 %v87
  %v662 = vunpack.c.l.b16 %v88
  %v663 = vunpack.c.h.b16 %v88
  %v664 = vunpack.c.l.b16 %v89
  %v665 = vunpack.c.h.b16 %v89
  %v666 = vunpack.c.l.b16 %v90
  %v667 = vunpack.c.h.b16 %v90
  %v668 = vunpack.c.l.b16 %v91
  %v669 = vunpack.c.h.b16 %v91
  %v670 = vunpack.c.l.b16 %v92
  %v671 = vunpack.c.h.b16 %v92
  %v672 = vunpack.c.l.b16 %v93
  %v673 = vunpack.c.h.b16 %v93
  %v674 = vunpack.c.l.b16 %v94
  %v675 = vunpack.c.h.b16 %v94
  %v676 = vunpack.c.l.b16 %v95
  %v677 = vunpack.c.h.b16 %v95
  %v678 = vunpack.c.l.b16 %v96
  %v679 = vunpack.c.h.b16 %v96
  %v680 = vunpack.c.l.b16 %v97
  %v681 = vunpack.c.h.b16 %v97
  %v682 = vunpack.c.l.b16 %v98
  %v683 = vunpack.c.h.b16 %v98
  %v684 = vunpack.c.l.b16 %v99
  %v685 = vunpack.c.h.b16 %v99
  %v686 = vunpack.c.l.b16 %v100
  %v687 = vunpack.c.h.b16 %v100
  %v688 = vunpack.c.l.b16 %v101
  %v689 = vunpack.c.h.b16 %v101
  %v690 = vunpack.c.l.b16 %v102
  %v691 = vunpack.c.h.b16 %v102
  %v692 = vunpack.c.l.b16 %v103
  %v693 = vunpack.c.h.b16 %v103
  %v694 = vunpack.c.l.b16 %v104
  %v695 = vunpack.c.h.b16 %v104
  %v696 = vunpack.c.l.b16 %v105
  %v697 = vunpack.c.h.b16 %v105
  %v698 = vunpack.c.l.b16 %v106
  %v699 = vunpack.c.h.b16 %v106
  %v700 = vunpack.c.l.b16 %v107
  %v701 = vunpack.c.h.b16 %v107
  %v702 = vunpack.c.l.b16 %v108
  %v703 = vunpack.c.h.b16 %v108
  %v704 = vunpack.c.l.b16 %v109
  %v705 = vunpack.c.h.b16 %v109
  %v706 = vunpack.c.l.b16 %v110
  %v707 = vunpack.c.h.b16 %v110
  %v708 = vunpack.c.l.b16 %v111
  %v709 = vunpack.c.h.b16 %v111
  %v710 = vunpack.c.l.b16 %v112
  %v711 = vunpack.c.h.b16 %v112
  %v712 = vunpack.c.l.b16 %v113
  %v713 = vunpack.c.h.b16 %v113
  %v714 = vunpack.c.l.b16 %v114
  %v715 = vunpack.c.h.b16 %v114
  %v716 = vunpack.c.l.b16 %v115
  %v717 = vunpack.c.h.b16 %v115
  %v718 = vunpack.c.l.b16 %v116
  %v719 = vunpack.c.h.b16 %v116
  %v720 = vunpack.c.l.b16 %v117
  %v721 = vunpack.c.h.b16 %v117
  %v722 = vunpack.c.l.b16 %v118
  %v723 = vunpack.c.h.b16 %v118
  %v724 = vunpack.c.l.b16 %v119
  %v725 = vunpack.c.h.b16 %v119
  %v726 = vunpack.c.l.b16 %v120
  %v727 = vunpack.c.h.b16 %v120
  %v728 = vunpack.c.l.b16 %v121
  %v729 = vunpack.c.h.b16 %v121
  %v730 = vunpack.c.l.b16 %v122
  %v731 = vunpack.c.h.b16 %v122
  %v732 = vunpack.c.l.b16 %v123
  %v733 = vunpack.c.h.b16 %v123
  %v734 = vunpack.c.l.b16 %v124
  %v735 = vunpack.c.h.b16 %v124
  %v736 = vunpack.c.l.b16 %v125
  %v737 = vunpack.c.h.b16 %v125
  %v738 = vunpack.c.l.b16 %v126
  %v739 = vunpack.c.h.b16 %v126
  %v740 = vunpack.c.l.b16 %v127
  %v741 = vunpack.c.h.b16 %v127
  %v742 = vunpack.c.l.b16 %v128
  %v743 = vunpack.c.h.b16 %v128
  %v744 = vunpack.c.l.b16 %v129
  %v745 = vunpack.c.h.b16 %v129
  %v746 = vunpack.c.l.b16 %v130
  %v747 = vunpack.c.h.b16 %v130
  %v748 = vunpack.c.l.b16 %v131
  %v749 = vunpack.c.h.b16 %v131
  %v750 = vunpack.c.l.b16 %v132
  %v751 = vunpack.c.h.b16 %v132
  %v752 = vunpack.c.l.b16 %v133
  %v753 = vunpack.c.h.b16 %v133
  %v754 = vunpack.c.l.b16 %v134
  %v755 = vunpack.c.h.b16 %v134
  %v756 = vunpack.c.l.b16 %v135
  %v757 = vunpack.c.h.b16 %v135
  %v758 = vunpack.c.l.b16 %v136
  %v759 = vunpack.c.h.b16 %v136
  %v760 = vunpack.c.l.b16 %v137
  %v761 = vunpack.c.h.b16 %v137
  %v762 = vunpack.c.l.b16 %v138
  %v763 = vunpack.c.h.b16 %v138
  %v764 = vunpack.c.l.b16 %v139
  %v765 = vunpack.c.h.b16 %v139
  %v766 = vunpack.c.l.b16 %v140
  %v767 = vunpack.c.h.b16 %v140
  %v768 = vunpack.c.l.b16 %v141
  %v769 = vunpack.c.h.b16 %v141
  %v770 = vunpack.c.l.b16 %v142
  %v771 = vunpack.c.h.b16 %v142
  %v772 = vunpack.c.l.b16 %v143
  %v773 = vunpack.c.h.b16 %v143
  %v774 = vunpack.c.l.b16 %v144
  %v775 = vunpack.c.h.b16 %v144
  %v776 = vunpack.c.l.b16 %v145
  %v777 = vunpack.c.h.b16 %v145
  %v778 = vunpack.c.l.b16 %v146
  %v779 = vunpack.c.h.b16 %v146
  %v780 = vunpack.c.l.b16 %v147
  %v781 = vunpack.c.h.b16 %v147
  %v782 = vunpack.c.l.b16 %v148
  %v783 = vunpack.c.h.b16 %v148
  %v784 = vunpack.c.l.b16 %v149
  %v785 = vunpack.c.h.b16 %v149
  %v786 = vunpack.c.l.b16 %v150
  %v787 = vunpack.c.h.b16 %v150
  %v788 = vunpack.c.l.b16 %v151
  %v789 = vunpack.c.h.b16 %v151
  %v790 = vunpack.c.l.b16 %v152
  %v791 = vunpack.c.h.b16 %v152
  %v792 = vunpack.c.l.b16 %v153
  %v793 = vunpack.c.h.b16 %v153
  %v794 = vunpack.c.l.b16 %v154
  %v795 = vunpack.c.h.b16 %v154
  %v796 = vunpack.c.l.b16 %v155
  %v797 = vunpack.c.h.b16 %v155
  %v798 = vunpack.c.l.b16 %v156
  %v799 = vunpack.c.h.b16 %v156
  %v800 = vunpack.c.l.b16 %v157
  %v801 = vunpack.c.h.b16 %v157
  %v802 = vunpack.c.l.b16 %v158
  %v803 = vunpack.c.h.b16 %v158
  %v804 = vunpack.c.l.b16 %v159
  %v805 = vunpack.c.h.b16 %v159
  %v806 = vunpack.c.l.b16 %v160
  %v807 = vunpack.c.h.b16 %v160
  %v808 = vunpack.c.l.b16 %v161
  %v809 = vunpack.c.h.b16 %v161
  %v810 = vunpack.c.l.b16 %v162
  %v811 = vunpack.c.h.b16 %v162
  %v812 = vunpack.c.l.b16 %v163
  %v813 = vunpack.c.h.b16 %v163
  %v814 = vunpack.c.l.b16 %v164
  %v815 = vunpack.c.h.b16 %v164
  %v816 = vunpack.c.l.b16 %v165
  %v817 = vunpack.c.h.b16 %v165
  %v818 = vunpack.c.l.b16 %v166
  %v819 = vunpack.c.h.b16 %v166
  %v820 = vunpack.c.l.b16 %v167
  %v821 = vunpack.c.h.b16 %v167
  %v822 = vunpack.c.l.b16 %v168
  %v823 = vunpack.c.h.b16 %v168
  %v824 = vunpack.c.l.b16 %v169
  %v825 = vunpack.c.h.b16 %v169
  %v826 = vunpack.c.l.b16 %v170
  %v827 = vunpack.c.h.b16 %v170
  %v828 = vunpack.c.l.b16 %v171
  %v829 = vunpack.c.h.b16 %v171
  %v830 = vunpack.c.l.b16 %v172
  %v831 = vunpack.c.h.b16 %v172
  %v832 = vunpack.c.l.b16 %v173
  %v833 = vunpack.c.h.b16 %v173
  %v834 = vunpack.c.l.b16 %v174
  %v835 = vunpack.c.h.b16 %v174
  %v836 = vunpack.c.l.b16 %v175
  %v837 = vunpack.c.h.b16 %v175
  %v838 = vunpack.c.l.b16 %v176
  %v839 = vunpack.c.h.b16 %v176
  %v840 = vunpack.c.l.b16 %v177
  %v841 = vunpack.c.h.b16 %v177
  %v842 = vunpack.c.l.b16 %v178
  %v843 = vunpack.c.h.b16 %v178
  %v844 = vunpack.c.l.b16 %v179
  %v845 = vunpack.c.h.b16 %v179
  %v846 = vunpack.c.l.b16 %v180
  %v847 = vunpack.c.h.b16 %v180
  %v848 = vunpack.c.l.b16 %v181
  %v849 = vunpack.c.h.b16 %v181
  %v850 = vunpack.c.l.b16 %v182
  %v851 = vunpack.c.h.b16 %v182
  %v852 = vunpack.c.l.b16 %v183
  %v853 = vunpack.c.h.b16 %v183
  %v854 = vunpack.c.l.b16 %v184
  %v855 = vunpack.c.h.b16 %v184
  %v856 = vunpack.c.l.b16 %v185
  %v857 = vunpack.c.h.b16 %v185
  %v858 = vunpack.c.l.b16 %v186
  %v859 = vunpack.c.h.b16 %v186
  %v860 = vunpack.c.l.b16 %v187
  %v861 = vunpack.c.h.b16 %v187
  %v862 = vunpack.c.l.b16 %v188
  %v863 = vunpack.c.h.b16 %v188
  %v864 = vunpack.c.l.b16 %v189
  %v865 = vunpack.c.h.b16 %v189
  %v866 = vunpack.c.l.b16 %v190
  %v867 = vunpack.c.h.b16 %v190
  %v868 = vunpack.c.l.b16 %v191
  %v869 = vunpack.c.h.b16 %v191
  %v870 = vunpack.c.l.b16 %v192
  %v871 = vunpack.c.h.b16 %v192
  %v872 = vunpack.c.l.b16 %v193
  %v873 = vunpack.c.h.b16 %v193
  %v874 = vunpack.c.l.b16 %v194
  %v875 = vunpack.c.h.b16 %v194
  %v876 = vunpack.c.l.b16 %v195
  %v877 = vunpack.c.h.b16 %v195
  %v878 = vunpack.c.l.b16 %v196
  %v879 = vunpack.c.h.b16 %v196
  %v880 = vunpack.c.l.b16 %v197
  %v881 = vunpack.c.h.b16 %v197
  %v882 = vunpack.c.l.b16 %v198
  %v883 = vunpack.c.h.b16 %v198
  %v884 = vunpack.c.l.b16 %v199
  %v885 = vunpack.c.h.b16 %v199
  %v886 = vunpack.c.l.b16 %v200
  %v887 = vunpack.c.h.b16 %v200
  %v888 = vunpack.c.l.b16 %v201
  %v889 = vunpack.c.h.b16 %v201
  %v890 = vunpack.c.l.b16 %v202
  %v891 = vunpack.c.h.b16 %v202
  %v892 = vunpack.c.l.b16 %v203
  %v893 = vunpack.c.h.b16 %v203
  %v894 = vunpack.c.l.b16 %v204
  %v895 = vunpack.c.h.b16 %v204
  %v896 = vunpack.c.l.b16 %v205
  %v897 = vunpack.c.h.b16 %v205
  %v898 = vunpack.c.l.b16 %v206
  %v899 = vunpack.c.h.b16 %v206
  %v900 = vunpack.c.l.b16 %v207
  %v901 = vunpack.c.h.b16 %v207
  %v902 = vunpack.c.l.b16 %v208
  %v903 = vunpack.c.h.b16 %v208
  %v904 = vunpack.c.l.b16 %v209
  %v905 = vunpack.c.h.b16 %v209
  %v906 = vunpack.c.l.b16 %v210
  %v907 = vunpack.c.h.b16 %v210
  %v908 = vunpack.c.l.b16 %v211
  %v909 = vunpack.c.h.b16 %v211
  %v910 = vunpack.c.l.b16 %v212
  %v911 = vunpack.c.h.b16 %v212
  %v912 = vunpack.c.l.b16 %v213
  %v913 = vunpack.c.h.b16 %v213
  %v914 = vunpack.c.l.b16 %v214
  %v915 = vunpack.c.h.b16 %v214
  %v916 = vunpack.c.l.b16 %v215
  %v917 = vunpack.c.h.b16 %v215
  %v918 = vunpack.c.l.b16 %v216
  %v919 = vunpack.c.h.b16 %v216
  %v920 = vunpack.c.l.b16 %v217
  %v921 = vunpack.c.h.b16 %v217
  %v922 = vunpack.c.l.b16 %v218
  %v923 = vunpack.c.h.b16 %v218
  %v924 = vunpack.c.l.b16 %v219
  %v925 = vunpack.c.h.b16 %v219
  %v926 = vunpack.c.l.b16 %v220
  %v927 = vunpack.c.h.b16 %v220
  %v928 = vunpack.c.l.b16 %v221
  %v929 = vunpack.c.h.b16 %v221
  %v930 = vunpack.c.l.b16 %v222
  %v931 = vunpack.c.h.b16 %v222
  %v932 = vunpack.c.l.b16 %v223
  %v933 = vunpack.c.h.b16 %v223
  %v934 = vunpack.c.l.b16 %v224
  %v935 = vunpack.c.h.b16 %v224
  %v936 = vunpack.c.l.b16 %v225
  %v937 = vunpack.c.h.b16 %v225
  %v938 = vunpack.c.l.b16 %v226
  %v939 = vunpack.c.h.b16 %v226
  %v940 = vunpack.c.l.b16 %v227
  %v941 = vunpack.c.h.b16 %v227
  %v942 = vunpack.c.l.b16 %v228
  %v943 = vunpack.c.h.b16 %v228
  %v944 = vunpack.c.l.b16 %v229
  %v945 = vunpack.c.h.b16 %v229
  %v946 = vunpack.c.l.b16 %v230
  %v947 = vunpack.c.h.b16 %v230
  %v948 = vunpack.c.l.b16 %v231
  %v949 = vunpack.c.h.b16 %v231
  %v950 = vunpack.c.l.b16 %v232
  %v951 = vunpack.c.h.b16 %v232
  %v952 = vunpack.c.l.b16 %v233
  %v953 = vunpack.c.h.b16 %v233
  %v954 = vunpack.c.l.b16 %v234
  %v955 = vunpack.c.h.b16 %v234
  %v956 = vunpack.c.l.b16 %v235
  %v957 = vunpack.c.h.b16 %v235
  %v958 = vunpack.c.l.b16 %v236
  %v959 = vunpack.c.h.b16 %v236
  %v960 = vunpack.c.l.b16 %v237
  %v961 = vunpack.c.h.b16 %v237
  %v962 = vunpack.c.l.b16 %v238
  %v963 = vunpack.c.h.b16 %v238
  %v964 = vunpack.c.l.b16 %v239
  %v965 = vunpack.c.h.b16 %v239
  %v966 = vunpack.c.l.b16 %v240
  %v967 = vunpack.c.h.b16 %v240
  %v968 = vunpack.c.l.b16 %v241
  %v969 = vunpack.c.h.b16 %v241
  %v970 = vunpack.c.l.b16 %v242
  %v971 = vunpack.c.h.b16 %v242
  %v972 = vunpack.c.l.b16 %v243
  %v973 = vunpack.c.h.b16 %v243
  %v974 = vunpack.c.l.b16 %v244
  %v975 = vunpack.c.h.b16 %v244
  %v976 = vunpack.c.l.b16 %v245
  %v977 = vunpack.c.h.b16 %v245
  %v978 = vunpack.c.l.b16 %v246
  %v979 = vunpack.c.h.b16 %v246
  %v980 = vunpack.c.l.b16 %v247
  %v981 = vunpack.c.h.b16 %v247
  %v982 = vunpack.c.l.b16 %v248
  %v983 = vunpack.c.h.b16 %v248
  %v984 = vunpack.c.l.b16 %v249
  %v985 = vunpack.c.h.b16 %v249
  %v986 = vunpack.c.l.b16 %v250
  %v987 = vunpack.c.h.b16 %v250
  %v988 = vunpack.c.l.b16 %v251
  %v989 = vunpack.c.h.b16 %v251
  %v990 = vunpack.c.l.b16 %v252
  %v991 = vunpack.c.h.b16 %v252
  %v992 = vunpack.c.l.b16 %v253
  %v993 = vunpack.c.h.b16 %v253
  %v994 = vunpack.c.l.b16 %v254
  %v995 = vunpack.c.h.b16 %v254
  %v996 = vunpack.c.l.b16 %v255
  %v997 = vunpack.c.h.b16 %v255
  %v998 = vunpack.c.l.b16 %v256
  %v999 = vunpack.c.h.b16 %v256
  %v1000 = vunpack.c.l.b16 %v257
  %v1001 = vunpack.c.h.b16 %v257
  %v1002 = vunpack.c.l.b16 %v258
  %v1003 = vunpack.c.h.b16 %v258
  %v1004 = vunpack.c.l.b16 %v259
  %v1005 = vunpack.c.h.b16 %v259
  %v1006 = vunpack.c.l.b16 %v260
  %v1007 = vunpack.c.h.b16 %v260
  %v1008 = vunpack.c.l.b16 %v261
  %v1009 = vunpack.c.h.b16 %v261
  %v1010 = vunpack.c.l.b16 %v262
  %v1011 = vunpack.c.h.b16 %v262
  %v1012 = vunpack.c.l.b16 %v263
  %v1013 = vunpack.c.h.b16 %v263
  %v1014 = vunpack.c.l.b16 %v264
  %v1015 = vunpack.c.h.b16 %v264
  %v1016 = vunpack.c.l.b16 %v265
  %v1017 = vunpack.c.h.b16 %v265
  %v1018 = vunpack.c.l.b16 %v266
  %v1019 = vunpack.c.h.b16 %v266
  %v1020 = vunpack.c.l.b16 %v267
  %v1021 = vunpack.c.h.b16 %v267
  %v1022 = vunpack.c.l.b16 %v268
  %v1023 = vunpack.c.h.b16 %v268
  %v1024 = vunpack.c.l.b16 %v269
  %v1025 = vunpack.c.h.b16 %v269
  %v1026 = vunpack.c.l.b16 %v270
  %v1027 = vunpack.c.h.b16 %v270
  %v1028 = vunpack.c.l.b16 %v271
  %v1029 = vunpack.c.h.b16 %v271
  %v1030 = vunpack.c.l.b16 %v272
  %v1031 = vunpack.c.h.b16 %v272
  %v1032 = vunpack.c.l.b16 %v273
  %v1033 = vunpack.c.h.b16 %v273
  %v1034 = vunpack.c.l.b16 %v274
  %v1035 = vunpack.c.h.b16 %v274
  %v1036 = vunpack.c.l.b16 %v275
  %v1037 = vunpack.c.h.b16 %v275
  %v1038 = vunpack.c.l.b16 %v276
  %v1039 = vunpack.c.h.b16 %v276
  %v1040 = vunpack.c.l.b16 %v277
  %v1041 = vunpack.c.h.b16 %v277
  %v1042 = vunpack.c.l.b16 %v278
  %v1043 = vunpack.c.h.b16 %v278
  %v1044 = vunpack.c.l.b16 %v279
  %v1045 = vunpack.c.h.b16 %v279
  %v1046 = vunpack.c.l.b16 %v280
  %v1047 = vunpack.c.h.b16 %v280
  %v1048 = vunpack.c.l.b16 %v281
  %v1049 = vunpack.c.h.b16 %v281
  %v1050 = vunpack.c.l.b16 %v282
  %v1051 = vunpack.c.h.b16 %v282
  %v1052 = vunpack.c.l.b16 %v283
  %v1053 = vunpack.c.h.b16 %v283
  %v1054 = vunpack.c.l.b16 %v284
  %v1055 = vunpack.c.h.b16 %v284
  %v1056 = vunpack.c.l.b16 %v285
  %v1057 = vunpack.c.h.b16 %v285
  %v1058 = vunpack.c.l.b16 %v286
  %v1059 = vunpack.c.h.b16 %v286
  %v1060 = vunpack.c.l.b16 %v287
  %v1061 = vunpack.c.h.b16 %v287
  %v1062 = vunpack.c.l.b16 %v288
  %v1063 = vunpack.c.h.b16 %v288
  %v1064 = vunpack.c.l.b16 %v289
  %v1065 = vunpack.c.h.b16 %v289
  %v1066 = vunpack.c.l.b16 %v290
  %v1067 = vunpack.c.h.b16 %v290
  %v1068 = vunpack.c.l.b16 %v291
  %v1069 = vunpack.c.h.b16 %v291
  %v1070 = vpack.c.b16 %v562, %v558
  %v1071 = vpack.c.b16 %v563, %v559
  %v1072 = vpack.c.b16 %v564, %v560
  %v1073 = vpack.c.b16 %v565, %v561
  %v1074 = vpack.c.b16 %v570, %v566
  %v1075 = vpack.c.b16 %v571, %v567
  %v1076 = vpack.c.b16 %v572, %v568
  %v1077 = vpack.c.b16 %v573, %v569
  %v1078 = vpack.c.b16 %v578, %v574
  %v1079 = vpack.c.b16 %v579, %v575
  %v1080 = vpack.c.b16 %v580, %v576
  %v1081 = vpack.c.b16 %v581, %v577
  %v1082 = vpack.c.b16 %v586, %v582
  %v1083 = vpack.c.b16 %v587, %v583
  %v1084 = vpack.c.b16 %v588, %v584
  %v1085 = vpack.c.b16 %v589, %v585
  %v1086 = vpack.c.b16 %v594, %v590
  %v1087 = vpack.c.b16 %v595, %v591
  %v1088 = vpack.c.b16 %v596, %v592
  %v1089 = vpack.c.b16 %v597, %v593
  %v1090 = vpack.c.b16 %v602, %v598
  %v1091 = vpack.c.b16 %v603, %v599
  %v1092 = vpack.c.b16 %v604, %v600
  %v1093 = vpack.c.b16 %v605, %v601
  %v1094 = vpack.c.b16 %v610, %v606
  %v1095 = vpack.c.b16 %v611, %v607
  %v1096 = vpack.c.b16 %v612, %v608
  %v1097 = vpack.c.b16 %v613, %v609
  %v1098 = vpack.c.b16 %v618, %v614
  %v1099 = vpack.c.b16 %v619, %v615
  %v1100 = vpack.c.b16 %v620, %v616
  %v1101 = vpack.c.b16 %v621, %v617
  %v1102 = vpack.c.b16 %v626, %v622
  %v1103 = vpack.c.b16 %v627, %v623
  %v1104 = vpack.c.b16 %v628, %v624
  %v1105 = vpack.c.b16 %v629, %v625
  %v1106 = vpack.c.b16 %v634, %v630
  %v1107 = vpack.c.b16 %v635, %v631
  %v1108 = vpack.c.b16 %v636, %v632
  %v1109 = vpack.c.b16 %v637, %v633
  %v1110 = vpack.c.b16 %v642, %v638
  %v1111 = vpack.c.b16 %v643, %v639
  %v1112 = vpack.c.b16 %v644, %v640
  %v1113 = vpack.c.b16 %v645, %v641
  %v1114 = vpack.c.b16 %v650, %v646
  %v1115 = vpack.c.b16 %v651, %v647
  %v1116 = vpack.c.b16 %v652, %v648
  %v1117 = vpack.c.b16 %v653, %v649
  %v1118 = vpack.c.b16 %v658, %v654
  %v1119 = vpack.c.b16 %v659, %v655
  %v1120 = vpack.c.b16 %v660, %v656
  %v1121 = vpack.c.b16 %v661, %v657
  %v1122 = vpack.c.b16 %v666, %v662
  %v1123 = vpack.c.b16 %v667, %v663
  %v1124 = vpack.c.b16 %v668, %v664
  %v1125 = vpack.c.b16 %v669, %v665
  %v1126 = vpack.c.b16 %v674, %v670
  %v1127 = vpack.c.b16 %v675, %v671
  %v1128 = vpack.c.b16 %v676, %v672
  %v1129 = vpack.c.b16 %v677, %v673
  %v1130 = vpack.c.b16 %v682, %v678
  %v1131 = vpack.c.b16 %v683, %v679
  %v1132 = vpack.c.b16 %v684, %v680
  %v1133 = vpack.c.b16 %v685, %v681
  %v1134 = vpack.c.b16 %v690, %v686
  %v1135 = vpack.c.b16 %v691, %v687
  %v1136 = vpack.c.b16 %v692, %v688
  %v1137 = vpack.c.b16 %v693, %v689
  %v1138 = vpack.c.b16 %v698, %v694
  %v1139 = vpack.c.b16 %v699, %v695
  %v1140 = vpack.c.b16 %v700, %v696
  %v1141 = vpack.c.b16 %v701, %v697
  %v1142 = vpack.c.b16 %v706, %v702
  %v1143 = vpack.c.b16 %v707, %v703
  %v1144 = vpack.c.b16 %v708, %v704
  %v1145 = vpack.c.b16 %v709, %v705
  %v1146 = vpack.c.b16 %v714, %v710
  %v1147 = vpack.c.b16 %v715, %v711
  %v1148 = vpack.c.b16 %v716, %v712
  %v1149 = vpack.c.b16 %v717, %v713
  %v1150 = vpack.c.b16 %v722, %v718
  %v1151 = vpack.c.b16 %v723, %v719
  %v1152 = vpack.c.b16 %v724, %v720
  %v1153 = vpack.c.b16 %v725, %v721
  %v1154 = vpack.c.b16 %v730, %v726
  %v1155 = vpack.c.b16 %v731, %v727
  %v1156 = vpack.c.b16 %v732, %v728
  %v1157 = vpack.c.b16 %v733, %v729
  %v1158 = vpack.c.b16 %v738, %v734
  %v1159 = vpack.c.b16 %v739, %v735
  %v1160 = vpack.c.b16 %v740, %v736
  %v1161 = vpack.c.b16 %v741, %v737
  %v1162 = vpack.c.b16 %v746, %v742
  %v1163 = vpack.c.b16 %v747, %v743
  %v1164 = vpack.c.b16 %v748, %v744
  %v1165 = vpack.c.b16 %v749, %v745
  %v1166 = vpack.c.b16 %v754, %v750
  %v1167 = vpack.c.b16 %v755, %v751
  %v1168 = vpack.c.b16 %v756, %v752
  %v1169 = vpack.c.b16 %v757, %v753
  %v1170 = vpack.c.b16 %v762, %v758
  %v1171 = vpack.c.b16 %v763, %v759
  %v1172 = vpack.c.b16 %v764, %v760
  %v1173 = vpack.c.b16 %v765, %v761
  %v1174 = vpack.c.b16 %v770, %v766
  %v1175 = vpack.c.b16 %v771, %v767
  %v1176 = vpack.c.b16 %v772, %v768
  %v1177 = vpack.c.b16 %v773, %v769
  %v1178 = vpack.c.b16 %v778, %v774
  %v1179 = vpack.c.b16 %v779, %v775
  %v1180 = vpack.c.b16 %v780, %v776
  %v1181 = vpack.c.b16 %v781, %v777
  %v1182 = vpack.c.b16 %v786, %v782
  %v1183 = vpack.c.b16 %v787, %v783
  %v1184 = vpack.c.b16 %v788, %v784
  %v1185 = vpack.c.b16 %v789, %v785
  %v1186 = vpack.c.b16 %v794, %v790
  %v1187 = vpack.c.b16 %v795, %v791
  %v1188 = vpack.c.b16 %v796, %v792
  %v1189 = vpack.c.b16 %v797, %v793
  %v1190 = vpack.c.b16 %v802, %v798
  %v1191 = vpack.c.b16 %v803, %v799
  %v1192 = vpack.c.b16 %v804, %v800
  %v1193 = vpack.c.b16 %v805, %v801
  %v1194 = vpack.c.b16 %v810, %v806
  %v1195 = vpack.c.b16 %v811, %v807
  %v1196 = vpack.c.b16 %v812, %v808
  %v1197 = vpack.c.b16 %v813, %v809
  %v1198 = vpack.c.b16 %v818, %v814
  %v1199 = vpack.c.b16 %v819, %v815
  %v1200 = vpack.c.b16 %v820, %v816
  %v1201 = vpack.c.b16 %v821, %v817
  %v1202 = vpack.c.b16 %v826, %v822
  %v1203 = vpack.c.b16 %v827, %v823
  %v1204 = vpack.c.b16 %v828, %v824
  %v1205 = vpack.c.b16 %v829, %v825
  %v1206 = vpack.c.b16 %v834, %v830
  %v1207 = vpack.c.b16 %v835, %v831
  %v1208 = vpack.c.b16 %v836, %v832
  %v1209 = vpack.c.b16 %v837, %v833
  %v1210 = vpack.c.b16 %v842, %v838
  %v1211 = vpack.c.b16 %v843, %v839
  %v1212 = vpack.c.b16 %v844, %v840
  %v1213 = vpack.c.b16 %v845, %v841
  %v1214 = vpack.c.b16 %v850, %v846
  %v1215 = vpack.c.b16 %v851, %v847
  %v1216 = vpack.c.b16 %v852, %v848
  %v1217 = vpack.c.b16 %v853, %v849
  %v1218 = vpack.c.b16 %v858, %v854
  %v1219 = vpack.c.b16 %v859, %v855
  %v1220 = vpack.c.b16 %v860, %v856
  %v1221 = vpack.c.b16 %v861, %v857
  %v1222 = vpack.c.b16 %v866, %v862
  %v1223 = vpack.c.b16 %v867, %v863
  %v1224 = vpack.c.b16 %v868, %v864
  %v1225 = vpack.c.b16 %v869, %v865
  %v1226 = vpack.c.b16 %v874, %v870
  %v1227 = vpack.c.b16 %v875, %v871
  %v1228 = vpack.c.b16 %v876, %v872
  %v1229 = vpack.c.b16 %v877, %v873
  %v1230 = vpack.c.b16 %v882, %v878
  %v1231 = vpack.c.b16 %v883, %v879
  %v1232 = vpack.c.b16 %v884, %v880
  %v1233 = vpack.c.b16 %v885, %v881
  %v1234 = vpack.c.b16 %v890, %v886
  %v1235 = vpack.c.b16 %v891, %v887
  %v1236 = vpack.c.b16 %v892, %v888
  %v1237 = vpack.c.b16 %v893, %v889
  %v1238 = vpack.c.b16 %v898, %v894
  %v1239 = vpack.c.b16 %v899, %v895
  %v1240 = vpack.c.b16 %v900, %v896
  %v1241 = vpack.c.b16 %v901, %v897
  %v1242 = vpack.c.b16 %v906, %v902
  %v1243 = vpack.c.b16 %v907, %v903
  %v1244 = vpack.c.b16 %v908, %v904
  %v1245 = vpack.c.b16 %v909, %v905
  %v1246 = vpack.c.b16 %v914, %v910
  %v1247 = vpack.c.b16 %v915, %v911
  %v1248 = vpack.c.b16 %v916, %v912
  %v1249 = vpack.c.b16 %v917, %v913
  %v1250 = vpack.c.b16 %v922, %v918
  %v1251 = vpack.c.b16 %v923, %v919
  %v1252 = vpack.c.b16 %v924, %v920
  %v1253 = vpack.c.b16 %v925, %v921
  %v1254 = vpack.c.b16 %v930, %v926
  %v1255 = vpack.c.b16 %v931, %v927
  %v1256 = vpack.c.b16 %v932, %v928
  %v1257 = vpack.c.b16 %v933, %v929
  %v1258 = vpack.c.b16 %v938, %v934
  %v1259 = vpack.c.b16 %v939, %v935
  %v1260 = vpack.c.b16 %v940, %v936
  %v1261 = vpack.c.b16 %v941, %v937
  %v1262 = vpack.c.b16 %v946, %v942
  %v1263 = vpack.c.b16 %v947, %v943
  %v1264 = vpack.c.b16 %v948, %v944
  %v1265 = vpack.c.b16 %v949, %v945
  %v1266 = vpack.c.b16 %v954, %v950
  %v1267 = vpack.c.b16 %v955, %v951
  %v1268 = vpack.c.b16 %v956, %v952
  %v1269 = vpack.c.b16 %v957, %v953
  %v1270 = vpack.c.b16 %v962, %v958
  %v1271 = vpack.c.b16 %v963, %v959
  %v1272 = vpack.c.b16 %v964, %v960
  %v1273 = vpack.c.b16 %v965, %v961
  %v1274 = vpack.c.b16 %v970, %v966
  %v1275 = vpack.c.b16 %v971, %v967
  %v1276 = vpack.c.b16 %v972, %v968
  %v1277 = vpack.c.b16 %v973, %v969
  %v1278 = vpack.c.b16 %v978, %v974
  %v1279 = vpack.c.b16 %v979, %v975
  %v1280 = vpack.c.b16 %v980, %v976
  %v1281 = vpack.c.b16 %v981, %v977
  %v1282 = vpack.c.b16 %v986, %v982
  %v1283 = vpack.c.b16 %v987, %v983
  %v1284 = vpack.c.b16 %v988, %v984
  %v1285 = vpack.c.b16 %v989, %v985
  %v1286 = vpack.c.b16 %v994, %v990
  %v1287 = vpack.c.b16 %v995, %v991
  %v1288 = vpack.c.b16 %v996, %v992
  %v1289 = vpack.c.b16 %v997, %v993
  %v1290 = vpack.c.b16 %v1002, %v998
  %v1291 = vpack.c.b16 %v1003, %v999
  %v1292 = vpack.c.b16 %v1004, %v1000
  %v1293 = vpack.c.b16 %v1005, %v1001
  %v1294 = vpack.c.b16 %v1010, %v1006
  %v1295 = vpack.c.b16 %v1011, %v1007
  %v1296 = vpack.c.b16 %v1012, %v1008
  %v1297 = vpack.c.b16 %v1013, %v1009
  %v1298 = vpack.c.b16 %v1018, %v1014
  %v1299 = vpack.c.b16 %v1019, %v1015
  %v1300 = vpack.c.b16 %v1020, %v1016
  %v1301 = vpack.c.b16 %v1021, %v1017
  %v1302 = vpack.c.b16 %v1026, %v1022
  %v1303 = vpack.c.b16 %v1027, %v1023
  %v1304 = vpack.c.b16 %v1028, %v1024
  %v1305 = vpack.c.b16 %v1029, %v1025
  %v1306 = vpack.c.b16 %v1034, %v1030
  %v1307 = vpack.c.b16 %v1035, %v1031
  %v1308 = vpack.c.b16 %v1036, %v1032
  %v1309 = vpack.c.b16 %v1037, %v1033
  %v1310 = vpack.c.b16 %v1042, %v1038
  %v1311 = vpack.c.b16 %v1043, %v1039
  %v1312 = vpack.c.b16 %v1044, %v1040
  %v1313 = vpack.c.b16 %v1045, %v1041
  %v1314 = vpack.c.b16 %v1050, %v1046
  %v1315 = vpack.c.b16 %v1051, %v1047
  %v1316 = vpack.c.b16 %v1052, %v1048
  %v1317 = vpack.c.b16 %v1053, %v1049
  %v1318 = vpack.c.b16 %v1058, %v1054
  %v1319 = vpack.c.b16 %v1059, %v1055
  %v1320 = vpack.c.b16 %v1060, %v1056
  %v1321 = vpack.c.b16 %v1061, %v1057
  %v1322 = vpack.c.b16 %v1066, %v1062
  %v1323 = vpack.c.b16 %v1067, %v1063
  %v1324 = vpack.c.b16 %v1068, %v1064
  %v1325 = vpack.c.b16 %v1069, %v1065
  %1582 = vmatpush.bf16.msra.mxu0 %v1098
  %1583 = vmatpush.bf16.msra.mxu0 %v1094
  %1584 = vmatpush.bf16.msra.mxu0 %v1090
  %1585 = vmatpush.bf16.msra.mxu0 %v1086
  %1586 = vmatpush.bf16.msra.mxu0 %v1082
  %1587 = vmatpush.bf16.msra.mxu0 %v1078
  %1588 = vmatpush.bf16.msra.mxu0 %v1074
  %1589 = vmatpush.bf16.msra.mxu0 %v1070
  %1590 = vmatmul.bf16.gmra.mxu0 %v28
  %v1591 = vpop.f32.mrf.mxu0
  %v1592 = vadd.f32 %v294, %v1591
  %v1593 = vpop.f32.mrf.mxu0
  %1594 = vdwg.mxu0
  %1595 = vmatpush.bf16.msra.mxu0 %v1130
  %1596 = vmatpush.bf16.msra.mxu0 %v1126
  %1597 = vmatpush.bf16.msra.mxu0 %v1122
  %1598 = vmatpush.bf16.msra.mxu0 %v1118
  %1599 = vmatpush.bf16.msra.mxu0 %v1114
  %1600 = vmatpush.bf16.msra.mxu0 %v1110
  %1601 = vmatpush.bf16.msra.mxu0 %v1106
  %1602 = vmatpush.bf16.msra.mxu0 %v1102
  %1603 = vmatmul.bf16.gmra.mxu0 %v29
  %v1604 = vpop.f32.mrf.mxu0
  %v1605 = vadd.f32 %v1592, %v1604
  %v1606 = vpop.f32.mrf.mxu0
  %1607 = vdwg.mxu0
  %1608 = vmatpush.bf16.msra.mxu0 %v1162
  %1609 = vmatpush.bf16.msra.mxu0 %v1158
  %1610 = vmatpush.bf16.msra.mxu0 %v1154
  %1611 = vmatpush.bf16.msra.mxu0 %v1150
  %1612 = vmatpush.bf16.msra.mxu0 %v1146
  %1613 = vmatpush.bf16.msra.mxu0 %v1142
  %1614 = vmatpush.bf16.msra.mxu0 %v1138
  %1615 = vmatpush.bf16.msra.mxu0 %v1134
  %1616 = vmatmul.bf16.gmra.mxu0 %v30
  %v1617 = vpop.f32.mrf.mxu0
  %v1618 = vadd.f32 %v1605, %v1617
  %v1619 = vpop.f32.mrf.mxu0
  %1620 = vdwg.mxu0
  %1621 = vmatpush.bf16.msra.mxu0 %v1194
  %1622 = vmatpush.bf16.msra.mxu0 %v1190
  %1623 = vmatpush.bf16.msra.mxu0 %v1186
  %1624 = vmatpush.bf16.msra.mxu0 %v1182
  %1625 = vmatpush.bf16.msra.mxu0 %v1178
  %1626 = vmatpush.bf16.msra.mxu0 %v1174
  %1627 = vmatpush.bf16.msra.mxu0 %v1170
  %1628 = vmatpush.bf16.msra.mxu0 %v1166
  %1629 = vmatmul.bf16.gmra.mxu0 %v31
  %v1630 = vpop.f32.mrf.mxu0
  %v1631 = vadd.f32 %v1618, %v1630
  %v1632 = vpop.f32.mrf.mxu0
  %1633 = vdwg.mxu0
  %1634 = vmatpush.bf16.msra.mxu0 %v1226
  %1635 = vmatpush.bf16.msra.mxu0 %v1222
  %1636 = vmatpush.bf16.msra.mxu0 %v1218
  %1637 = vmatpush.bf16.msra.mxu0 %v1214
  %1638 = vmatpush.bf16.msra.mxu0 %v1210
  %1639 = vmatpush.bf16.msra.mxu0 %v1206
  %1640 = vmatpush.bf16.msra.mxu0 %v1202
  %1641 = vmatpush.bf16.msra.mxu0 %v1198
  %1642 = vmatmul.bf16.gmra.mxu0 %v32
  %v1643 = vpop.f32.mrf.mxu0
  %v1644 = vadd.f32 %v1631, %v1643
  %v1645 = vpop.f32.mrf.mxu0
  %1646 = vdwg.mxu0
  %1647 = vmatpush.bf16.msra.mxu0 %v1258
  %1648 = vmatpush.bf16.msra.mxu0 %v1254
  %1649 = vmatpush.bf16.msra.mxu0 %v1250
  %1650 = vmatpush.bf16.msra.mxu0 %v1246
  %1651 = vmatpush.bf16.msra.mxu0 %v1242
  %1652 = vmatpush.bf16.msra.mxu0 %v1238
  %1653 = vmatpush.bf16.msra.mxu0 %v1234
  %1654 = vmatpush.bf16.msra.mxu0 %v1230
  %1655 = vmatmul.bf16.gmra.mxu0 %v33
  %v1656 = vpop.f32.mrf.mxu0
  %v1657 = vadd.f32 %v1644, %v1656
  %v1658 = vpop.f32.mrf.mxu0
  %1659 = vdwg.mxu0
  %1660 = vmatpush.bf16.msra.mxu0 %v1290
  %1661 = vmatpush.bf16.msra.mxu0 %v1286
  %1662 = vmatpush.bf16.msra.mxu0 %v1282
  %1663 = vmatpush.bf16.msra.mxu0 %v1278
  %1664 = vmatpush.bf16.msra.mxu0 %v1274
  %1665 = vmatpush.bf16.msra.mxu0 %v1270
  %1666 = vmatpush.bf16.msra.mxu0 %v1266
  %1667 = vmatpush.bf16.msra.mxu0 %v1262
  %1668 = vmatmul.bf16.gmra.mxu0 %v34
  %v1669 = vpop.f32.mrf.mxu0
  %v1670 = vadd.f32 %v1657, %v1669
  %v1671 = vpop.f32.mrf.mxu0
  %1672 = vdwg.mxu0
  %1673 = vmatpush.bf16.msra.mxu0 %v1322
  %1674 = vmatpush.bf16.msra.mxu0 %v1318
  %1675 = vmatpush.bf16.msra.mxu0 %v1314
  %1676 = vmatpush.bf16.msra.mxu0 %v1310
  %1677 = vmatpush.bf16.msra.mxu0 %v1306
  %1678 = vmatpush.bf16.msra.mxu0 %v1302
  %1679 = vmatpush.bf16.msra.mxu0 %v1298
  %1680 = vmatpush.bf16.msra.mxu0 %v1294
  %1681 = vmatmul.bf16.gmra.mxu0 %v35
  %v1682 = vpop.f32.mrf.mxu0
  %v1683 = vadd.f32 %v1670, %v1682
  %v1684 = vpop.f32.mrf.mxu0
  %1685 = vdwg.mxu0
  %1686 = vmatpush.bf16.msra.mxu0 %v1099
  %1687 = vmatpush.bf16.msra.mxu0 %v1095
  %1688 = vmatpush.bf16.msra.mxu0 %v1091
  %1689 = vmatpush.bf16.msra.mxu0 %v1087
  %1690 = vmatpush.bf16.msra.mxu0 %v1083
  %1691 = vmatpush.bf16.msra.mxu0 %v1079
  %1692 = vmatpush.bf16.msra.mxu0 %v1075
  %1693 = vmatpush.bf16.msra.mxu0 %v1071
  %1694 = vmatmul.bf16.gmra.mxu0 %v28
  %v1695 = vpop.f32.mrf.mxu0
  %v1696 = vadd.f32 %v295, %v1695
  %v1697 = vpop.f32.mrf.mxu0
  %1698 = vdwg.mxu0
  %1699 = vmatpush.bf16.msra.mxu0 %v1131
  %1700 = vmatpush.bf16.msra.mxu0 %v1127
  %1701 = vmatpush.bf16.msra.mxu0 %v1123
  %1702 = vmatpush.bf16.msra.mxu0 %v1119
  %1703 = vmatpush.bf16.msra.mxu0 %v1115
  %1704 = vmatpush.bf16.msra.mxu0 %v1111
  %1705 = vmatpush.bf16.msra.mxu0 %v1107
  %1706 = vmatpush.bf16.msra.mxu0 %v1103
  %1707 = vmatmul.bf16.gmra.mxu0 %v29
  %v1708 = vpop.f32.mrf.mxu0
  %v1709 = vadd.f32 %v1696, %v1708
  %v1710 = vpop.f32.mrf.mxu0
  %1711 = vdwg.mxu0
  %1712 = vmatpush.bf16.msra.mxu0 %v1163
  %1713 = vmatpush.bf16.msra.mxu0 %v1159
  %1714 = vmatpush.bf16.msra.mxu0 %v1155
  %1715 = vmatpush.bf16.msra.mxu0 %v1151
  %1716 = vmatpush.bf16.msra.mxu0 %v1147
  %1717 = vmatpush.bf16.msra.mxu0 %v1143
  %1718 = vmatpush.bf16.msra.mxu0 %v1139
  %1719 = vmatpush.bf16.msra.mxu0 %v1135
  %1720 = vmatmul.bf16.gmra.mxu0 %v30
  %v1721 = vpop.f32.mrf.mxu0
  %v1722 = vadd.f32 %v1709, %v1721
  %v1723 = vpop.f32.mrf.mxu0
  %1724 = vdwg.mxu0
  %1725 = vmatpush.bf16.msra.mxu0 %v1195
  %1726 = vmatpush.bf16.msra.mxu0 %v1191
  %1727 = vmatpush.bf16.msra.mxu0 %v1187
  %1728 = vmatpush.bf16.msra.mxu0 %v1183
  %1729 = vmatpush.bf16.msra.mxu0 %v1179
  %1730 = vmatpush.bf16.msra.mxu0 %v1175
  %1731 = vmatpush.bf16.msra.mxu0 %v1171
  %1732 = vmatpush.bf16.msra.mxu0 %v1167
  %1733 = vmatmul.bf16.gmra.mxu0 %v31
  %v1734 = vpop.f32.mrf.mxu0
  %v1735 = vadd.f32 %v1722, %v1734
  %v1736 = vpop.f32.mrf.mxu0
  %1737 = vdwg.mxu0
  %1738 = vmatpush.bf16.msra.mxu0 %v1227
  %1739 = vmatpush.bf16.msra.mxu0 %v1223
  %1740 = vmatpush.bf16.msra.mxu0 %v1219
  %1741 = vmatpush.bf16.msra.mxu0 %v1215
  %1742 = vmatpush.bf16.msra.mxu0 %v1211
  %1743 = vmatpush.bf16.msra.mxu0 %v1207
  %1744 = vmatpush.bf16.msra.mxu0 %v1203
  %1745 = vmatpush.bf16.msra.mxu0 %v1199
  %1746 = vmatmul.bf16.gmra.mxu0 %v32
  %v1747 = vpop.f32.mrf.mxu0
  %v1748 = vadd.f32 %v1735, %v1747
  %v1749 = vpop.f32.mrf.mxu0
  %1750 = vdwg.mxu0
  %1751 = vmatpush.bf16.msra.mxu0 %v1259
  %1752 = vmatpush.bf16.msra.mxu0 %v1255
  %1753 = vmatpush.bf16.msra.mxu0 %v1251
  %1754 = vmatpush.bf16.msra.mxu0 %v1247
  %1755 = vmatpush.bf16.msra.mxu0 %v1243
  %1756 = vmatpush.bf16.msra.mxu0 %v1239
  %1757 = vmatpush.bf16.msra.mxu0 %v1235
  %1758 = vmatpush.bf16.msra.mxu0 %v1231
  %1759 = vmatmul.bf16.gmra.mxu0 %v33
  %v1760 = vpop.f32.mrf.mxu0
  %v1761 = vadd.f32 %v1748, %v1760
  %v1762 = vpop.f32.mrf.mxu0
  %1763 = vdwg.mxu0
  %1764 = vmatpush.bf16.msra.mxu0 %v1291
  %1765 = vmatpush.bf16.msra.mxu0 %v1287
  %1766 = vmatpush.bf16.msra.mxu0 %v1283
  %1767 = vmatpush.bf16.msra.mxu0 %v1279
  %1768 = vmatpush.bf16.msra.mxu0 %v1275
  %1769 = vmatpush.bf16.msra.mxu0 %v1271
  %1770 = vmatpush.bf16.msra.mxu0 %v1267
  %1771 = vmatpush.bf16.msra.mxu0 %v1263
  %1772 = vmatmul.bf16.gmra.mxu0 %v34
  %v1773 = vpop.f32.mrf.mxu0
  %v1774 = vadd.f32 %v1761, %v1773
  %v1775 = vpop.f32.mrf.mxu0
  %1776 = vdwg.mxu0
  %1777 = vmatpush.bf16.msra.mxu0 %v1323
  %1778 = vmatpush.bf16.msra.mxu0 %v1319
  %1779 = vmatpush.bf16.msra.mxu0 %v1315
  %1780 = vmatpush.bf16.msra.mxu0 %v1311
  %1781 = vmatpush.bf16.msra.mxu0 %v1307
  %1782 = vmatpush.bf16.msra.mxu0 %v1303
  %1783 = vmatpush.bf16.msra.mxu0 %v1299
  %1784 = vmatpush.bf16.msra.mxu0 %v1295
  %1785 = vmatmul.bf16.gmra.mxu0 %v35
  %v1786 = vpop.f32.mrf.mxu0
  %v1787 = vadd.f32 %v1774, %v1786
  %v1788 = vpop.f32.mrf.mxu0
  %1789 = vdwg.mxu0
  %1790 = vmatpush.bf16.msra.mxu0 %v1100
  %1791 = vmatpush.bf16.msra.mxu0 %v1096
  %1792 = vmatpush.bf16.msra.mxu0 %v1092
  %1793 = vmatpush.bf16.msra.mxu0 %v1088
  %1794 = vmatpush.bf16.msra.mxu0 %v1084
  %1795 = vmatpush.bf16.msra.mxu0 %v1080
  %1796 = vmatpush.bf16.msra.mxu0 %v1076
  %1797 = vmatpush.bf16.msra.mxu0 %v1072
  %1798 = vmatmul.bf16.gmra.mxu0 %v28
  %v1799 = vpop.f32.mrf.mxu0
  %v1800 = vadd.f32 %v296, %v1799
  %v1801 = vpop.f32.mrf.mxu0
  %1802 = vdwg.mxu0
  %1803 = vmatpush.bf16.msra.mxu0 %v1132
  %1804 = vmatpush.bf16.msra.mxu0 %v1128
  %1805 = vmatpush.bf16.msra.mxu0 %v1124
  %1806 = vmatpush.bf16.msra.mxu0 %v1120
  %1807 = vmatpush.bf16.msra.mxu0 %v1116
  %1808 = vmatpush.bf16.msra.mxu0 %v1112
  %1809 = vmatpush.bf16.msra.mxu0 %v1108
  %1810 = vmatpush.bf16.msra.mxu0 %v1104
  %1811 = vmatmul.bf16.gmra.mxu0 %v29
  %v1812 = vpop.f32.mrf.mxu0
  %v1813 = vadd.f32 %v1800, %v1812
  %v1814 = vpop.f32.mrf.mxu0
  %1815 = vdwg.mxu0
  %1816 = vmatpush.bf16.msra.mxu0 %v1164
  %1817 = vmatpush.bf16.msra.mxu0 %v1160
  %1818 = vmatpush.bf16.msra.mxu0 %v1156
  %1819 = vmatpush.bf16.msra.mxu0 %v1152
  %1820 = vmatpush.bf16.msra.mxu0 %v1148
  %1821 = vmatpush.bf16.msra.mxu0 %v1144
  %1822 = vmatpush.bf16.msra.mxu0 %v1140
  %1823 = vmatpush.bf16.msra.mxu0 %v1136
  %1824 = vmatmul.bf16.gmra.mxu0 %v30
  %v1825 = vpop.f32.mrf.mxu0
  %v1826 = vadd.f32 %v1813, %v1825
  %v1827 = vpop.f32.mrf.mxu0
  %1828 = vdwg.mxu0
  %1829 = vmatpush.bf16.msra.mxu0 %v1196
  %1830 = vmatpush.bf16.msra.mxu0 %v1192
  %1831 = vmatpush.bf16.msra.mxu0 %v1188
  %1832 = vmatpush.bf16.msra.mxu0 %v1184
  %1833 = vmatpush.bf16.msra.mxu0 %v1180
  %1834 = vmatpush.bf16.msra.mxu0 %v1176
  %1835 = vmatpush.bf16.msra.mxu0 %v1172
  %1836 = vmatpush.bf16.msra.mxu0 %v1168
  %1837 = vmatmul.bf16.gmra.mxu0 %v31
  %v1838 = vpop.f32.mrf.mxu0
  %v1839 = vadd.f32 %v1826, %v1838
  %v1840 = vpop.f32.mrf.mxu0
  %1841 = vdwg.mxu0
  %1842 = vmatpush.bf16.msra.mxu0 %v1228
  %1843 = vmatpush.bf16.msra.mxu0 %v1224
  %1844 = vmatpush.bf16.msra.mxu0 %v1220
  %1845 = vmatpush.bf16.msra.mxu0 %v1216
  %1846 = vmatpush.bf16.msra.mxu0 %v1212
  %1847 = vmatpush.bf16.msra.mxu0 %v1208
  %1848 = vmatpush.bf16.msra.mxu0 %v1204
  %1849 = vmatpush.bf16.msra.mxu0 %v1200
  %1850 = vmatmul.bf16.gmra.mxu0 %v32
  %v1851 = vpop.f32.mrf.mxu0
  %v1852 = vadd.f32 %v1839, %v1851
  %v1853 = vpop.f32.mrf.mxu0
  %1854 = vdwg.mxu0
  %1855 = vmatpush.bf16.msra.mxu0 %v1260
  %1856 = vmatpush.bf16.msra.mxu0 %v1256
  %1857 = vmatpush.bf16.msra.mxu0 %v1252
  %1858 = vmatpush.bf16.msra.mxu0 %v1248
  %1859 = vmatpush.bf16.msra.mxu0 %v1244
  %1860 = vmatpush.bf16.msra.mxu0 %v1240
  %1861 = vmatpush.bf16.msra.mxu0 %v1236
  %1862 = vmatpush.bf16.msra.mxu0 %v1232
  %1863 = vmatmul.bf16.gmra.mxu0 %v33
  %v1864 = vpop.f32.mrf.mxu0
  %v1865 = vadd.f32 %v1852, %v1864
  %v1866 = vpop.f32.mrf.mxu0
  %1867 = vdwg.mxu0
  %1868 = vmatpush.bf16.msra.mxu0 %v1292
  %1869 = vmatpush.bf16.msra.mxu0 %v1288
  %1870 = vmatpush.bf16.msra.mxu0 %v1284
  %1871 = vmatpush.bf16.msra.mxu0 %v1280
  %1872 = vmatpush.bf16.msra.mxu0 %v1276
  %1873 = vmatpush.bf16.msra.mxu0 %v1272
  %1874 = vmatpush.bf16.msra.mxu0 %v1268
  %1875 = vmatpush.bf16.msra.mxu0 %v1264
  %1876 = vmatmul.bf16.gmra.mxu0 %v34
  %v1877 = vpop.f32.mrf.mxu0
  %v1878 = vadd.f32 %v1865, %v1877
  %v1879 = vpop.f32.mrf.mxu0
  %1880 = vdwg.mxu0
  %1881 = vmatpush.bf16.msra.mxu0 %v1324
  %1882 = vmatpush.bf16.msra.mxu0 %v1320
  %1883 = vmatpush.bf16.msra.mxu0 %v1316
  %1884 = vmatpush.bf16.msra.mxu0 %v1312
  %1885 = vmatpush.bf16.msra.mxu0 %v1308
  %1886 = vmatpush.bf16.msra.mxu0 %v1304
  %1887 = vmatpush.bf16.msra.mxu0 %v1300
  %1888 = vmatpush.bf16.msra.mxu0 %v1296
  %1889 = vmatmul.bf16.gmra.mxu0 %v35
  %v1890 = vpop.f32.mrf.mxu0
  %v1891 = vadd.f32 %v1878, %v1890
  %v1892 = vpop.f32.mrf.mxu0
  %1893 = vdwg.mxu0
  %1894 = vmatpush.bf16.msra.mxu0 %v1101
  %1895 = vmatpush.bf16.msra.mxu0 %v1097
  %1896 = vmatpush.bf16.msra.mxu0 %v1093
  %1897 = vmatpush.bf16.msra.mxu0 %v1089
  %1898 = vmatpush.bf16.msra.mxu0 %v1085
  %1899 = vmatpush.bf16.msra.mxu0 %v1081
  %1900 = vmatpush.bf16.msra.mxu0 %v1077
  %1901 = vmatpush.bf16.msra.mxu0 %v1073
  %1902 = vmatmul.bf16.gmra.mxu0 %v28
  %v1903 = vpop.f32.mrf.mxu0
  %v1904 = vadd.f32 %v297, %v1903
  %v1905 = vpop.f32.mrf.mxu0
  %1906 = vdwg.mxu0
  %1907 = vmatpush.bf16.msra.mxu0 %v1133
  %1908 = vmatpush.bf16.msra.mxu0 %v1129
  %1909 = vmatpush.bf16.msra.mxu0 %v1125
  %1910 = vmatpush.bf16.msra.mxu0 %v1121
  %1911 = vmatpush.bf16.msra.mxu0 %v1117
  %1912 = vmatpush.bf16.msra.mxu0 %v1113
  %1913 = vmatpush.bf16.msra.mxu0 %v1109
  %1914 = vmatpush.bf16.msra.mxu0 %v1105
  %1915 = vmatmul.bf16.gmra.mxu0 %v29
  %v1916 = vpop.f32.mrf.mxu0
  %v1917 = vadd.f32 %v1904, %v1916
  %v1918 = vpop.f32.mrf.mxu0
  %1919 = vdwg.mxu0
  %1920 = vmatpush.bf16.msra.mxu0 %v1165
  %1921 = vmatpush.bf16.msra.mxu0 %v1161
  %1922 = vmatpush.bf16.msra.mxu0 %v1157
  %1923 = vmatpush.bf16.msra.mxu0 %v1153
  %1924 = vmatpush.bf16.msra.mxu0 %v1149
  %1925 = vmatpush.bf16.msra.mxu0 %v1145
  %1926 = vmatpush.bf16.msra.mxu0 %v1141
  %1927 = vmatpush.bf16.msra.mxu0 %v1137
  %1928 = vmatmul.bf16.gmra.mxu0 %v30
  %v1929 = vpop.f32.mrf.mxu0
  %v1930 = vadd.f32 %v1917, %v1929
  %v1931 = vpop.f32.mrf.mxu0
  %1932 = vdwg.mxu0
  %1933 = vmatpush.bf16.msra.mxu0 %v1197
  %1934 = vmatpush.bf16.msra.mxu0 %v1193
  %1935 = vmatpush.bf16.msra.mxu0 %v1189
  %1936 = vmatpush.bf16.msra.mxu0 %v1185
  %1937 = vmatpush.bf16.msra.mxu0 %v1181
  %1938 = vmatpush.bf16.msra.mxu0 %v1177
  %1939 = vmatpush.bf16.msra.mxu0 %v1173
  %1940 = vmatpush.bf16.msra.mxu0 %v1169
  %1941 = vmatmul.bf16.gmra.mxu0 %v31
  %v1942 = vpop.f32.mrf.mxu0
  %v1943 = vadd.f32 %v1930, %v1942
  %v1944 = vpop.f32.mrf.mxu0
  %1945 = vdwg.mxu0
  %1946 = vmatpush.bf16.msra.mxu0 %v1229
  %1947 = vmatpush.bf16.msra.mxu0 %v1225
  %1948 = vmatpush.bf16.msra.mxu0 %v1221
  %1949 = vmatpush.bf16.msra.mxu0 %v1217
  %1950 = vmatpush.bf16.msra.mxu0 %v1213
  %1951 = vmatpush.bf16.msra.mxu0 %v1209
  %1952 = vmatpush.bf16.msra.mxu0 %v1205
  %1953 = vmatpush.bf16.msra.mxu0 %v1201
  %1954 = vmatmul.bf16.gmra.mxu0 %v32
  %v1955 = vpop.f32.mrf.mxu0
  %v1956 = vadd.f32 %v1943, %v1955
  %v1957 = vpop.f32.mrf.mxu0
  %1958 = vdwg.mxu0
  %1959 = vmatpush.bf16.msra.mxu0 %v1261
  %1960 = vmatpush.bf16.msra.mxu0 %v1257
  %1961 = vmatpush.bf16.msra.mxu0 %v1253
  %1962 = vmatpush.bf16.msra.mxu0 %v1249
  %1963 = vmatpush.bf16.msra.mxu0 %v1245
  %1964 = vmatpush.bf16.msra.mxu0 %v1241
  %1965 = vmatpush.bf16.msra.mxu0 %v1237
  %1966 = vmatpush.bf16.msra.mxu0 %v1233
  %1967 = vmatmul.bf16.gmra.mxu0 %v33
  %v1968 = vpop.f32.mrf.mxu0
  %v1969 = vadd.f32 %v1956, %v1968
  %v1970 = vpop.f32.mrf.mxu0
  %1971 = vdwg.mxu0
  %1972 = vmatpush.bf16.msra.mxu0 %v1293
  %1973 = vmatpush.bf16.msra.mxu0 %v1289
  %1974 = vmatpush.bf16.msra.mxu0 %v1285
  %1975 = vmatpush.bf16.msra.mxu0 %v1281
  %1976 = vmatpush.bf16.msra.mxu0 %v1277
  %1977 = vmatpush.bf16.msra.mxu0 %v1273
  %1978 = vmatpush.bf16.msra.mxu0 %v1269
  %1979 = vmatpush.bf16.msra.mxu0 %v1265
  %1980 = vmatmul.bf16.gmra.mxu0 %v34
  %v1981 = vpop.f32.mrf.mxu0
  %v1982 = vadd.f32 %v1969, %v1981
  %v1983 = vpop.f32.mrf.mxu0
  %1984 = vdwg.mxu0
  %1985 = vmatpush.bf16.msra.mxu0 %v1325
  %1986 = vmatpush.bf16.msra.mxu0 %v1321
  %1987 = vmatpush.bf16.msra.mxu0 %v1317
  %1988 = vmatpush.bf16.msra.mxu0 %v1313
  %1989 = vmatpush.bf16.msra.mxu0 %v1309
  %1990 = vmatpush.bf16.msra.mxu0 %v1305
  %1991 = vmatpush.bf16.msra.mxu0 %v1301
  %1992 = vmatpush.bf16.msra.mxu0 %v1297
  %1993 = vmatmul.bf16.gmra.mxu0 %v35
  %v1994 = vpop.f32.mrf.mxu0
  %v1995 = vadd.f32 %v1982, %v1994
  %v1996 = vpop.f32.mrf.mxu0
  %1997 = vdwg.mxu0
  %v1998 = vmax.f32 %v1683, 0.0
  %v1999 = vmax.f32 %v1787, 0.0
  %v2000 = vmax.f32 %v1891, 0.0
  %v2001 = vmax.f32 %v1995, 0.0
  %v2002 = vpack.c.bf16 %v1998, %v1998
  %v2003 = vpack.c.bf16 %v1999, %v1999
  %v2004 = vpack.c.bf16 %v2000, %v2000
  %v2005 = vpack.c.bf16 %v2001, %v2001
  %v2006 = vld [vmem:[%s3] sm:$0xf]
  %v2007 = vld [vmem:[%s3 + $0x4] sm:$0xf]
  %v2008 = vld [vmem:[%s3 + $0x8] sm:$0xf]
  %v2009 = vld [vmem:[%s3 + $0xc] sm:$0xf]
  %v2010 = vld [vmem:[%s3 + $0x10] sm:$0xf]
  %v2011 = vld [vmem:[%s3 + $0x14] sm:$0xf]
  %v2012 = vld [vmem:[%s3 + $0x18] sm:$0xf]
  %v2013 = vld [vmem:[%s3 + $0x1c] sm:$0xf]
  %v2014 = vld [vmem:[%s3 + $0x20] sm:$0xf]
  %v2015 = vld [vmem:[%s3 + $0x24] sm:$0xf]
  %v2016 = vld [vmem:[%s3 + $0x28] sm:$0xf]
  %v2017 = vld [vmem:[%s3 + $0x2c] sm:$0xf]
  %v2018 = vld [vmem:[%s3 + $0x30] sm:$0xf]
  %v2019 = vld [vmem:[%s3 + $0x34] sm:$0xf]
  %v2020 = vld [vmem:[%s3 + $0x38] sm:$0xf]
  %v2021 = vld [vmem:[%s3 + $0x3c] sm:$0xf]
  %v2022 = vld [vmem:[%s3 + $0x40] sm:$0xf]
  %v2023 = vld [vmem:[%s3 + $0x44] sm:$0xf]
  %v2024 = vld [vmem:[%s3 + $0x48] sm:$0xf]
  %v2025 = vld [vmem:[%s3 + $0x4c] sm:$0xf]
  %v2026 = vld [vmem:[%s3 + $0x50] sm:$0xf]
  %v2027 = vld [vmem:[%s3 + $0x54] sm:$0xf]
  %v2028 = vld [vmem:[%s3 + $0x58] sm:$0xf]
  %v2029 = vld [vmem:[%s3 + $0x5c] sm:$0xf]
  %v2030 = vld [vmem:[%s3 + $0x60] sm:$0xf]
  %v2031 = vld [vmem:[%s3 + $0x64] sm:$0xf]
  %v2032 = vld [vmem:[%s3 + $0x68] sm:$0xf]
  %v2033 = vld [vmem:[%s3 + $0x6c] sm:$0xf]
  %v2034 = vld [vmem:[%s3 + $0x70] sm:$0xf]
  %v2035 = vld [vmem:[%s3 + $0x74] sm:$0xf]
  %v2036 = vld [vmem:[%s3 + $0x78] sm:$0xf]
  %v2037 = vld [vmem:[%s3 + $0x7c] sm:$0xf]
  %v2038 = vld [vmem:[%s3 + $0x80] sm:$0xf]
  %v2039 = vld [vmem:[%s3 + $0x84] sm:$0xf]
  %v2040 = vld [vmem:[%s3 + $0x88] sm:$0xf]
  %v2041 = vld [vmem:[%s3 + $0x8c] sm:$0xf]
  %v2042 = vld [vmem:[%s3 + $0x90] sm:$0xf]
  %v2043 = vld [vmem:[%s3 + $0x94] sm:$0xf]
  %v2044 = vld [vmem:[%s3 + $0x98] sm:$0xf]
  %v2045 = vld [vmem:[%s3 + $0x9c] sm:$0xf]
  %v2046 = vld [vmem:[%s3 + $0xa0] sm:$0xf]
  %v2047 = vld [vmem:[%s3 + $0xa4] sm:$0xf]
  %v2048 = vld [vmem:[%s3 + $0xa8] sm:$0xf]
  %v2049 = vld [vmem:[%s3 + $0xac] sm:$0xf]
  %v2050 = vld [vmem:[%s3 + $0xb0] sm:$0xf]
  %v2051 = vld [vmem:[%s3 + $0xb4] sm:$0xf]
  %v2052 = vld [vmem:[%s3 + $0xb8] sm:$0xf]
  %v2053 = vld [vmem:[%s3 + $0xbc] sm:$0xf]
  %v2054 = vld [vmem:[%s3 + $0xc0] sm:$0xf]
  %v2055 = vld [vmem:[%s3 + $0xc4] sm:$0xf]
  %v2056 = vld [vmem:[%s3 + $0xc8] sm:$0xf]
  %v2057 = vld [vmem:[%s3 + $0xcc] sm:$0xf]
  %v2058 = vld [vmem:[%s3 + $0xd0] sm:$0xf]
  %v2059 = vld [vmem:[%s3 + $0xd4] sm:$0xf]
  %v2060 = vld [vmem:[%s3 + $0xd8] sm:$0xf]
  %v2061 = vld [vmem:[%s3 + $0xdc] sm:$0xf]
  %v2062 = vld [vmem:[%s3 + $0xe0] sm:$0xf]
  %v2063 = vld [vmem:[%s3 + $0xe4] sm:$0xf]
  %v2064 = vld [vmem:[%s3 + $0xe8] sm:$0xf]
  %v2065 = vld [vmem:[%s3 + $0xec] sm:$0xf]
  %v2066 = vld [vmem:[%s3 + $0xf0] sm:$0xf]
  %v2067 = vld [vmem:[%s3 + $0xf4] sm:$0xf]
  %v2068 = vld [vmem:[%s3 + $0xf8] sm:$0xf]
  %v2069 = vld [vmem:[%s3 + $0xfc] sm:$0xf]
  %v2070 = vld [vmem:[%s4] sm:$0x1]
  %v2072 = vperm.slane %v2070, 0
  %v2138 = vunpack.c.l.b16 %v2006
  %v2139 = vunpack.c.l.b16 %v2007
  %v2140 = vunpack.c.l.b16 %v2008
  %v2141 = vunpack.c.l.b16 %v2009
  %v2142 = vunpack.c.l.b16 %v2010
  %v2143 = vunpack.c.l.b16 %v2011
  %v2144 = vunpack.c.l.b16 %v2012
  %v2145 = vunpack.c.l.b16 %v2013
  %v2146 = vunpack.c.l.b16 %v2014
  %v2147 = vunpack.c.l.b16 %v2015
  %v2148 = vunpack.c.l.b16 %v2016
  %v2149 = vunpack.c.l.b16 %v2017
  %v2150 = vunpack.c.l.b16 %v2018
  %v2151 = vunpack.c.l.b16 %v2019
  %v2152 = vunpack.c.l.b16 %v2020
  %v2153 = vunpack.c.l.b16 %v2021
  %v2154 = vunpack.c.l.b16 %v2022
  %v2155 = vunpack.c.l.b16 %v2023
  %v2156 = vunpack.c.l.b16 %v2024
  %v2157 = vunpack.c.l.b16 %v2025
  %v2158 = vunpack.c.l.b16 %v2026
  %v2159 = vunpack.c.l.b16 %v2027
  %v2160 = vunpack.c.l.b16 %v2028
  %v2161 = vunpack.c.l.b16 %v2029
  %v2162 = vunpack.c.l.b16 %v2030
  %v2163 = vunpack.c.l.b16 %v2031
  %v2164 = vunpack.c.l.b16 %v2032
  %v2165 = vunpack.c.l.b16 %v2033
  %v2166 = vunpack.c.l.b16 %v2034
  %v2167 = vunpack.c.l.b16 %v2035
  %v2168 = vunpack.c.l.b16 %v2036
  %v2169 = vunpack.c.l.b16 %v2037
  %v2170 = vunpack.c.l.b16 %v2038
  %v2171 = vunpack.c.l.b16 %v2039
  %v2172 = vunpack.c.l.b16 %v2040
  %v2173 = vunpack.c.l.b16 %v2041
  %v2174 = vunpack.c.l.b16 %v2042
  %v2175 = vunpack.c.l.b16 %v2043
  %v2176 = vunpack.c.l.b16 %v2044
  %v2177 = vunpack.c.l.b16 %v2045
  %v2178 = vunpack.c.l.b16 %v2046
  %v2179 = vunpack.c.l.b16 %v2047
  %v2180 = vunpack.c.l.b16 %v2048
  %v2181 = vunpack.c.l.b16 %v2049
  %v2182 = vunpack.c.l.b16 %v2050
  %v2183 = vunpack.c.l.b16 %v2051
  %v2184 = vunpack.c.l.b16 %v2052
  %v2185 = vunpack.c.l.b16 %v2053
  %v2186 = vunpack.c.l.b16 %v2054
  %v2187 = vunpack.c.l.b16 %v2055
  %v2188 = vunpack.c.l.b16 %v2056
  %v2189 = vunpack.c.l.b16 %v2057
  %v2190 = vunpack.c.l.b16 %v2058
  %v2191 = vunpack.c.l.b16 %v2059
  %v2192 = vunpack.c.l.b16 %v2060
  %v2193 = vunpack.c.l.b16 %v2061
  %v2194 = vunpack.c.l.b16 %v2062
  %v2195 = vunpack.c.l.b16 %v2063
  %v2196 = vunpack.c.l.b16 %v2064
  %v2197 = vunpack.c.l.b16 %v2065
  %v2198 = vunpack.c.l.b16 %v2066
  %v2199 = vunpack.c.l.b16 %v2067
  %v2200 = vunpack.c.l.b16 %v2068
  %v2201 = vunpack.c.l.b16 %v2069
  %v2202 = vpack.c.b16 %v2139, %v2138
  %v2203 = vpack.c.b16 %v2141, %v2140
  %v2204 = vpack.c.b16 %v2143, %v2142
  %v2205 = vpack.c.b16 %v2145, %v2144
  %v2206 = vpack.c.b16 %v2147, %v2146
  %v2207 = vpack.c.b16 %v2149, %v2148
  %v2208 = vpack.c.b16 %v2151, %v2150
  %v2209 = vpack.c.b16 %v2153, %v2152
  %v2210 = vpack.c.b16 %v2155, %v2154
  %v2211 = vpack.c.b16 %v2157, %v2156
  %v2212 = vpack.c.b16 %v2159, %v2158
  %v2213 = vpack.c.b16 %v2161, %v2160
  %v2214 = vpack.c.b16 %v2163, %v2162
  %v2215 = vpack.c.b16 %v2165, %v2164
  %v2216 = vpack.c.b16 %v2167, %v2166
  %v2217 = vpack.c.b16 %v2169, %v2168
  %v2218 = vpack.c.b16 %v2171, %v2170
  %v2219 = vpack.c.b16 %v2173, %v2172
  %v2220 = vpack.c.b16 %v2175, %v2174
  %v2221 = vpack.c.b16 %v2177, %v2176
  %v2222 = vpack.c.b16 %v2179, %v2178
  %v2223 = vpack.c.b16 %v2181, %v2180
  %v2224 = vpack.c.b16 %v2183, %v2182
  %v2225 = vpack.c.b16 %v2185, %v2184
  %v2226 = vpack.c.b16 %v2187, %v2186
  %v2227 = vpack.c.b16 %v2189, %v2188
  %v2228 = vpack.c.b16 %v2191, %v2190
  %v2229 = vpack.c.b16 %v2193, %v2192
  %v2230 = vpack.c.b16 %v2195, %v2194
  %v2231 = vpack.c.b16 %v2197, %v2196
  %v2232 = vpack.c.b16 %v2199, %v2198
  %v2233 = vpack.c.b16 %v2201, %v2200
  %2266 = vmatpush.bf16.msra.mxu0 %v2209
  %2267 = vmatpush.bf16.msra.mxu0 %v2208
  %2268 = vmatpush.bf16.msra.mxu0 %v2207
  %2269 = vmatpush.bf16.msra.mxu0 %v2206
  %2270 = vmatpush.bf16.msra.mxu0 %v2205
  %2271 = vmatpush.bf16.msra.mxu0 %v2204
  %2272 = vmatpush.bf16.msra.mxu0 %v2203
  %2273 = vmatpush.bf16.msra.mxu0 %v2202
  %2274 = vmatmul.bf16.gmra.mxu0 %v2002
  %v2275 = vpop.f32.mrf.mxu0
  %v2276 = vadd.f32 %v2072, %v2275
  %v2277 = vpop.f32.mrf.mxu0
  %2278 = vdwg.mxu0
  %2279 = vmatpush.bf16.msra.mxu0 %v2217
  %2280 = vmatpush.bf16.msra.mxu0 %v2216
  %2281 = vmatpush.bf16.msra.mxu0 %v2215
  %2282 = vmatpush.bf16.msra.mxu0 %v2214
  %2283 = vmatpush.bf16.msra.mxu0 %v2213
  %2284 = vmatpush.bf16.msra.mxu0 %v2212
  %2285 = vmatpush.bf16.msra.mxu0 %v2211
  %2286 = vmatpush.bf16.msra.mxu0 %v2210
  %2287 = vmatmul.bf16.gmra.mxu0 %v2003
  %v2288 = vpop.f32.mrf.mxu0
  %v2289 = vadd.f32 %v2276, %v2288
  %v2290 = vpop.f32.mrf.mxu0
  %2291 = vdwg.mxu0
  %2292 = vmatpush.bf16.msra.mxu0 %v2225
  %2293 = vmatpush.bf16.msra.mxu0 %v2224
  %2294 = vmatpush.bf16.msra.mxu0 %v2223
  %2295 = vmatpush.bf16.msra.mxu0 %v2222
  %2296 = vmatpush.bf16.msra.mxu0 %v2221
  %2297 = vmatpush.bf16.msra.mxu0 %v2220
  %2298 = vmatpush.bf16.msra.mxu0 %v2219
  %2299 = vmatpush.bf16.msra.mxu0 %v2218
  %2300 = vmatmul.bf16.gmra.mxu0 %v2004
  %v2301 = vpop.f32.mrf.mxu0
  %v2302 = vadd.f32 %v2289, %v2301
  %v2303 = vpop.f32.mrf.mxu0
  %2304 = vdwg.mxu0
  %2305 = vmatpush.bf16.msra.mxu0 %v2233
  %2306 = vmatpush.bf16.msra.mxu0 %v2232
  %2307 = vmatpush.bf16.msra.mxu0 %v2231
  %2308 = vmatpush.bf16.msra.mxu0 %v2230
  %2309 = vmatpush.bf16.msra.mxu0 %v2229
  %2310 = vmatpush.bf16.msra.mxu0 %v2228
  %2311 = vmatpush.bf16.msra.mxu0 %v2227
  %2312 = vmatpush.bf16.msra.mxu0 %v2226
  %2313 = vmatmul.bf16.gmra.mxu0 %v2005
  %v2314 = vpop.f32.mrf.mxu0
  %v2315 = vadd.f32 %v2302, %v2314
  %v2316 = vpop.f32.mrf.mxu0
  %2317 = vdwg.mxu0
  %2318 = vst [vmem:[%s5] sm:$0xff] %v2315
  // Predicated region
  $region22: #{cnn_mnist_forward.3} parent=0 // pred_check
    _
  $region23: #{cnn_mnist_forward.3} parent=0 // pred_check_branch
    %2320 = sbr.rel (0) target = $region25
  $region24: #{cnn_mnist_forward.3} parent=0 // pred_region
    _
  $region25: #{cnn_mnist_forward.3} parent=0 // pred_fallthru
    _
  // Predicated region
  $region26: #{cnn_mnist_forward.3} parent=0 // pred_check
    _
  $region27: #{cnn_mnist_forward.3} parent=0 // pred_check_branch
    %2322 = sbr.rel (0) target = $region29
  $region28: #{cnn_mnist_forward.3} parent=0 // pred_region
    _
  $region29: #{cnn_mnist_forward.3} parent=0 // pred_fallthru
    _

// kernel: cnn_mnist_forward.2
$region0: #{cnn_mnist_forward.2}
  #allocation0 [shape = 'u32[]', space=smem, size = 0x4, offset = 0x4, fixed_abs, tag = 'smem constant byte address 0x4 - core index']
  #allocation1 [shape = 'u32[72,128]{1,0:T(1,128)}', space=vmem, size = 0x9000, scoped, tag = 'internal scratch']
  %s0 = inlined_call_operand.vmem [shape: f32[2,4,144,32], index: 0, kind: input, shape index: {}]
  %s1 = inlined_call_operand.vmem [shape: f32[32,32], index: 1, kind: input, shape index: {}]
  %s2 = inlined_call_operand.vmem [shape: f32[1,32], index: 2, kind: input, shape index: {}]
  %s3 = inlined_call_operand.vmem [shape: bf16[800,64], index: 3, kind: input, shape index: {}]
  %s4 = inlined_call_operand.vmem [shape: f32[1,64], index: 4, kind: input, shape index: {}]
  %s5 = inlined_call_operand.vmem [shape: f32[2,16,64], index: 5, kind: output, shape index: {}]
  %s6 = sld [smem:[#allocation0]]
  $region53: #{cnn_mnist_forward.2} parent=0
    _
  %s8 = ssub.s32 1, %s6
  %s9 = scalar_select 0, %s8, %s6
  loop: start=0, step=1, limit=4
  $region2: #{cnn_mnist_forward.2} parent=0 // loop_pre_header
    _
  $region3: #{cnn_mnist_forward.2} parent=0 // loop_header
    %s11 = sphi 0, %s15
    %p12 = scmp.ge.s32.totalorder %s11, 4
    %s21 = sphi 0, %s23
    %s24 = sphi 0, %s21
    %s25 = sphi 0, %s24
    %s41 = sphi 0, %s25
    %s45 = sphi 0, %s45
    %s47 = sphi 0, %s45
    %s48 = sphi 0, %s47
    %s62 = sphi 0, %s48
    %s66 = sphi 0, %s66
    %s68 = sphi 0, %s66
    %s69 = sphi 0, %s68
    %s83 = sphi 0, %s69
    %s87 = sphi 0, %s87
    %s89 = sphi 0, %s87
    %s90 = sphi 0, %s89
    %s104 = sphi 0, %s90
    %s108 = sphi 0, %s108
    %s110 = sphi 0, %s108
    %s111 = sphi 0, %s110
    %s125 = sphi 0, %s111
    %s131 = sphi 0, %s133
    %s134 = sphi 0, %s131
    %s135 = sphi 0, %s134
    %s151 = sphi 0, %s135
  $region4: #{cnn_mnist_forward.2} parent=0 // loop_header_branch
    %14 = sbr.rel (%p12) target = $region8
  $region5: #{cnn_mnist_forward.2} parent=0 // loop_body
    %s16 = ssub.s32 %s11, 1
    %s17 = ssub.s32 %s11, 2
    %s18 = sadd.s32 %s11, 1
    %s19 = ssub.s32 %s11, %s18
    %p20 = scmp.eq.s32.totalorder %s19, 0
    %s22 = sadd.s32 %s21, 1
    %s23 = scalar_select %p20, %s21, %s22
    %p26 = pneg %p20
    %p27 = scmp.eq.s32.totalorder %s11, 1
    %p28 = por %p26, %p27
    %p29 = scmp.ne.s32.totalorder %s21, %s24
    %p30 = scmp.eq.s32.totalorder %s11, 0
    %p31 = por %p29, %p30
    %p32 = scmp.ne.s32.totalorder %s21, %s24
    %p33 = scmp.eq.s32.totalorder %s16, 1
    %p34 = por %p32, %p33
    %p35 = scmp.ne.s32.totalorder %s24, %s25
    %p36 = scmp.eq.s32.totalorder %s16, 0
    %p37 = por %p35, %p36
    %p38 = scmp.ne.s32.totalorder %s24, %s25
    %p39 = scmp.eq.s32.totalorder %s17, 1
    %p40 = por %p38, %p39
    %p42 = scmp.ne.s32.totalorder %s25, %s41
    %p43 = scmp.eq.s32.totalorder %s17, 0
    %p44 = por %p42, %p43
    %s46 = sadd.s32 %s45, 1
    %p49 = scmp.eq.s32.totalorder %s11, 1
    %p50 = scmp.ne.s32.totalorder %s45, %s47
    %p51 = scmp.eq.s32.totalorder %s11, 0
    %p52 = por %p50, %p51
    %p53 = scmp.ne.s32.totalorder %s45, %s47
    %p54 = scmp.eq.s32.totalorder %s16, 1
    %p55 = por %p53, %p54
    %p56 = scmp.ne.s32.totalorder %s47, %s48
    %p57 = scmp.eq.s32.totalorder %s16, 0
    %p58 = por %p56, %p57
    %p59 = scmp.ne.s32.totalorder %s47, %s48
    %p60 = scmp.eq.s32.totalorder %s17, 1
    %p61 = por %p59, %p60
    %p63 = scmp.ne.s32.totalorder %s48, %s62
    %p64 = scmp.eq.s32.totalorder %s17, 0
    %p65 = por %p63, %p64
    %s67 = sadd.s32 %s66, 1
    %p70 = scmp.eq.s32.totalorder %s11, 1
    %p71 = scmp.ne.s32.totalorder %s66, %s68
    %p72 = scmp.eq.s32.totalorder %s11, 0
    %p73 = por %p71, %p72
    %p74 = scmp.ne.s32.totalorder %s66, %s68
    %p75 = scmp.eq.s32.totalorder %s16, 1
    %p76 = por %p74, %p75
    %p77 = scmp.ne.s32.totalorder %s68, %s69
    %p78 = scmp.eq.s32.totalorder %s16, 0
    %p79 = por %p77, %p78
    %p80 = scmp.ne.s32.totalorder %s68, %s69
    %p81 = scmp.eq.s32.totalorder %s17, 1
    %p82 = por %p80, %p81
    %p84 = scmp.ne.s32.totalorder %s69, %s83
    %p85 = scmp.eq.s32.totalorder %s17, 0
    %p86 = por %p84, %p85
    %s88 = sadd.s32 %s87, 1
    %p91 = scmp.eq.s32.totalorder %s11, 1
    %p92 = scmp.ne.s32.totalorder %s87, %s89
    %p93 = scmp.eq.s32.totalorder %s11, 0
    %p94 = por %p92, %p93
    %p95 = scmp.ne.s32.totalorder %s87, %s89
    %p96 = scmp.eq.s32.totalorder %s16, 1
    %p97 = por %p95, %p96
    %p98 = scmp.ne.s32.totalorder %s89, %s90
    %p99 = scmp.eq.s32.totalorder %s16, 0
    %p100 = por %p98, %p99
    %p101 = scmp.ne.s32.totalorder %s89, %s90
    %p102 = scmp.eq.s32.totalorder %s17, 1
    %p103 = por %p101, %p102
    %p105 = scmp.ne.s32.totalorder %s90, %s104
    %p106 = scmp.eq.s32.totalorder %s17, 0
    %p107 = por %p105, %p106
    %s109 = sadd.s32 %s108, 1
    %p112 = scmp.eq.s32.totalorder %s11, 1
    %p113 = scmp.ne.s32.totalorder %s108, %s110
    %p114 = scmp.eq.s32.totalorder %s11, 0
    %p115 = por %p113, %p114
    %p116 = scmp.ne.s32.totalorder %s108, %s110
    %p117 = scmp.eq.s32.totalorder %s16, 1
    %p118 = por %p116, %p117
    %p119 = scmp.ne.s32.totalorder %s110, %s111
    %p120 = scmp.eq.s32.totalorder %s16, 0
    %p121 = por %p119, %p120
    %p122 = scmp.ne.s32.totalorder %s110, %s111
    %p123 = scmp.eq.s32.totalorder %s17, 1
    %p124 = por %p122, %p123
    %p126 = scmp.ne.s32.totalorder %s111, %s125
    %p127 = scmp.eq.s32.totalorder %s17, 0
    %p128 = por %p126, %p127
    %s129 = ssub.s32 %s11, %s18
    %p130 = scmp.eq.s32.totalorder %s129, 0
    %s132 = sadd.s32 %s131, 1
    %s133 = scalar_select %p130, %s131, %s132
    %p136 = pneg %p130
    %p137 = scmp.eq.s32.totalorder %s11, 1
    %p138 = por %p136, %p137
    %p139 = scmp.ne.s32.totalorder %s131, %s134
    %p140 = scmp.eq.s32.totalorder %s11, 0
    %p141 = por %p139, %p140
    %p142 = scmp.ne.s32.totalorder %s131, %s134
    %p143 = scmp.eq.s32.totalorder %s16, 1
    %p144 = por %p142, %p143
    %p145 = scmp.ne.s32.totalorder %s134, %s135
    %p146 = scmp.eq.s32.totalorder %s16, 0
    %p147 = por %p145, %p146
    %p148 = scmp.ne.s32.totalorder %s134, %s135
    %p149 = scmp.eq.s32.totalorder %s17, 1
    %p150 = por %p148, %p149
    %p152 = scmp.ne.s32.totalorder %s135, %s151
    %p153 = scmp.eq.s32.totalorder %s17, 0
    %p154 = por %p152, %p153
    %p155 = scmp.le.s32.totalorder 1, %s11
    %p156 = scmp.lt.s32.totalorder %s11, 3
    %p157 = pnand %p155, %p156
    %p158 = pneg %p157
    // Predicated region
    $region9: #{cnn_mnist_forward.2} parent=5 // pred_check
      _
    $region10: #{cnn_mnist_forward.2} parent=5 // pred_check_branch
      %160 = sbr.rel (%p157) target = $region12
    $region11: #{cnn_mnist_forward.2} parent=5 // pred_region
      %s161 = ssub.s32 %s11, 1
      // Predicated region
      $region13: #{cnn_mnist_forward.2} parent=11 // pred_check
        %p162 = pneg %p58
      $region14: #{cnn_mnist_forward.2} parent=11 // pred_check_branch
        %164 = sbr.rel (%p162) target = $region16
      $region15: #{cnn_mnist_forward.2} parent=11 // pred_region
        _
      $region16: #{cnn_mnist_forward.2} parent=11 // pred_fallthru
        _
      // Predicated region
      $region17: #{cnn_mnist_forward.2} parent=11 // pred_check
        %p165 = pneg %p79
      $region18: #{cnn_mnist_forward.2} parent=11 // pred_check_branch
        %167 = sbr.rel (%p165) target = $region20
      $region19: #{cnn_mnist_forward.2} parent=11 // pred_region
        _
      $region20: #{cnn_mnist_forward.2} parent=11 // pred_fallthru
        _
      // Predicated region
      $region21: #{cnn_mnist_forward.2} parent=11 // pred_check
        %p168 = pneg %p100
      $region22: #{cnn_mnist_forward.2} parent=11 // pred_check_branch
        %170 = sbr.rel (%p168) target = $region24
      $region23: #{cnn_mnist_forward.2} parent=11 // pred_region
        _
      $region24: #{cnn_mnist_forward.2} parent=11 // pred_fallthru
        _
      // Predicated region
      $region25: #{cnn_mnist_forward.2} parent=11 // pred_check
        %p171 = pneg %p121
      $region26: #{cnn_mnist_forward.2} parent=11 // pred_check_branch
        %173 = sbr.rel (%p171) target = $region28
      $region27: #{cnn_mnist_forward.2} parent=11 // pred_region
        _
      $region28: #{cnn_mnist_forward.2} parent=11 // pred_fallthru
        _
    $region12: #{cnn_mnist_forward.2} parent=5 // pred_fallthru
      _
    %p174 = scmp.lt.s32.totalorder %s11, 2
    // Predicated region
    $region29: #{cnn_mnist_forward.2} parent=5 // pred_check
      %p175 = pneg %p174
    $region30: #{cnn_mnist_forward.2} parent=5 // pred_check_branch
      %177 = sbr.rel (%p175) target = $region32
    $region31: #{cnn_mnist_forward.2} parent=5 // pred_region
      // Predicated region
      $region33: #{cnn_mnist_forward.2} parent=31 // pred_check
        %p178 = pneg %p31
      $region34: #{cnn_mnist_forward.2} parent=31 // pred_check_branch
        %180 = sbr.rel (%p178) target = $region36
      $region35: #{cnn_mnist_forward.2} parent=31 // pred_region
        %p181 = scmp.lt.s32.totalorder %s11, 1
        %s182 = scalar_select %p181, %s11, 1
        %s183 = smul.addr %s182, 72
        %s184 = smul.addr %s183, 8
        %s185 = scalar_lea.vmem %s0, %s184
      $region36: #{cnn_mnist_forward.2} parent=31 // pred_fallthru
        _
    $region32: #{cnn_mnist_forward.2} parent=5 // pred_fallthru
      _
    %p186 = scmp.le.s32.totalorder 1, %s11
    %p187 = scmp.lt.s32.totalorder %s11, 3
    %p188 = pnand %p186, %p187
    %p189 = pneg %p188
    // Predicated region
    $region37: #{cnn_mnist_forward.2} parent=5 // pred_check
      _
    $region38: #{cnn_mnist_forward.2} parent=5 // pred_check_branch
      %191 = sbr.rel (%p188) target = $region40
    $region39: #{cnn_mnist_forward.2} parent=5 // pred_region
      %s192 = ssub.s32 %s11, 1
      %p193 = scmp.lt.s32.totalorder %s16, 1
      %s194 = scalar_select %p193, %s16, 1
      %s195 = smul.addr %s194, 72
      %s196 = smul.addr %s195, 8
      %s197 = scalar_lea.vmem %s0, %s196
      %p198 = pneg %p37
      %p199 = pneg %p34
      %p200 = pneg %p58
      %p201 = pneg %p55
      %p202 = pneg %p79
      %p203 = pneg %p76
      %p204 = pneg %p100
      %p205 = pneg %p97
      %p206 = pneg %p121
      %p207 = pneg %p118
      %p208 = pneg %p147
      %p209 = pneg %p144
      %p210 = scmp.lt.s32.totalorder %s16, 1
      %s211 = scalar_select %p210, %s16, 1
      %s212 = smul.addr %s211, 2
      %s213 = smul.addr %s212, 8
      %s214 = scalar_lea.vmem %s5, %s213
      %p215 = scmp.lt.s32.totalorder %s16, 1
      %s216 = scalar_select %p215, %s16, 1
      %s217 = smul.addr %s216, 72
      %s218 = smul.addr %s217, 8
      %s219 = scalar_lea.vmem %s0, %s218
      %p220 = scmp.lt.s32.totalorder %s16, 1
      %s221 = scalar_select %p220, %s16, 1
      %s222 = smul.addr %s221, 2
      %s223 = smul.addr %s222, 8
      %s224 = scalar_lea.vmem %s5, %s223
      %v226 = vld [vmem:[%s1] sm:$0xff]
      %v227 = vld [vmem:[%s1 + $0x8] sm:$0xff]
      %v228 = vld [vmem:[%s1 + $0x10] sm:$0xff]
      %v229 = vld [vmem:[%s1 + $0x18] sm:$0xff]
      %v230 = vld [vmem:[%s2] sm:$0x1]
      %v231 = vld [vmem:[%s219] sm:$0xff]
      %v232 = vld [vmem:[%s219 + $0x8] sm:$0xff]
      %v233 = vld [vmem:[%s219 + $0x10] sm:$0xff]
      %v234 = vld [vmem:[%s219 + $0x18] sm:$0xff]
      %v235 = vld [vmem:[%s219 + $0x20] sm:$0xff]
      %v236 = vld [vmem:[%s219 + $0x28] sm:$0xff]
      %v237 = vld [vmem:[%s219 + $0x30] sm:$0xff]
      %v238 = vld [vmem:[%s219 + $0x38] sm:$0xff]
      %v239 = vld [vmem:[%s219 + $0x40] sm:$0xff]
      %v240 = vld [vmem:[%s219 + $0x48] sm:$0xff]
      %v241 = vld [vmem:[%s219 + $0x50] sm:$0xff]
      %v242 = vld [vmem:[%s219 + $0x58] sm:$0xff]
      %v243 = vld [vmem:[%s219 + $0x60] sm:$0xff]
      %v244 = vld [vmem:[%s219 + $0x68] sm:$0xff]
      %v245 = vld [vmem:[%s219 + $0x70] sm:$0xff]
      %v246 = vld [vmem:[%s219 + $0x78] sm:$0xff]
      %v247 = vld [vmem:[%s219 + $0x80] sm:$0xff]
      %v248 = vld [vmem:[%s219 + $0x88] sm:$0xff]
      %v250 = vperm.slane %v230, 0
      %vm252 = vcmask 261120
      %v254 = vsel %vm252, %v231, 0
      %v257 = vsel %vm252, %v232, 0
      %v260 = vsel %vm252, %v233, 0
      %v263 = vsel %vm252, %v234, 0
      %v266 = vsel %vm252, %v235, 0
      %v269 = vsel %vm252, %v236, 0
      %v272 = vsel %vm252, %v237, 0
      %v275 = vsel %vm252, %v238, 0
      %v278 = vsel %vm252, %v239, 0
      %v281 = vsel %vm252, %v240, 0
      %v284 = vsel %vm252, %v241, 0
      %v287 = vsel %vm252, %v242, 0
      %v290 = vsel %vm252, %v243, 0
      %v293 = vsel %vm252, %v244, 0
      %v296 = vsel %vm252, %v245, 0
      %v299 = vsel %vm252, %v246, 0
      %v302 = vsel %vm252, %v247, 0
      %v305 = vsel %vm252, %v248, 0
      %307 = vmatpush.msra.mxu0 0.0
      %308 = vmatpush.msra.mxu0 0.0
      %309 = vmatpush.msra.mxu0 0.0
      %310 = vmatpush.msra.mxu0 0.0
      %311 = vmatpush.msra.mxu0 0.0
      %312 = vmatpush.msra.mxu0 0.0
      %313 = vmatpush.msra.mxu0 0.0
      %314 = vmatpush.msra.mxu0 0.0
      %315 = vmatpush.msra.mxu0 0.0
      %316 = vmatpush.msra.mxu0 0.0
      %317 = vmatpush.msra.mxu0 0.0
      %318 = vmatpush.msra.mxu0 0.0
      %319 = vmatpush.msra.mxu0 %v229
      %320 = vmatpush.msra.mxu0 %v228
      %321 = vmatpush.msra.mxu0 %v227
      %322 = vmatpush.msra.mxu0 %v226
      %323 = vmatmul.f32.gmra.mxu0 %v254
      %v324 = vpop.f32.mrf.mxu0
      %v325 = vadd.f32 %v250, %v324
      %326 = vmatmul.f32.gmra.mxu0 %v257
      %v327 = vpop.f32.mrf.mxu0
      %v328 = vadd.f32 %v250, %v327
      %329 = vmatmul.f32.gmra.mxu0 %v260
      %v330 = vpop.f32.mrf.mxu0
      %v331 = vadd.f32 %v250, %v330
      %332 = vmatmul.f32.gmra.mxu0 %v263
      %v333 = vpop.f32.mrf.mxu0
      %v334 = vadd.f32 %v250, %v333
      %335 = vmatmul.f32.gmra.mxu0 %v266
      %v336 = vpop.f32.mrf.mxu0
      %v337 = vadd.f32 %v250, %v336
      %338 = vmatmul.f32.gmra.mxu0 %v269
      %v339 = vpop.f32.mrf.mxu0
      %v340 = vadd.f32 %v250, %v339
      %341 = vmatmul.f32.gmra.mxu0 %v272
      %v342 = vpop.f32.mrf.mxu0
      %v343 = vadd.f32 %v250, %v342
      %344 = vmatmul.f32.gmra.mxu0 %v275
      %v345 = vpop.f32.mrf.mxu0
      %v346 = vadd.f32 %v250, %v345
      %347 = vmatmul.f32.gmra.mxu0 %v278
      %v348 = vpop.f32.mrf.mxu0
      %v349 = vadd.f32 %v250, %v348
      %350 = vmatmul.f32.gmra.mxu0 %v281
      %v351 = vpop.f32.mrf.mxu0
      %v352 = vadd.f32 %v250, %v351
      %353 = vmatmul.f32.gmra.mxu0 %v284
      %v354 = vpop.f32.mrf.mxu0
      %v355 = vadd.f32 %v250, %v354
      %356 = vmatmul.f32.gmra.mxu0 %v287
      %v357 = vpop.f32.mrf.mxu0
      %v358 = vadd.f32 %v250, %v357
      %359 = vmatmul.f32.gmra.mxu0 %v290
      %v360 = vpop.f32.mrf.mxu0
      %v361 = vadd.f32 %v250, %v360
      %362 = vmatmul.f32.gmra.mxu0 %v293
      %v363 = vpop.f32.mrf.mxu0
      %v364 = vadd.f32 %v250, %v363
      %365 = vmatmul.f32.gmra.mxu0 %v296
      %v366 = vpop.f32.mrf.mxu0
      %v367 = vadd.f32 %v250, %v366
      %368 = vmatmul.f32.gmra.mxu0 %v299
      %v369 = vpop.f32.mrf.mxu0
      %v370 = vadd.f32 %v250, %v369
      %371 = vmatmul.f32.gmra.mxu0 %v302
      %v372 = vpop.f32.mrf.mxu0
      %v373 = vadd.f32 %v250, %v372
      %374 = vmatmul.f32.gmra.mxu0 %v305
      %v375 = vpop.f32.mrf.mxu0
      %v376 = vadd.f32 %v250, %v375
      %377 = vdwg.mxu0
      %v378 = vmax.f32 %v325, 0.0
      %v379 = vmax.f32 %v328, 0.0
      %v380 = vmax.f32 %v331, 0.0
      %v381 = vmax.f32 %v334, 0.0
      %v382 = vmax.f32 %v337, 0.0
      %v383 = vmax.f32 %v340, 0.0
      %v384 = vmax.f32 %v343, 0.0
      %v385 = vmax.f32 %v346, 0.0
      %v386 = vmax.f32 %v349, 0.0
      %v387 = vmax.f32 %v352, 0.0
      %v388 = vmax.f32 %v355, 0.0
      %v389 = vmax.f32 %v358, 0.0
      %v390 = vmax.f32 %v361, 0.0
      %v391 = vmax.f32 %v364, 0.0
      %v392 = vmax.f32 %v367, 0.0
      %v393 = vmax.f32 %v370, 0.0
      %v394 = vmax.f32 %v373, 0.0
      %v395 = vmax.f32 %v376, 0.0
      %s396 = scalar_lea.vmem %s219, 144
      %v397 = vld [vmem:[%s396] sm:$0xff]
      %v398 = vld [vmem:[%s396 + $0x8] sm:$0xff]
      %v399 = vld [vmem:[%s396 + $0x10] sm:$0xff]
      %v400 = vld [vmem:[%s396 + $0x18] sm:$0xff]
      %v401 = vld [vmem:[%s396 + $0x20] sm:$0xff]
      %v402 = vld [vmem:[%s396 + $0x28] sm:$0xff]
      %v403 = vld [vmem:[%s396 + $0x30] sm:$0xff]
      %v404 = vld [vmem:[%s396 + $0x38] sm:$0xff]
      %v405 = vld [vmem:[%s396 + $0x40] sm:$0xff]
      %v406 = vld [vmem:[%s396 + $0x48] sm:$0xff]
      %v407 = vld [vmem:[%s396 + $0x50] sm:$0xff]
      %v408 = vld [vmem:[%s396 + $0x58] sm:$0xff]
      %v409 = vld [vmem:[%s396 + $0x60] sm:$0xff]
      %v410 = vld [vmem:[%s396 + $0x68] sm:$0xff]
      %v411 = vld [vmem:[%s396 + $0x70] sm:$0xff]
      %v412 = vld [vmem:[%s396 + $0x78] sm:$0xff]
      %v413 = vld [vmem:[%s396 + $0x80] sm:$0xff]
      %v414 = vld [vmem:[%s396 + $0x88] sm:$0xff]
      %v416 = vsel %vm252, %v397, 0
      %v419 = vsel %vm252, %v398, 0
      %v422 = vsel %vm252, %v399, 0
      %v425 = vsel %vm252, %v400, 0
      %v428 = vsel %vm252, %v401, 0
      %v431 = vsel %vm252, %v402, 0
      %v434 = vsel %vm252, %v403, 0
      %v437 = vsel %vm252, %v404, 0
      %v440 = vsel %vm252, %v405, 0
      %v443 = vsel %vm252, %v406, 0
      %v446 = vsel %vm252, %v407, 0
      %v449 = vsel %vm252, %v408, 0
      %v452 = vsel %vm252, %v409, 0
      %v455 = vsel %vm252, %v410, 0
      %v458 = vsel %vm252, %v411, 0
      %v461 = vsel %vm252, %v412, 0
      %v464 = vsel %vm252, %v413, 0
      %v467 = vsel %vm252, %v414, 0
      %469 = vmatpush.msra.mxu0 0.0
      %470 = vmatpush.msra.mxu0 0.0
      %471 = vmatpush.msra.mxu0 0.0
      %472 = vmatpush.msra.mxu0 0.0
      %473 = vmatpush.msra.mxu0 0.0
      %474 = vmatpush.msra.mxu0 0.0
      %475 = vmatpush.msra.mxu0 0.0
      %476 = vmatpush.msra.mxu0 0.0
      %477 = vmatpush.msra.mxu0 0.0
      %478 = vmatpush.msra.mxu0 0.0
      %479 = vmatpush.msra.mxu0 0.0
      %480 = vmatpush.msra.mxu0 0.0
      %481 = vmatpush.msra.mxu0 %v229
      %482 = vmatpush.msra.mxu0 %v228
      %483 = vmatpush.msra.mxu0 %v227
      %484 = vmatpush.msra.mxu0 %v226
      %485 = vmatmul.f32.gmra.mxu0 %v416
      %v486 = vpop.f32.mrf.mxu0
      %v487 = vadd.f32 %v250, %v486
      %488 = vmatmul.f32.gmra.mxu0 %v419
      %v489 = vpop.f32.mrf.mxu0
      %v490 = vadd.f32 %v250, %v489
      %491 = vmatmul.f32.gmra.mxu0 %v422
      %v492 = vpop.f32.mrf.mxu0
      %v493 = vadd.f32 %v250, %v492
      %494 = vmatmul.f32.gmra.mxu0 %v425
      %v495 = vpop.f32.mrf.mxu0
      %v496 = vadd.f32 %v250, %v495
      %497 = vmatmul.f32.gmra.mxu0 %v428
      %v498 = vpop.f32.mrf.mxu0
      %v499 = vadd.f32 %v250, %v498
      %500 = vmatmul.f32.gmra.mxu0 %v431
      %v501 = vpop.f32.mrf.mxu0
      %v502 = vadd.f32 %v250, %v501
      %503 = vmatmul.f32.gmra.mxu0 %v434
      %v504 = vpop.f32.mrf.mxu0
      %v505 = vadd.f32 %v250, %v504
      %506 = vmatmul.f32.gmra.mxu0 %v437
      %v507 = vpop.f32.mrf.mxu0
      %v508 = vadd.f32 %v250, %v507
      %509 = vmatmul.f32.gmra.mxu0 %v440
      %v510 = vpop.f32.mrf.mxu0
      %v511 = vadd.f32 %v250, %v510
      %512 = vmatmul.f32.gmra.mxu0 %v443
      %v513 = vpop.f32.mrf.mxu0
      %v514 = vadd.f32 %v250, %v513
      %515 = vmatmul.f32.gmra.mxu0 %v446
      %v516 = vpop.f32.mrf.mxu0
      %v517 = vadd.f32 %v250, %v516
      %518 = vmatmul.f32.gmra.mxu0 %v449
      %v519 = vpop.f32.mrf.mxu0
      %v520 = vadd.f32 %v250, %v519
      %521 = vmatmul.f32.gmra.mxu0 %v452
      %v522 = vpop.f32.mrf.mxu0
      %v523 = vadd.f32 %v250, %v522
      %524 = vmatmul.f32.gmra.mxu0 %v455
      %v525 = vpop.f32.mrf.mxu0
      %v526 = vadd.f32 %v250, %v525
      %527 = vmatmul.f32.gmra.mxu0 %v458
      %v528 = vpop.f32.mrf.mxu0
      %v529 = vadd.f32 %v250, %v528
      %530 = vmatmul.f32.gmra.mxu0 %v461
      %v531 = vpop.f32.mrf.mxu0
      %v532 = vadd.f32 %v250, %v531
      %533 = vmatmul.f32.gmra.mxu0 %v464
      %v534 = vpop.f32.mrf.mxu0
      %v535 = vadd.f32 %v250, %v534
      %536 = vmatmul.f32.gmra.mxu0 %v467
      %v537 = vpop.f32.mrf.mxu0
      %v538 = vadd.f32 %v250, %v537
      %539 = vdwg.mxu0
      %v540 = vmax.f32 %v487, 0.0
      %v541 = vmax.f32 %v490, 0.0
      %v542 = vmax.f32 %v493, 0.0
      %v543 = vmax.f32 %v496, 0.0
      %v544 = vmax.f32 %v499, 0.0
      %v545 = vmax.f32 %v502, 0.0
      %v546 = vmax.f32 %v505, 0.0
      %v547 = vmax.f32 %v508, 0.0
      %v548 = vmax.f32 %v511, 0.0
      %v549 = vmax.f32 %v514, 0.0
      %v550 = vmax.f32 %v517, 0.0
      %v551 = vmax.f32 %v520, 0.0
      %v552 = vmax.f32 %v523, 0.0
      %v553 = vmax.f32 %v526, 0.0
      %v554 = vmax.f32 %v529, 0.0
      %v555 = vmax.f32 %v532, 0.0
      %v556 = vmax.f32 %v535, 0.0
      %v557 = vmax.f32 %v538, 0.0
      %v558 = vmax.f32 %v378, %v540
      %v559 = vmax.f32 %v379, %v541
      %v560 = vmax.f32 %v380, %v542
      %v561 = vmax.f32 %v381, %v543
      %v562 = vmax.f32 %v382, %v544
      %v563 = vmax.f32 %v383, %v545
      %v564 = vmax.f32 %v384, %v546
      %v565 = vmax.f32 %v385, %v547
      %v566 = vmax.f32 %v386, %v548
      %v567 = vmax.f32 %v387, %v549
      %v568 = vmax.f32 %v388, %v550
      %v569 = vmax.f32 %v389, %v551
      %v570 = vmax.f32 %v390, %v552
      %v571 = vmax.f32 %v391, %v553
      %v572 = vmax.f32 %v392, %v554
      %v573 = vmax.f32 %v393, %v555
      %v574 = vmax.f32 %v394, %v556
      %v575 = vmax.f32 %v395, %v557
      %s576 = scalar_lea.vmem %s219, 288
      %v577 = vld [vmem:[%s576] sm:$0xff]
      %v578 = vld [vmem:[%s576 + $0x8] sm:$0xff]
      %v579 = vld [vmem:[%s576 + $0x10] sm:$0xff]
      %v580 = vld [vmem:[%s576 + $0x18] sm:$0xff]
      %v581 = vld [vmem:[%s576 + $0x20] sm:$0xff]
      %v582 = vld [vmem:[%s576 + $0x28] sm:$0xff]
      %v583 = vld [vmem:[%s576 + $0x30] sm:$0xff]
      %v584 = vld [vmem:[%s576 + $0x38] sm:$0xff]
      %v585 = vld [vmem:[%s576 + $0x40] sm:$0xff]
      %v586 = vld [vmem:[%s576 + $0x48] sm:$0xff]
      %v587 = vld [vmem:[%s576 + $0x50] sm:$0xff]
      %v588 = vld [vmem:[%s576 + $0x58] sm:$0xff]
      %v589 = vld [vmem:[%s576 + $0x60] sm:$0xff]
      %v590 = vld [vmem:[%s576 + $0x68] sm:$0xff]
      %v591 = vld [vmem:[%s576 + $0x70] sm:$0xff]
      %v592 = vld [vmem:[%s576 + $0x78] sm:$0xff]
      %v593 = vld [vmem:[%s576 + $0x80] sm:$0xff]
      %v594 = vld [vmem:[%s576 + $0x88] sm:$0xff]
      %v596 = vsel %vm252, %v577, 0
      %v599 = vsel %vm252, %v578, 0
      %v602 = vsel %vm252, %v579, 0
      %v605 = vsel %vm252, %v580, 0
      %v608 = vsel %vm252, %v581, 0
      %v611 = vsel %vm252, %v582, 0
      %v614 = vsel %vm252, %v583, 0
      %v617 = vsel %vm252, %v584, 0
      %v620 = vsel %vm252, %v585, 0
      %v623 = vsel %vm252, %v586, 0
      %v626 = vsel %vm252, %v587, 0
      %v629 = vsel %vm252, %v588, 0
      %v632 = vsel %vm252, %v589, 0
      %v635 = vsel %vm252, %v590, 0
      %v638 = vsel %vm252, %v591, 0
      %v641 = vsel %vm252, %v592, 0
      %v644 = vsel %vm252, %v593, 0
      %v647 = vsel %vm252, %v594, 0
      %649 = vmatpush.msra.mxu0 0.0
      %650 = vmatpush.msra.mxu0 0.0
      %651 = vmatpush.msra.mxu0 0.0
      %652 = vmatpush.msra.mxu0 0.0
      %653 = vmatpush.msra.mxu0 0.0
      %654 = vmatpush.msra.mxu0 0.0
      %655 = vmatpush.msra.mxu0 0.0
      %656 = vmatpush.msra.mxu0 0.0
      %657 = vmatpush.msra.mxu0 0.0
      %658 = vmatpush.msra.mxu0 0.0
      %659 = vmatpush.msra.mxu0 0.0
      %660 = vmatpush.msra.mxu0 0.0
      %661 = vmatpush.msra.mxu0 %v229
      %662 = vmatpush.msra.mxu0 %v228
      %663 = vmatpush.msra.mxu0 %v227
      %664 = vmatpush.msra.mxu0 %v226
      %665 = vmatmul.f32.gmra.mxu0 %v596
      %v666 = vpop.f32.mrf.mxu0
      %v667 = vadd.f32 %v250, %v666
      %668 = vmatmul.f32.gmra.mxu0 %v599
      %v669 = vpop.f32.mrf.mxu0
      %v670 = vadd.f32 %v250, %v669
      %671 = vmatmul.f32.gmra.mxu0 %v602
      %v672 = vpop.f32.mrf.mxu0
      %v673 = vadd.f32 %v250, %v672
      %674 = vmatmul.f32.gmra.mxu0 %v605
      %v675 = vpop.f32.mrf.mxu0
      %v676 = vadd.f32 %v250, %v675
      %677 = vmatmul.f32.gmra.mxu0 %v608
      %v678 = vpop.f32.mrf.mxu0
      %v679 = vadd.f32 %v250, %v678
      %680 = vmatmul.f32.gmra.mxu0 %v611
      %v681 = vpop.f32.mrf.mxu0
      %v682 = vadd.f32 %v250, %v681
      %683 = vmatmul.f32.gmra.mxu0 %v614
      %v684 = vpop.f32.mrf.mxu0
      %v685 = vadd.f32 %v250, %v684
      %686 = vmatmul.f32.gmra.mxu0 %v617
      %v687 = vpop.f32.mrf.mxu0
      %v688 = vadd.f32 %v250, %v687
      %689 = vmatmul.f32.gmra.mxu0 %v620
      %v690 = vpop.f32.mrf.mxu0
      %v691 = vadd.f32 %v250, %v690
      %692 = vmatmul.f32.gmra.mxu0 %v623
      %v693 = vpop.f32.mrf.mxu0
      %v694 = vadd.f32 %v250, %v693
      %695 = vmatmul.f32.gmra.mxu0 %v626
      %v696 = vpop.f32.mrf.mxu0
      %v697 = vadd.f32 %v250, %v696
      %698 = vmatmul.f32.gmra.mxu0 %v629
      %v699 = vpop.f32.mrf.mxu0
      %v700 = vadd.f32 %v250, %v699
      %701 = vmatmul.f32.gmra.mxu0 %v632
      %v702 = vpop.f32.mrf.mxu0
      %v703 = vadd.f32 %v250, %v702
      %704 = vmatmul.f32.gmra.mxu0 %v635
      %v705 = vpop.f32.mrf.mxu0
      %v706 = vadd.f32 %v250, %v705
      %707 = vmatmul.f32.gmra.mxu0 %v638
      %v708 = vpop.f32.mrf.mxu0
      %v709 = vadd.f32 %v250, %v708
      %710 = vmatmul.f32.gmra.mxu0 %v641
      %v711 = vpop.f32.mrf.mxu0
      %v712 = vadd.f32 %v250, %v711
      %713 = vmatmul.f32.gmra.mxu0 %v644
      %v714 = vpop.f32.mrf.mxu0
      %v715 = vadd.f32 %v250, %v714
      %716 = vmatmul.f32.gmra.mxu0 %v647
      %v717 = vpop.f32.mrf.mxu0
      %v718 = vadd.f32 %v250, %v717
      %719 = vdwg.mxu0
      %v720 = vmax.f32 %v667, 0.0
      %v721 = vmax.f32 %v670, 0.0
      %v722 = vmax.f32 %v673, 0.0
      %v723 = vmax.f32 %v676, 0.0
      %v724 = vmax.f32 %v679, 0.0
      %v725 = vmax.f32 %v682, 0.0
      %v726 = vmax.f32 %v685, 0.0
      %v727 = vmax.f32 %v688, 0.0
      %v728 = vmax.f32 %v691, 0.0
      %v729 = vmax.f32 %v694, 0.0
      %v730 = vmax.f32 %v697, 0.0
      %v731 = vmax.f32 %v700, 0.0
      %v732 = vmax.f32 %v703, 0.0
      %v733 = vmax.f32 %v706, 0.0
      %v734 = vmax.f32 %v709, 0.0
      %v735 = vmax.f32 %v712, 0.0
      %v736 = vmax.f32 %v715, 0.0
      %v737 = vmax.f32 %v718, 0.0
      %v738 = vmax.f32 %v558, %v720
      %v739 = vmax.f32 %v559, %v721
      %v740 = vmax.f32 %v560, %v722
      %v741 = vmax.f32 %v561, %v723
      %v742 = vmax.f32 %v562, %v724
      %v743 = vmax.f32 %v563, %v725
      %v744 = vmax.f32 %v564, %v726
      %v745 = vmax.f32 %v565, %v727
      %v746 = vmax.f32 %v566, %v728
      %v747 = vmax.f32 %v567, %v729
      %v748 = vmax.f32 %v568, %v730
      %v749 = vmax.f32 %v569, %v731
      %v750 = vmax.f32 %v570, %v732
      %v751 = vmax.f32 %v571, %v733
      %v752 = vmax.f32 %v572, %v734
      %v753 = vmax.f32 %v573, %v735
      %v754 = vmax.f32 %v574, %v736
      %v755 = vmax.f32 %v575, %v737
      %s756 = scalar_lea.vmem %s219, 432
      %v757 = vld [vmem:[%s756] sm:$0xff]
      %v758 = vld [vmem:[%s756 + $0x8] sm:$0xff]
      %v759 = vld [vmem:[%s756 + $0x10] sm:$0xff]
      %v760 = vld [vmem:[%s756 + $0x18] sm:$0xff]
      %v761 = vld [vmem:[%s756 + $0x20] sm:$0xff]
      %v762 = vld [vmem:[%s756 + $0x28] sm:$0xff]
      %v763 = vld [vmem:[%s756 + $0x30] sm:$0xff]
      %v764 = vld [vmem:[%s756 + $0x38] sm:$0xff]
      %v765 = vld [vmem:[%s756 + $0x40] sm:$0xff]
      %v766 = vld [vmem:[%s756 + $0x48] sm:$0xff]
      %v767 = vld [vmem:[%s756 + $0x50] sm:$0xff]
      %v768 = vld [vmem:[%s756 + $0x58] sm:$0xff]
      %v769 = vld [vmem:[%s756 + $0x60] sm:$0xff]
      %v770 = vld [vmem:[%s756 + $0x68] sm:$0xff]
      %v771 = vld [vmem:[%s756 + $0x70] sm:$0xff]
      %v772 = vld [vmem:[%s756 + $0x78] sm:$0xff]
      %v773 = vld [vmem:[%s756 + $0x80] sm:$0xff]
      %v774 = vld [vmem:[%s756 + $0x88] sm:$0xff]
      %v776 = vsel %vm252, %v757, 0
      %v779 = vsel %vm252, %v758, 0
      %v782 = vsel %vm252, %v759, 0
      %v785 = vsel %vm252, %v760, 0
      %v788 = vsel %vm252, %v761, 0
      %v791 = vsel %vm252, %v762, 0
      %v794 = vsel %vm252, %v763, 0
      %v797 = vsel %vm252, %v764, 0
      %v800 = vsel %vm252, %v765, 0
      %v803 = vsel %vm252, %v766, 0
      %v806 = vsel %vm252, %v767, 0
      %v809 = vsel %vm252, %v768, 0
      %v812 = vsel %vm252, %v769, 0
      %v815 = vsel %vm252, %v770, 0
      %v818 = vsel %vm252, %v771, 0
      %v821 = vsel %vm252, %v772, 0
      %v824 = vsel %vm252, %v773, 0
      %v827 = vsel %vm252, %v774, 0
      %829 = vmatpush.msra.mxu0 0.0
      %830 = vmatpush.msra.mxu0 0.0
      %831 = vmatpush.msra.mxu0 0.0
      %832 = vmatpush.msra.mxu0 0.0
      %833 = vmatpush.msra.mxu0 0.0
      %834 = vmatpush.msra.mxu0 0.0
      %835 = vmatpush.msra.mxu0 0.0
      %836 = vmatpush.msra.mxu0 0.0
      %837 = vmatpush.msra.mxu0 0.0
      %838 = vmatpush.msra.mxu0 0.0
      %839 = vmatpush.msra.mxu0 0.0
      %840 = vmatpush.msra.mxu0 0.0
      %841 = vmatpush.msra.mxu0 %v229
      %842 = vmatpush.msra.mxu0 %v228
      %843 = vmatpush.msra.mxu0 %v227
      %844 = vmatpush.msra.mxu0 %v226
      %845 = vmatmul.f32.gmra.mxu0 %v776
      %v846 = vpop.f32.mrf.mxu0
      %v847 = vadd.f32 %v250, %v846
      %848 = vmatmul.f32.gmra.mxu0 %v779
      %v849 = vpop.f32.mrf.mxu0
      %v850 = vadd.f32 %v250, %v849
      %851 = vmatmul.f32.gmra.mxu0 %v782
      %v852 = vpop.f32.mrf.mxu0
      %v853 = vadd.f32 %v250, %v852
      %854 = vmatmul.f32.gmra.mxu0 %v785
      %v855 = vpop.f32.mrf.mxu0
      %v856 = vadd.f32 %v250, %v855
      %857 = vmatmul.f32.gmra.mxu0 %v788
      %v858 = vpop.f32.mrf.mxu0
      %v859 = vadd.f32 %v250, %v858
      %860 = vmatmul.f32.gmra.mxu0 %v791
      %v861 = vpop.f32.mrf.mxu0
      %v862 = vadd.f32 %v250, %v861
      %863 = vmatmul.f32.gmra.mxu0 %v794
      %v864 = vpop.f32.mrf.mxu0
      %v865 = vadd.f32 %v250, %v864
      %866 = vmatmul.f32.gmra.mxu0 %v797
      %v867 = vpop.f32.mrf.mxu0
      %v868 = vadd.f32 %v250, %v867
      %869 = vmatmul.f32.gmra.mxu0 %v800
      %v870 = vpop.f32.mrf.mxu0
      %v871 = vadd.f32 %v250, %v870
      %872 = vmatmul.f32.gmra.mxu0 %v803
      %v873 = vpop.f32.mrf.mxu0
      %v874 = vadd.f32 %v250, %v873
      %875 = vmatmul.f32.gmra.mxu0 %v806
      %v876 = vpop.f32.mrf.mxu0
      %v877 = vadd.f32 %v250, %v876
      %878 = vmatmul.f32.gmra.mxu0 %v809
      %v879 = vpop.f32.mrf.mxu0
      %v880 = vadd.f32 %v250, %v879
      %881 = vmatmul.f32.gmra.mxu0 %v812
      %v882 = vpop.f32.mrf.mxu0
      %v883 = vadd.f32 %v250, %v882
      %884 = vmatmul.f32.gmra.mxu0 %v815
      %v885 = vpop.f32.mrf.mxu0
      %v886 = vadd.f32 %v250, %v885
      %887 = vmatmul.f32.gmra.mxu0 %v818
      %v888 = vpop.f32.mrf.mxu0
      %v889 = vadd.f32 %v250, %v888
      %890 = vmatmul.f32.gmra.mxu0 %v821
      %v891 = vpop.f32.mrf.mxu0
      %v892 = vadd.f32 %v250, %v891
      %893 = vmatmul.f32.gmra.mxu0 %v824
      %v894 = vpop.f32.mrf.mxu0
      %v895 = vadd.f32 %v250, %v894
      %896 = vmatmul.f32.gmra.mxu0 %v827
      %v897 = vpop.f32.mrf.mxu0
      %v898 = vadd.f32 %v250, %v897
      %899 = vdwg.mxu0
      %v900 = vmax.f32 %v847, 0.0
      %v901 = vmax.f32 %v850, 0.0
      %v902 = vmax.f32 %v853, 0.0
      %v903 = vmax.f32 %v856, 0.0
      %v904 = vmax.f32 %v859, 0.0
      %v905 = vmax.f32 %v862, 0.0
      %v906 = vmax.f32 %v865, 0.0
      %v907 = vmax.f32 %v868, 0.0
      %v908 = vmax.f32 %v871, 0.0
      %v909 = vmax.f32 %v874, 0.0
      %v910 = vmax.f32 %v877, 0.0
      %v911 = vmax.f32 %v880, 0.0
      %v912 = vmax.f32 %v883, 0.0
      %v913 = vmax.f32 %v886, 0.0
      %v914 = vmax.f32 %v889, 0.0
      %v915 = vmax.f32 %v892, 0.0
      %v916 = vmax.f32 %v895, 0.0
      %v917 = vmax.f32 %v898, 0.0
      %v918 = vmax.f32 %v738, %v900
      %v919 = vmax.f32 %v739, %v901
      %v920 = vmax.f32 %v740, %v902
      %v921 = vmax.f32 %v741, %v903
      %v922 = vmax.f32 %v742, %v904
      %v923 = vmax.f32 %v743, %v905
      %v924 = vmax.f32 %v744, %v906
      %v925 = vmax.f32 %v745, %v907
      %v926 = vmax.f32 %v746, %v908
      %v927 = vmax.f32 %v747, %v909
      %v928 = vmax.f32 %v748, %v910
      %v929 = vmax.f32 %v749, %v911
      %v930 = vmax.f32 %v750, %v912
      %v931 = vmax.f32 %v751, %v913
      %v932 = vmax.f32 %v752, %v914
      %v933 = vmax.f32 %v753, %v915
      %v934 = vmax.f32 %v754, %v916
      %v935 = vmax.f32 %v755, %v917
      %v936 = vld [vmem:[%s3] sm:$0xf]
      %v937 = vld [vmem:[%s3 + $0x4] sm:$0xf]
      %v938 = vld [vmem:[%s3 + $0x8] sm:$0xf]
      %v939 = vld [vmem:[%s3 + $0xc] sm:$0xf]
      %v940 = vld [vmem:[%s3 + $0x10] sm:$0xf]
      %v941 = vld [vmem:[%s3 + $0x14] sm:$0xf]
      %v942 = vld [vmem:[%s3 + $0x18] sm:$0xf]
      %v943 = vld [vmem:[%s3 + $0x1c] sm:$0xf]
      %v944 = vld [vmem:[%s3 + $0x20] sm:$0xf]
      %v945 = vld [vmem:[%s3 + $0x24] sm:$0xf]
      %v946 = vld [vmem:[%s3 + $0x28] sm:$0xf]
      %v947 = vld [vmem:[%s3 + $0x2c] sm:$0xf]
      %v948 = vld [vmem:[%s3 + $0x30] sm:$0xf]
      %v949 = vld [vmem:[%s3 + $0x34] sm:$0xf]
      %v950 = vld [vmem:[%s3 + $0x38] sm:$0xf]
      %v951 = vld [vmem:[%s3 + $0x3c] sm:$0xf]
      %v952 = vld [vmem:[%s3 + $0x40] sm:$0xf]
      %v953 = vld [vmem:[%s3 + $0x44] sm:$0xf]
      %v954 = vld [vmem:[%s3 + $0x48] sm:$0xf]
      %v955 = vld [vmem:[%s3 + $0x4c] sm:$0xf]
      %v956 = vld [vmem:[%s3 + $0x50] sm:$0xf]
      %v957 = vld [vmem:[%s3 + $0x54] sm:$0xf]
      %v958 = vld [vmem:[%s3 + $0x58] sm:$0xf]
      %v959 = vld [vmem:[%s3 + $0x5c] sm:$0xf]
      %v960 = vld [vmem:[%s3 + $0x60] sm:$0xf]
      %v961 = vld [vmem:[%s3 + $0x64] sm:$0xf]
      %v962 = vld [vmem:[%s3 + $0x68] sm:$0xf]
      %v963 = vld [vmem:[%s3 + $0x6c] sm:$0xf]
      %v964 = vld [vmem:[%s3 + $0x70] sm:$0xf]
      %v965 = vld [vmem:[%s3 + $0x74] sm:$0xf]
      %v966 = vld [vmem:[%s3 + $0x78] sm:$0xf]
      %v967 = vld [vmem:[%s3 + $0x7c] sm:$0xf]
      %v968 = vld [vmem:[%s3 + $0x80] sm:$0xf]
      %v969 = vld [vmem:[%s3 + $0x84] sm:$0xf]
      %v970 = vld [vmem:[%s3 + $0x88] sm:$0xf]
      %v971 = vld [vmem:[%s3 + $0x8c] sm:$0xf]
      %v972 = vld [vmem:[%s3 + $0x90] sm:$0xf]
      %v973 = vld [vmem:[%s3 + $0x94] sm:$0xf]
      %v974 = vld [vmem:[%s3 + $0x98] sm:$0xf]
      %v975 = vld [vmem:[%s3 + $0x9c] sm:$0xf]
      %v976 = vld [vmem:[%s3 + $0xa0] sm:$0xf]
      %v977 = vld [vmem:[%s3 + $0xa4] sm:$0xf]
      %v978 = vld [vmem:[%s3 + $0xa8] sm:$0xf]
      %v979 = vld [vmem:[%s3 + $0xac] sm:$0xf]
      %v980 = vld [vmem:[%s3 + $0xb0] sm:$0xf]
      %v981 = vld [vmem:[%s3 + $0xb4] sm:$0xf]
      %v982 = vld [vmem:[%s3 + $0xb8] sm:$0xf]
      %v983 = vld [vmem:[%s3 + $0xbc] sm:$0xf]
      %v984 = vld [vmem:[%s3 + $0xc0] sm:$0xf]
      %v985 = vld [vmem:[%s3 + $0xc4] sm:$0xf]
      %v986 = vld [vmem:[%s3 + $0xc8] sm:$0xf]
      %v987 = vld [vmem:[%s3 + $0xcc] sm:$0xf]
      %v988 = vld [vmem:[%s3 + $0xd0] sm:$0xf]
      %v989 = vld [vmem:[%s3 + $0xd4] sm:$0xf]
      %v990 = vld [vmem:[%s3 + $0xd8] sm:$0xf]
      %v991 = vld [vmem:[%s3 + $0xdc] sm:$0xf]
      %v992 = vld [vmem:[%s3 + $0xe0] sm:$0xf]
      %v993 = vld [vmem:[%s3 + $0xe4] sm:$0xf]
      %v994 = vld [vmem:[%s3 + $0xe8] sm:$0xf]
      %v995 = vld [vmem:[%s3 + $0xec] sm:$0xf]
      %v996 = vld [vmem:[%s3 + $0xf0] sm:$0xf]
      %v997 = vld [vmem:[%s3 + $0xf4] sm:$0xf]
      %v998 = vld [vmem:[%s3 + $0xf8] sm:$0xf]
      %v999 = vld [vmem:[%s3 + $0xfc] sm:$0xf]
      %v1000 = vld [vmem:[%s3 + $0x100] sm:$0xf]
      %v1001 = vld [vmem:[%s3 + $0x104] sm:$0xf]
      %v1002 = vld [vmem:[%s3 + $0x108] sm:$0xf]
      %v1003 = vld [vmem:[%s3 + $0x10c] sm:$0xf]
      %v1004 = vld [vmem:[%s3 + $0x110] sm:$0xf]
      %v1005 = vld [vmem:[%s3 + $0x114] sm:$0xf]
      %v1006 = vld [vmem:[%s3 + $0x118] sm:$0xf]
      %v1007 = vld [vmem:[%s3 + $0x11c] sm:$0xf]
      %v1008 = vld [vmem:[%s3 + $0x120] sm:$0xf]
      %v1009 = vld [vmem:[%s3 + $0x124] sm:$0xf]
      %v1010 = vld [vmem:[%s3 + $0x128] sm:$0xf]
      %v1011 = vld [vmem:[%s3 + $0x12c] sm:$0xf]
      %v1012 = vld [vmem:[%s3 + $0x130] sm:$0xf]
      %v1013 = vld [vmem:[%s3 + $0x134] sm:$0xf]
      %v1014 = vld [vmem:[%s3 + $0x138] sm:$0xf]
      %v1015 = vld [vmem:[%s3 + $0x13c] sm:$0xf]
      %v1016 = vld [vmem:[%s3 + $0x140] sm:$0xf]
      %v1017 = vld [vmem:[%s3 + $0x144] sm:$0xf]
      %v1018 = vld [vmem:[%s3 + $0x148] sm:$0xf]
      %v1019 = vld [vmem:[%s3 + $0x14c] sm:$0xf]
      %v1020 = vld [vmem:[%s3 + $0x150] sm:$0xf]
      %v1021 = vld [vmem:[%s3 + $0x154] sm:$0xf]
      %v1022 = vld [vmem:[%s3 + $0x158] sm:$0xf]
      %v1023 = vld [vmem:[%s3 + $0x15c] sm:$0xf]
      %v1024 = vld [vmem:[%s3 + $0x160] sm:$0xf]
      %v1025 = vld [vmem:[%s3 + $0x164] sm:$0xf]
      %v1026 = vld [vmem:[%s3 + $0x168] sm:$0xf]
      %v1027 = vld [vmem:[%s3 + $0x16c] sm:$0xf]
      %v1028 = vld [vmem:[%s3 + $0x170] sm:$0xf]
      %v1029 = vld [vmem:[%s3 + $0x174] sm:$0xf]
      %v1030 = vld [vmem:[%s3 + $0x178] sm:$0xf]
      %v1031 = vld [vmem:[%s3 + $0x17c] sm:$0xf]
      %v1032 = vld [vmem:[%s3 + $0x180] sm:$0xf]
      %v1033 = vld [vmem:[%s3 + $0x184] sm:$0xf]
      %v1034 = vld [vmem:[%s3 + $0x188] sm:$0xf]
      %v1035 = vld [vmem:[%s3 + $0x18c] sm:$0xf]
      %v1036 = vld [vmem:[%s4] sm:$0x1]
      %vm1039 = vcmask 1046528
      %v1040 = vrot.slane %v918, 1
      %v1041 = vrot.slane %v919, 1
      %v1042 = vsel %vm1039, %v1040, %v1041
      %1043 = vrot.lane.b32.xlu0 %v1042, 32
      %v1044 = vpop.permute.xlu0 %1043
      %vm1046 = vcmask 1045504
      %v1047 = vrot.slane %v918, 2
      %v1048 = vrot.slane %v919, 2
      %v1049 = vsel %vm1046, %v1047, %v1048
      %1050 = vrot.lane.b32.xlu0 %v1049, 64
      %v1051 = vpop.permute.xlu0 %1050
      %vm1053 = vcmask 1044480
      %v1054 = vrot.slane %v918, 3
      %v1055 = vrot.slane %v919, 3
      %v1056 = vsel %vm1053, %v1054, %v1055
      %1057 = vrot.lane.b32.xlu0 %v1056, 96
      %v1058 = vpop.permute.xlu0 %1057
      %vm1060 = vcmask 1043456
      %v1061 = vrot.slane %v918, 4
      %v1062 = vrot.slane %v919, 4
      %v1063 = vsel %vm1060, %v1061, %v1062
      %v1066 = vrot.slane %v920, 4
      %v1067 = vsel %vm1060, %v1062, %v1066
      %1068 = vrot.lane.b32.xlu0 %v1067, 32
      %v1069 = vpop.permute.xlu0 %1068
      %vm1071 = vcmask 1042432
      %v1072 = vrot.slane %v919, 5
      %v1073 = vrot.slane %v920, 5
      %v1074 = vsel %vm1071, %v1072, %v1073
      %1075 = vrot.lane.b32.xlu0 %v1074, 64
      %v1076 = vpop.permute.xlu0 %1075
      %vm1078 = vcmask 1041408
      %v1079 = vrot.slane %v919, 6
      %v1080 = vrot.slane %v920, 6
      %v1081 = vsel %vm1078, %v1079, %v1080
      %1082 = vrot.lane.b32.xlu0 %v1081, 96
      %v1083 = vpop.permute.xlu0 %1082
      %vm1085 = vcmask 1040384
      %v1086 = vrot.slane %v919, 7
      %v1087 = vrot.slane %v920, 7
      %v1088 = vsel %vm1085, %v1086, %v1087
      %1090 = vrot.lane.b32.xlu0 %v920, 32
      %v1091 = vpop.permute.xlu0 %1090
      %1094 = vrot.lane.b32.xlu0 %v921, 64
      %v1095 = vpop.permute.xlu0 %1094
      %v1098 = vrot.slane %v921, 1
      %v1099 = vrot.slane %v922, 1
      %v1100 = vsel %vm1039, %v1098, %v1099
      %1101 = vrot.lane.b32.xlu0 %v1100, 96
      %v1102 = vpop.permute.xlu0 %1101
      %v1104 = vrot.slane %v921, 2
      %v1105 = vrot.slane %v922, 2
      %v1106 = vsel %vm1046, %v1104, %v1105
      %v1108 = vrot.slane %v921, 3
      %v1109 = vrot.slane %v922, 3
      %v1110 = vsel %vm1053, %v1108, %v1109
      %1111 = vrot.lane.b32.xlu0 %v1110, 32
      %v1112 = vpop.permute.xlu0 %1111
      %v1114 = vrot.slane %v921, 4
      %v1115 = vrot.slane %v922, 4
      %v1116 = vsel %vm1060, %v1114, %v1115
      %1117 = vrot.lane.b32.xlu0 %v1116, 64
      %v1118 = vpop.permute.xlu0 %1117
      %v1121 = vrot.slane %v923, 4
      %v1122 = vsel %vm1060, %v1115, %v1121
      %1123 = vrot.lane.b32.xlu0 %v1122, 96
      %v1124 = vpop.permute.xlu0 %1123
      %v1126 = vsel %vm252, %v918, %v1044
      %vm1127 = vcmask 523264
      %v1128 = vsel %vm1127, %v1126, %v1051
      %vm1129 = vcmask 785408
      %v1130 = vsel %vm1129, %v1128, %v1058
      %v1131 = vsel %vm252, %v1063, %v1069
      %v1132 = vsel %vm1127, %v1131, %v1076
      %v1133 = vsel %vm1129, %v1132, %v1083
      %v1134 = vsel %vm252, %v1088, %v1091
      %v1135 = vsel %vm1127, %v1134, %v1095
      %v1136 = vsel %vm1129, %v1135, %v1102
      %v1137 = vsel %vm252, %v1106, %v1112
      %v1138 = vsel %vm1127, %v1137, %v1118
      %v1139 = vsel %vm1129, %v1138, %v1124
      %v1140 = vrot.slane %v923, 1
      %v1141 = vsel %vm1039, %v1099, %v1140
      %1142 = vrot.lane.b32.xlu0 %v1141, 32
      %v1143 = vpop.permute.xlu0 %1142
      %1144 = vrot.lane.b32.xlu0 %v1140, 32
      %v1145 = vpop.permute.xlu0 %1144
      %v1148 = vrot.slane %v923, 2
      %v1149 = vsel %vm1046, %v1105, %v1148
      %1150 = vrot.lane.b32.xlu0 %v1149, 64
      %v1151 = vpop.permute.xlu0 %1150
      %1152 = vrot.lane.b32.xlu0 %v1148, 64
      %v1153 = vpop.permute.xlu0 %1152
      %v1156 = vrot.slane %v923, 3
      %1157 = vrot.lane.b32.xlu0 %v1156, 96
      %v1158 = vpop.permute.xlu0 %1157
      %v1161 = vrot.slane %v924, 3
      %v1164 = vrot.slane %v924, 4
      %v1165 = vrot.slane %v925, 4
      %v1166 = vsel %vm1060, %v1164, %v1165
      %1167 = vrot.lane.b32.xlu0 %v1164, 32
      %v1168 = vpop.permute.xlu0 %1167
      %1169 = vrot.lane.b32.xlu0 %v1166, 32
      %v1170 = vpop.permute.xlu0 %1169
      %v1173 = vrot.slane %v924, 5
      %v1174 = vrot.slane %v925, 5
      %v1175 = vsel %vm1071, %v1173, %v1174
      %1176 = vrot.lane.b32.xlu0 %v1173, 64
      %v1177 = vpop.permute.xlu0 %1176
      %1178 = vrot.lane.b32.xlu0 %v1175, 64
      %v1179 = vpop.permute.xlu0 %1178
      %v1182 = vrot.slane %v924, 6
      %v1183 = vrot.slane %v925, 6
      %v1184 = vsel %vm1078, %v1182, %v1183
      %1185 = vrot.lane.b32.xlu0 %v1182, 96
      %v1186 = vpop.permute.xlu0 %1185
      %1187 = vrot.lane.b32.xlu0 %v1184, 96
      %v1188 = vpop.permute.xlu0 %1187
      %v1191 = vrot.slane %v924, 7
      %v1192 = vrot.slane %v925, 7
      %v1193 = vsel %vm1085, %v1191, %v1192
      %v1194 = vsel %vm252, %v922, %v1143
      %v1195 = vsel %vm252, %v923, %v1145
      %v1196 = vsel %vm1127, %v1194, %v1151
      %v1197 = vsel %vm1127, %v1195, %v1153
      %v1198 = vsel %vm1129, %v1196, %v1158
      %v1199 = vsel %vm1129, %v1197, %v1158
      %v1200 = vsel %vm252, %v1161, %v1168
      %v1201 = vsel %vm252, %v1161, %v1170
      %v1202 = vsel %vm1127, %v1200, %v1177
      %v1203 = vsel %vm1127, %v1201, %v1179
      %v1204 = vsel %vm1129, %v1202, %v1186
      %v1205 = vsel %vm1129, %v1203, %v1188
      %v1210 = vrot.slane %v1198, 5
      %v1211 = vrot.slane %v1199, 5
      %v1212 = vsel %vm1071, %v1210, %v1211
      %v1213 = vrot.slane %v1204, 5
      %v1214 = vrot.slane %v1205, 5
      %v1215 = vsel %vm1071, %v1213, %v1214
      %v1216 = vrot.slane %v1191, 5
      %v1217 = vrot.slane %v1193, 5
      %v1218 = vsel %vm1071, %v1216, %v1217
      %v1222 = vpack.c.bf16 %v1130, %v1130
      %v1223 = vpack.c.bf16 %v1133, %v1133
      %v1224 = vpack.c.bf16 %v1136, %v1136
      %v1225 = vpack.c.bf16 %v1139, %v1139
      %v1226 = vpack.c.bf16 %v1212, %v1212
      %v1227 = vpack.c.bf16 %v1215, %v1215
      %v1228 = vpack.c.bf16 %v1218, %v1218
      %v1230 = vperm.slane %v1036, 0
      %v1332 = vunpack.c.l.b16 %v936
      %v1333 = vunpack.c.l.b16 %v937
      %v1334 = vunpack.c.l.b16 %v938
      %v1335 = vunpack.c.l.b16 %v939
      %v1336 = vunpack.c.l.b16 %v940
      %v1337 = vunpack.c.l.b16 %v941
      %v1338 = vunpack.c.l.b16 %v942
      %v1339 = vunpack.c.l.b16 %v943
      %v1340 = vunpack.c.l.b16 %v944
      %v1341 = vunpack.c.l.b16 %v945
      %v1342 = vunpack.c.l.b16 %v946
      %v1343 = vunpack.c.l.b16 %v947
      %v1344 = vunpack.c.l.b16 %v948
      %v1345 = vunpack.c.l.b16 %v949
      %v1346 = vunpack.c.l.b16 %v950
      %v1347 = vunpack.c.l.b16 %v951
      %v1348 = vunpack.c.l.b16 %v952
      %v1349 = vunpack.c.l.b16 %v953
      %v1350 = vunpack.c.l.b16 %v954
      %v1351 = vunpack.c.l.b16 %v955
      %v1352 = vunpack.c.l.b16 %v956
      %v1353 = vunpack.c.l.b16 %v957
      %v1354 = vunpack.c.l.b16 %v958
      %v1355 = vunpack.c.l.b16 %v959
      %v1356 = vunpack.c.l.b16 %v960
      %v1357 = vunpack.c.l.b16 %v961
      %v1358 = vunpack.c.l.b16 %v962
      %v1359 = vunpack.c.l.b16 %v963
      %v1360 = vunpack.c.l.b16 %v964
      %v1361 = vunpack.c.l.b16 %v965
      %v1362 = vunpack.c.l.b16 %v966
      %v1363 = vunpack.c.l.b16 %v967
      %v1364 = vunpack.c.l.b16 %v968
      %v1365 = vunpack.c.l.b16 %v969
      %v1366 = vunpack.c.l.b16 %v970
      %v1367 = vunpack.c.l.b16 %v971
      %v1368 = vunpack.c.l.b16 %v972
      %v1369 = vunpack.c.l.b16 %v973
      %v1370 = vunpack.c.l.b16 %v974
      %v1371 = vunpack.c.l.b16 %v975
      %v1372 = vunpack.c.l.b16 %v976
      %v1373 = vunpack.c.l.b16 %v977
      %v1374 = vunpack.c.l.b16 %v978
      %v1375 = vunpack.c.l.b16 %v979
      %v1376 = vunpack.c.l.b16 %v980
      %v1377 = vunpack.c.l.b16 %v981
      %v1378 = vunpack.c.l.b16 %v982
      %v1379 = vunpack.c.l.b16 %v983
      %v1380 = vunpack.c.l.b16 %v984
      %v1381 = vunpack.c.l.b16 %v985
      %v1382 = vunpack.c.l.b16 %v986
      %v1383 = vunpack.c.l.b16 %v987
      %v1384 = vunpack.c.l.b16 %v988
      %v1385 = vunpack.c.l.b16 %v989
      %v1386 = vunpack.c.l.b16 %v990
      %v1387 = vunpack.c.l.b16 %v991
      %v1388 = vunpack.c.l.b16 %v992
      %v1389 = vunpack.c.l.b16 %v993
      %v1390 = vunpack.c.l.b16 %v994
      %v1391 = vunpack.c.l.b16 %v995
      %v1392 = vunpack.c.l.b16 %v996
      %v1393 = vunpack.c.l.b16 %v997
      %v1394 = vunpack.c.l.b16 %v998
      %v1395 = vunpack.c.l.b16 %v999
      %v1396 = vunpack.c.l.b16 %v1000
      %v1397 = vunpack.c.l.b16 %v1001
      %v1398 = vunpack.c.l.b16 %v1002
      %v1399 = vunpack.c.l.b16 %v1003
      %v1400 = vunpack.c.l.b16 %v1004
      %v1401 = vunpack.c.l.b16 %v1005
      %v1402 = vunpack.c.l.b16 %v1006
      %v1403 = vunpack.c.l.b16 %v1007
      %v1404 = vunpack.c.l.b16 %v1008
      %v1405 = vunpack.c.l.b16 %v1009
      %v1406 = vunpack.c.l.b16 %v1010
      %v1407 = vunpack.c.l.b16 %v1011
      %v1408 = vunpack.c.l.b16 %v1012
      %v1409 = vunpack.c.l.b16 %v1013
      %v1410 = vunpack.c.l.b16 %v1014
      %v1411 = vunpack.c.l.b16 %v1015
      %v1412 = vunpack.c.l.b16 %v1016
      %v1413 = vunpack.c.l.b16 %v1017
      %v1414 = vunpack.c.l.b16 %v1018
      %v1415 = vunpack.c.l.b16 %v1019
      %v1416 = vunpack.c.l.b16 %v1020
      %v1417 = vunpack.c.l.b16 %v1021
      %v1418 = vunpack.c.l.b16 %v1022
      %v1419 = vunpack.c.l.b16 %v1023
      %v1420 = vunpack.c.l.b16 %v1024
      %v1421 = vunpack.c.l.b16 %v1025
      %v1422 = vunpack.c.l.b16 %v1026
      %v1423 = vunpack.c.l.b16 %v1027
      %v1424 = vunpack.c.l.b16 %v1028
      %v1425 = vunpack.c.l.b16 %v1029
      %v1426 = vunpack.c.l.b16 %v1030
      %v1427 = vunpack.c.l.b16 %v1031
      %v1428 = vunpack.c.l.b16 %v1032
      %v1429 = vunpack.c.l.b16 %v1033
      %v1430 = vunpack.c.l.b16 %v1034
      %v1431 = vunpack.c.l.b16 %v1035
      %v1432 = vpack.c.b16 %v1333, %v1332
      %v1433 = vpack.c.b16 %v1335, %v1334
      %v1434 = vpack.c.b16 %v1337, %v1336
      %v1435 = vpack.c.b16 %v1339, %v1338
      %v1436 = vpack.c.b16 %v1341, %v1340
      %v1437 = vpack.c.b16 %v1343, %v1342
      %v1438 = vpack.c.b16 %v1345, %v1344
      %v1439 = vpack.c.b16 %v1347, %v1346
      %v1440 = vpack.c.b16 %v1349, %v1348
      %v1441 = vpack.c.b16 %v1351, %v1350
      %v1442 = vpack.c.b16 %v1353, %v1352
      %v1443 = vpack.c.b16 %v1355, %v1354
      %v1444 = vpack.c.b16 %v1357, %v1356
      %v1445 = vpack.c.b16 %v1359, %v1358
      %v1446 = vpack.c.b16 %v1361, %v1360
      %v1447 = vpack.c.b16 %v1363, %v1362
      %v1448 = vpack.c.b16 %v1365, %v1364
      %v1449 = vpack.c.b16 %v1367, %v1366
      %v1450 = vpack.c.b16 %v1369, %v1368
      %v1451 = vpack.c.b16 %v1371, %v1370
      %v1452 = vpack.c.b16 %v1373, %v1372
      %v1453 = vpack.c.b16 %v1375, %v1374
      %v1454 = vpack.c.b16 %v1377, %v1376
      %v1455 = vpack.c.b16 %v1379, %v1378
      %v1456 = vpack.c.b16 %v1381, %v1380
      %v1457 = vpack.c.b16 %v1383, %v1382
      %v1458 = vpack.c.b16 %v1385, %v1384
      %v1459 = vpack.c.b16 %v1387, %v1386
      %v1460 = vpack.c.b16 %v1389, %v1388
      %v1461 = vpack.c.b16 %v1391, %v1390
      %v1462 = vpack.c.b16 %v1393, %v1392
      %v1463 = vpack.c.b16 %v1395, %v1394
      %v1464 = vpack.c.b16 %v1397, %v1396
      %v1465 = vpack.c.b16 %v1399, %v1398
      %v1466 = vpack.c.b16 %v1401, %v1400
      %v1467 = vpack.c.b16 %v1403, %v1402
      %v1468 = vpack.c.b16 %v1405, %v1404
      %v1469 = vpack.c.b16 %v1407, %v1406
      %v1470 = vpack.c.b16 %v1409, %v1408
      %v1471 = vpack.c.b16 %v1411, %v1410
      %v1472 = vpack.c.b16 %v1413, %v1412
      %v1473 = vpack.c.b16 %v1415, %v1414
      %v1474 = vpack.c.b16 %v1417, %v1416
      %v1475 = vpack.c.b16 %v1419, %v1418
      %v1476 = vpack.c.b16 %v1421, %v1420
      %v1477 = vpack.c.b16 %v1423, %v1422
      %v1478 = vpack.c.b16 %v1425, %v1424
      %v1479 = vpack.c.b16 %v1427, %v1426
      %v1480 = vpack.c.b16 %v1429, %v1428
      %v1481 = vpack.c.b16 %v1431, %v1430
      %v1533 = vsel %vm252, %v1228, 0
      %1535 = vmatpush.bf16.msra.mxu0 %v1439
      %1536 = vmatpush.bf16.msra.mxu0 %v1438
      %1537 = vmatpush.bf16.msra.mxu0 %v1437
      %1538 = vmatpush.bf16.msra.mxu0 %v1436
      %1539 = vmatpush.bf16.msra.mxu0 %v1435
      %1540 = vmatpush.bf16.msra.mxu0 %v1434
      %1541 = vmatpush.bf16.msra.mxu0 %v1433
      %1542 = vmatpush.bf16.msra.mxu0 %v1432
      %1543 = vmatmul.bf16.gmra.mxu0 %v1222
      %v1544 = vpop.f32.mrf.mxu0
      %v1545 = vadd.f32 %v1230, %v1544
      %v1546 = vpop.f32.mrf.mxu0
      %1547 = vdwg.mxu0
      %1548 = vmatpush.bf16.msra.mxu0 %v1447
      %1549 = vmatpush.bf16.msra.mxu0 %v1446
      %1550 = vmatpush.bf16.msra.mxu0 %v1445
      %1551 = vmatpush.bf16.msra.mxu0 %v1444
      %1552 = vmatpush.bf16.msra.mxu0 %v1443
      %1553 = vmatpush.bf16.msra.mxu0 %v1442
      %1554 = vmatpush.bf16.msra.mxu0 %v1441
      %1555 = vmatpush.bf16.msra.mxu0 %v1440
      %1556 = vmatmul.bf16.gmra.mxu0 %v1223
      %v1557 = vpop.f32.mrf.mxu0
      %v1558 = vadd.f32 %v1545, %v1557
      %v1559 = vpop.f32.mrf.mxu0
      %1560 = vdwg.mxu0
      %1561 = vmatpush.bf16.msra.mxu0 %v1455
      %1562 = vmatpush.bf16.msra.mxu0 %v1454
      %1563 = vmatpush.bf16.msra.mxu0 %v1453
      %1564 = vmatpush.bf16.msra.mxu0 %v1452
      %1565 = vmatpush.bf16.msra.mxu0 %v1451
      %1566 = vmatpush.bf16.msra.mxu0 %v1450
      %1567 = vmatpush.bf16.msra.mxu0 %v1449
      %1568 = vmatpush.bf16.msra.mxu0 %v1448
      %1569 = vmatmul.bf16.gmra.mxu0 %v1224
      %v1570 = vpop.f32.mrf.mxu0
      %v1571 = vadd.f32 %v1558, %v1570
      %v1572 = vpop.f32.mrf.mxu0
      %1573 = vdwg.mxu0
      %1574 = vmatpush.bf16.msra.mxu0 %v1463
      %1575 = vmatpush.bf16.msra.mxu0 %v1462
      %1576 = vmatpush.bf16.msra.mxu0 %v1461
      %1577 = vmatpush.bf16.msra.mxu0 %v1460
      %1578 = vmatpush.bf16.msra.mxu0 %v1459
      %1579 = vmatpush.bf16.msra.mxu0 %v1458
      %1580 = vmatpush.bf16.msra.mxu0 %v1457
      %1581 = vmatpush.bf16.msra.mxu0 %v1456
      %1582 = vmatmul.bf16.gmra.mxu0 %v1225
      %v1583 = vpop.f32.mrf.mxu0
      %v1584 = vadd.f32 %v1571, %v1583
      %v1585 = vpop.f32.mrf.mxu0
      %1586 = vdwg.mxu0
      %1587 = vmatpush.bf16.msra.mxu0 %v1471
      %1588 = vmatpush.bf16.msra.mxu0 %v1470
      %1589 = vmatpush.bf16.msra.mxu0 %v1469
      %1590 = vmatpush.bf16.msra.mxu0 %v1468
      %1591 = vmatpush.bf16.msra.mxu0 %v1467
      %1592 = vmatpush.bf16.msra.mxu0 %v1466
      %1593 = vmatpush.bf16.msra.mxu0 %v1465
      %1594 = vmatpush.bf16.msra.mxu0 %v1464
      %1595 = vmatmul.bf16.gmra.mxu0 %v1226
      %v1596 = vpop.f32.mrf.mxu0
      %v1597 = vadd.f32 %v1584, %v1596
      %v1598 = vpop.f32.mrf.mxu0
      %1599 = vdwg.mxu0
      %1600 = vmatpush.bf16.msra.mxu0 %v1479
      %1601 = vmatpush.bf16.msra.mxu0 %v1478
      %1602 = vmatpush.bf16.msra.mxu0 %v1477
      %1603 = vmatpush.bf16.msra.mxu0 %v1476
      %1604 = vmatpush.bf16.msra.mxu0 %v1475
      %1605 = vmatpush.bf16.msra.mxu0 %v1474
      %1606 = vmatpush.bf16.msra.mxu0 %v1473
      %1607 = vmatpush.bf16.msra.mxu0 %v1472
      %1608 = vmatmul.bf16.gmra.mxu0 %v1227
      %v1609 = vpop.f32.mrf.mxu0
      %v1610 = vadd.f32 %v1597, %v1609
      %v1611 = vpop.f32.mrf.mxu0
      %1612 = vdwg.mxu0
      %1613 = vmatpush.bf16.msra.mxu0 0
      %1614 = vmatpush.bf16.msra.mxu0 0
      %1615 = vmatpush.bf16.msra.mxu0 0
      %1616 = vmatpush.bf16.msra.mxu0 0
      %1617 = vmatpush.bf16.msra.mxu0 0
      %1618 = vmatpush.bf16.msra.mxu0 0
      %1619 = vmatpush.bf16.msra.mxu0 %v1481
      %1620 = vmatpush.bf16.msra.mxu0 %v1480
      %1621 = vmatmul.bf16.gmra.mxu0 %v1533
      %v1622 = vpop.f32.mrf.mxu0
      %v1623 = vadd.f32 %v1610, %v1622
      %v1624 = vpop.f32.mrf.mxu0
      %1625 = vdwg.mxu0
      %v1626 = vmax.f32 %v1623, 0.0
      %v1627 = vrot.slane %v920, 1
      %v1628 = vsel %vm1039, %v1041, %v1627
      %1629 = vrot.lane.b32.xlu0 %v1628, 32
      %v1630 = vpop.permute.xlu0 %1629
      %1631 = vrot.lane.b32.xlu0 %v1627, 32
      %v1632 = vpop.permute.xlu0 %1631
      %v1635 = vrot.slane %v920, 2
      %v1636 = vsel %vm1046, %v1048, %v1635
      %1637 = vrot.lane.b32.xlu0 %v1636, 64
      %v1638 = vpop.permute.xlu0 %1637
      %1639 = vrot.lane.b32.xlu0 %v1635, 64
      %v1640 = vpop.permute.xlu0 %1639
      %v1643 = vrot.slane %v920, 3
      %v1644 = vsel %vm1053, %v1055, %v1643
      %1645 = vrot.lane.b32.xlu0 %v1644, 96
      %v1646 = vpop.permute.xlu0 %1645
      %1647 = vrot.lane.b32.xlu0 %v1643, 96
      %v1648 = vpop.permute.xlu0 %1647
      %1652 = vrot.lane.b32.xlu0 %v1114, 32
      %v1653 = vpop.permute.xlu0 %1652
      %v1655 = vrot.slane %v921, 5
      %v1656 = vrot.slane %v922, 5
      %v1657 = vsel %vm1071, %v1655, %v1656
      %1658 = vrot.lane.b32.xlu0 %v1655, 64
      %v1659 = vpop.permute.xlu0 %1658
      %1660 = vrot.lane.b32.xlu0 %v1657, 64
      %v1661 = vpop.permute.xlu0 %1660
      %v1664 = vrot.slane %v921, 6
      %v1665 = vrot.slane %v922, 6
      %v1666 = vsel %vm1078, %v1664, %v1665
      %1667 = vrot.lane.b32.xlu0 %v1664, 96
      %v1668 = vpop.permute.xlu0 %1667
      %1669 = vrot.lane.b32.xlu0 %v1666, 96
      %v1670 = vpop.permute.xlu0 %1669
      %v1673 = vrot.slane %v921, 7
      %v1674 = vrot.slane %v922, 7
      %v1675 = vsel %vm1085, %v1673, %v1674
      %1678 = vrot.lane.b32.xlu0 %v921, 32
      %v1679 = vpop.permute.xlu0 %1678
      %1680 = vrot.lane.b32.xlu0 %v922, 32
      %v1681 = vpop.permute.xlu0 %1680
      %1684 = vrot.lane.b32.xlu0 %v922, 64
      %v1685 = vpop.permute.xlu0 %1684
      %1686 = vrot.lane.b32.xlu0 %v923, 64
      %v1687 = vpop.permute.xlu0 %1686
      %1690 = vrot.lane.b32.xlu0 %v1141, 96
      %v1691 = vpop.permute.xlu0 %1690
      %1692 = vrot.lane.b32.xlu0 %v1140, 96
      %v1693 = vpop.permute.xlu0 %1692
      %v1698 = vsel %vm1053, %v1109, %v1156
      %1699 = vrot.lane.b32.xlu0 %v1698, 32
      %v1700 = vpop.permute.xlu0 %1699
      %1701 = vrot.lane.b32.xlu0 %v1156, 32
      %v1702 = vpop.permute.xlu0 %1701
      %1705 = vrot.lane.b32.xlu0 %v1121, 64
      %v1706 = vpop.permute.xlu0 %1705
      %1708 = vrot.lane.b32.xlu0 %v1164, 96
      %v1709 = vpop.permute.xlu0 %1708
      %v1711 = vsel %vm252, %v919, %v1630
      %v1712 = vsel %vm252, %v920, %v1632
      %v1713 = vsel %vm1127, %v1711, %v1638
      %v1714 = vsel %vm1127, %v1712, %v1640
      %v1715 = vsel %vm1129, %v1713, %v1646
      %v1716 = vsel %vm1129, %v1714, %v1648
      %v1717 = vsel %vm252, %v1066, %v1653
      %v1718 = vsel %vm1127, %v1717, %v1659
      %v1719 = vsel %vm1127, %v1717, %v1661
      %v1720 = vsel %vm1129, %v1718, %v1668
      %v1721 = vsel %vm1129, %v1719, %v1670
      %v1722 = vsel %vm252, %v1673, %v1679
      %v1723 = vsel %vm252, %v1675, %v1681
      %v1724 = vsel %vm1127, %v1722, %v1685
      %v1725 = vsel %vm1127, %v1723, %v1687
      %v1726 = vsel %vm1129, %v1724, %v1691
      %v1727 = vsel %vm1129, %v1725, %v1693
      %v1728 = vsel %vm252, %v1149, %v1700
      %v1729 = vsel %vm252, %v1148, %v1702
      %v1730 = vsel %vm1127, %v1728, %v1706
      %v1731 = vsel %vm1127, %v1729, %v1706
      %v1732 = vsel %vm1129, %v1730, %v1709
      %v1733 = vsel %vm1129, %v1731, %v1709
      %v1734 = vrot.slane %v924, 1
      %v1735 = vrot.slane %v925, 1
      %v1736 = vsel %vm1039, %v1734, %v1735
      %1737 = vrot.lane.b32.xlu0 %v1736, 32
      %v1738 = vpop.permute.xlu0 %1737
      %1739 = vrot.lane.b32.xlu0 %v1735, 32
      %v1740 = vpop.permute.xlu0 %1739
      %v1743 = vrot.slane %v924, 2
      %v1744 = vrot.slane %v925, 2
      %v1745 = vsel %vm1046, %v1743, %v1744
      %1746 = vrot.lane.b32.xlu0 %v1745, 64
      %v1747 = vpop.permute.xlu0 %1746
      %1748 = vrot.lane.b32.xlu0 %v1744, 64
      %v1749 = vpop.permute.xlu0 %1748
      %v1752 = vrot.slane %v925, 3
      %v1753 = vsel %vm1053, %v1161, %v1752
      %1754 = vrot.lane.b32.xlu0 %v1753, 96
      %v1755 = vpop.permute.xlu0 %1754
      %1756 = vrot.lane.b32.xlu0 %v1752, 96
      %v1757 = vpop.permute.xlu0 %1756
      %v1761 = vrot.slane %v926, 3
      %v1762 = vsel %vm1053, %v1752, %v1761
      %v1765 = vrot.slane %v926, 4
      %v1766 = vsel %vm1060, %v1165, %v1765
      %1767 = vrot.lane.b32.xlu0 %v1766, 32
      %v1768 = vpop.permute.xlu0 %1767
      %1769 = vrot.lane.b32.xlu0 %v1765, 32
      %v1770 = vpop.permute.xlu0 %1769
      %v1773 = vrot.slane %v926, 5
      %v1774 = vsel %vm1071, %v1174, %v1773
      %1775 = vrot.lane.b32.xlu0 %v1774, 64
      %v1776 = vpop.permute.xlu0 %1775
      %1777 = vrot.lane.b32.xlu0 %v1773, 64
      %v1778 = vpop.permute.xlu0 %1777
      %v1781 = vrot.slane %v926, 6
      %v1782 = vsel %vm1078, %v1183, %v1781
      %1783 = vrot.lane.b32.xlu0 %v1782, 96
      %v1784 = vpop.permute.xlu0 %1783
      %1785 = vrot.lane.b32.xlu0 %v1781, 96
      %v1786 = vpop.permute.xlu0 %1785
      %v1789 = vrot.slane %v926, 7
      %v1790 = vsel %vm252, %v924, %v1738
      %v1791 = vsel %vm252, %v925, %v1740
      %v1792 = vsel %vm1127, %v1790, %v1747
      %v1793 = vsel %vm1127, %v1791, %v1749
      %v1794 = vsel %vm1129, %v1792, %v1755
      %v1795 = vsel %vm1129, %v1793, %v1757
      %v1796 = vsel %vm252, %v1762, %v1768
      %v1797 = vsel %vm252, %v1761, %v1770
      %v1798 = vsel %vm1127, %v1796, %v1776
      %v1799 = vsel %vm1127, %v1797, %v1778
      %v1800 = vsel %vm1129, %v1798, %v1784
      %v1801 = vsel %vm1129, %v1799, %v1786
      %v1806 = vrot.slane %v1794, 5
      %v1807 = vrot.slane %v1800, 5
      %v1808 = vrot.slane %v1789, 5
      %v1809 = vrot.slane %v1795, 5
      %v1810 = vsel %vm1071, %v1806, %v1809
      %v1811 = vrot.slane %v1801, 5
      %v1812 = vsel %vm1071, %v1807, %v1811
      %v1813 = vsel %vm1071, %v1808, %v1808
      %v1820 = vpack.c.bf16 %v1716, %v1715
      %v1821 = vpack.c.bf16 %v1721, %v1720
      %v1822 = vpack.c.bf16 %v1727, %v1726
      %v1823 = vpack.c.bf16 %v1733, %v1732
      %v1824 = vpack.c.bf16 %v1810, %v1806
      %v1825 = vpack.c.bf16 %v1812, %v1807
      %v1826 = vpack.c.bf16 %v1813, %v1808
      %v1834 = vrot.slane %v1820, 2
      %v1835 = vrot.slane %v1821, 2
      %v1836 = vrot.slane %v1822, 2
      %v1837 = vrot.slane %v1823, 2
      %v1838 = vrot.slane %v1824, 2
      %v1839 = vrot.slane %v1825, 2
      %v1840 = vrot.slane %v1826, 2
      %v1848 = vsel %vm252, %v1840, 0
      %1850 = vmatpush.bf16.msra.mxu0 %v1439
      %1851 = vmatpush.bf16.msra.mxu0 %v1438
      %1852 = vmatpush.bf16.msra.mxu0 %v1437
      %1853 = vmatpush.bf16.msra.mxu0 %v1436
      %1854 = vmatpush.bf16.msra.mxu0 %v1435
      %1855 = vmatpush.bf16.msra.mxu0 %v1434
      %1856 = vmatpush.bf16.msra.mxu0 %v1433
      %1857 = vmatpush.bf16.msra.mxu0 %v1432
      %1858 = vmatmul.bf16.gmra.mxu0 %v1834
      %v1859 = vpop.f32.mrf.mxu0
      %v1860 = vadd.f32 %v1230, %v1859
      %v1861 = vpop.f32.mrf.mxu0
      %1862 = vdwg.mxu0
      %1863 = vmatpush.bf16.msra.mxu0 %v1447
      %1864 = vmatpush.bf16.msra.mxu0 %v1446
      %1865 = vmatpush.bf16.msra.mxu0 %v1445
      %1866 = vmatpush.bf16.msra.mxu0 %v1444
      %1867 = vmatpush.bf16.msra.mxu0 %v1443
      %1868 = vmatpush.bf16.msra.mxu0 %v1442
      %1869 = vmatpush.bf16.msra.mxu0 %v1441
      %1870 = vmatpush.bf16.msra.mxu0 %v1440
      %1871 = vmatmul.bf16.gmra.mxu0 %v1835
      %v1872 = vpop.f32.mrf.mxu0
      %v1873 = vadd.f32 %v1860, %v1872
      %v1874 = vpop.f32.mrf.mxu0
      %1875 = vdwg.mxu0
      %1876 = vmatpush.bf16.msra.mxu0 %v1455
      %1877 = vmatpush.bf16.msra.mxu0 %v1454
      %1878 = vmatpush.bf16.msra.mxu0 %v1453
      %1879 = vmatpush.bf16.msra.mxu0 %v1452
      %1880 = vmatpush.bf16.msra.mxu0 %v1451
      %1881 = vmatpush.bf16.msra.mxu0 %v1450
      %1882 = vmatpush.bf16.msra.mxu0 %v1449
      %1883 = vmatpush.bf16.msra.mxu0 %v1448
      %1884 = vmatmul.bf16.gmra.mxu0 %v1836
      %v1885 = vpop.f32.mrf.mxu0
      %v1886 = vadd.f32 %v1873, %v1885
      %v1887 = vpop.f32.mrf.mxu0
      %1888 = vdwg.mxu0
      %1889 = vmatpush.bf16.msra.mxu0 %v1463
      %1890 = vmatpush.bf16.msra.mxu0 %v1462
      %1891 = vmatpush.bf16.msra.mxu0 %v1461
      %1892 = vmatpush.bf16.msra.mxu0 %v1460
      %1893 = vmatpush.bf16.msra.mxu0 %v1459
      %1894 = vmatpush.bf16.msra.mxu0 %v1458
      %1895 = vmatpush.bf16.msra.mxu0 %v1457
      %1896 = vmatpush.bf16.msra.mxu0 %v1456
      %1897 = vmatmul.bf16.gmra.mxu0 %v1837
      %v1898 = vpop.f32.mrf.mxu0
      %v1899 = vadd.f32 %v1886, %v1898
      %v1900 = vpop.f32.mrf.mxu0
      %1901 = vdwg.mxu0
      %1902 = vmatpush.bf16.msra.mxu0 %v1471
      %1903 = vmatpush.bf16.msra.mxu0 %v1470
      %1904 = vmatpush.bf16.msra.mxu0 %v1469
      %1905 = vmatpush.bf16.msra.mxu0 %v1468
      %1906 = vmatpush.bf16.msra.mxu0 %v1467
      %1907 = vmatpush.bf16.msra.mxu0 %v1466
      %1908 = vmatpush.bf16.msra.mxu0 %v1465
      %1909 = vmatpush.bf16.msra.mxu0 %v1464
      %1910 = vmatmul.bf16.gmra.mxu0 %v1838
      %v1911 = vpop.f32.mrf.mxu0
      %v1912 = vadd.f32 %v1899, %v1911
      %v1913 = vpop.f32.mrf.mxu0
      %1914 = vdwg.mxu0
      %1915 = vmatpush.bf16.msra.mxu0 %v1479
      %1916 = vmatpush.bf16.msra.mxu0 %v1478
      %1917 = vmatpush.bf16.msra.mxu0 %v1477
      %1918 = vmatpush.bf16.msra.mxu0 %v1476
      %1919 = vmatpush.bf16.msra.mxu0 %v1475
      %1920 = vmatpush.bf16.msra.mxu0 %v1474
      %1921 = vmatpush.bf16.msra.mxu0 %v1473
      %1922 = vmatpush.bf16.msra.mxu0 %v1472
      %1923 = vmatmul.bf16.gmra.mxu0 %v1839
      %v1924 = vpop.f32.mrf.mxu0
      %v1925 = vadd.f32 %v1912, %v1924
      %v1926 = vpop.f32.mrf.mxu0
      %1927 = vdwg.mxu0
      %1928 = vmatpush.bf16.msra.mxu0 0
      %1929 = vmatpush.bf16.msra.mxu0 0
      %1930 = vmatpush.bf16.msra.mxu0 0
      %1931 = vmatpush.bf16.msra.mxu0 0
      %1932 = vmatpush.bf16.msra.mxu0 0
      %1933 = vmatpush.bf16.msra.mxu0 0
      %1934 = vmatpush.bf16.msra.mxu0 %v1481
      %1935 = vmatpush.bf16.msra.mxu0 %v1480
      %1936 = vmatmul.bf16.gmra.mxu0 %v1848
      %v1937 = vpop.f32.mrf.mxu0
      %v1938 = vadd.f32 %v1925, %v1937
      %v1939 = vpop.f32.mrf.mxu0
      %1940 = vdwg.mxu0
      %v1941 = vmax.f32 %v1938, 0.0
      %1942 = vrot.lane.b32.xlu0 %v1100, 32
      %v1943 = vpop.permute.xlu0 %1942
      %1945 = vrot.lane.b32.xlu0 %v1106, 64
      %v1946 = vpop.permute.xlu0 %1945
      %1948 = vrot.lane.b32.xlu0 %v1110, 96
      %v1949 = vpop.permute.xlu0 %1948
      %1952 = vrot.lane.b32.xlu0 %v1122, 32
      %v1953 = vpop.permute.xlu0 %1952
      %v1955 = vrot.slane %v923, 5
      %v1956 = vsel %vm1071, %v1656, %v1955
      %1957 = vrot.lane.b32.xlu0 %v1956, 64
      %v1958 = vpop.permute.xlu0 %1957
      %v1960 = vrot.slane %v923, 6
      %v1961 = vsel %vm1078, %v1665, %v1960
      %1962 = vrot.lane.b32.xlu0 %v1961, 96
      %v1963 = vpop.permute.xlu0 %1962
      %v1965 = vrot.slane %v923, 7
      %v1966 = vsel %vm1085, %v1674, %v1965
      %1968 = vrot.lane.b32.xlu0 %v923, 32
      %v1969 = vpop.permute.xlu0 %1968
      %1971 = vrot.lane.b32.xlu0 %v924, 64
      %v1972 = vpop.permute.xlu0 %1971
      %1974 = vrot.lane.b32.xlu0 %v1736, 96
      %v1975 = vpop.permute.xlu0 %1974
      %1978 = vrot.lane.b32.xlu0 %v1753, 32
      %v1979 = vpop.permute.xlu0 %1978
      %1981 = vrot.lane.b32.xlu0 %v1166, 64
      %v1982 = vpop.permute.xlu0 %1981
      %1984 = vrot.lane.b32.xlu0 %v1766, 96
      %v1985 = vpop.permute.xlu0 %1984
      %v1987 = vsel %vm252, %v921, %v1943
      %v1988 = vsel %vm1127, %v1987, %v1946
      %v1989 = vsel %vm1129, %v1988, %v1949
      %v1990 = vsel %vm252, %v1116, %v1953
      %v1991 = vsel %vm1127, %v1990, %v1958
      %v1992 = vsel %vm1129, %v1991, %v1963
      %v1993 = vsel %vm252, %v1966, %v1969
      %v1994 = vsel %vm1127, %v1993, %v1972
      %v1995 = vsel %vm1129, %v1994, %v1975
      %v1996 = vsel %vm252, %v1745, %v1979
      %v1997 = vsel %vm1127, %v1996, %v1982
      %v1998 = vsel %vm1129, %v1997, %v1985
      %v1999 = vrot.slane %v926, 1
      %v2000 = vsel %vm1039, %v1735, %v1999
      %2001 = vrot.lane.b32.xlu0 %v2000, 32
      %v2002 = vpop.permute.xlu0 %2001
      %2003 = vrot.lane.b32.xlu0 %v1999, 32
      %v2004 = vpop.permute.xlu0 %2003
      %v2007 = vrot.slane %v926, 2
      %v2008 = vsel %vm1046, %v1744, %v2007
      %2009 = vrot.lane.b32.xlu0 %v2008, 64
      %v2010 = vpop.permute.xlu0 %2009
      %2011 = vrot.lane.b32.xlu0 %v2007, 64
      %v2012 = vpop.permute.xlu0 %2011
      %2015 = vrot.lane.b32.xlu0 %v1761, 96
      %v2016 = vpop.permute.xlu0 %2015
      %v2019 = vrot.slane %v927, 3
      %v2022 = vrot.slane %v927, 4
      %v2023 = vrot.slane %v928, 4
      %v2024 = vsel %vm1060, %v2022, %v2023
      %2025 = vrot.lane.b32.xlu0 %v2022, 32
      %v2026 = vpop.permute.xlu0 %2025
      %2027 = vrot.lane.b32.xlu0 %v2024, 32
      %v2028 = vpop.permute.xlu0 %2027
      %v2031 = vrot.slane %v927, 5
      %v2032 = vrot.slane %v928, 5
      %v2033 = vsel %vm1071, %v2031, %v2032
      %2034 = vrot.lane.b32.xlu0 %v2031, 64
      %v2035 = vpop.permute.xlu0 %2034
      %2036 = vrot.lane.b32.xlu0 %v2033, 64
      %v2037 = vpop.permute.xlu0 %2036
      %v2040 = vrot.slane %v927, 6
      %v2041 = vrot.slane %v928, 6
      %v2042 = vsel %vm1078, %v2040, %v2041
      %2043 = vrot.lane.b32.xlu0 %v2040, 96
      %v2044 = vpop.permute.xlu0 %2043
      %2045 = vrot.lane.b32.xlu0 %v2042, 96
      %v2046 = vpop.permute.xlu0 %2045
      %v2049 = vrot.slane %v927, 7
      %v2050 = vrot.slane %v928, 7
      %v2051 = vsel %vm1085, %v2049, %v2050
      %v2052 = vsel %vm252, %v925, %v2002
      %v2053 = vsel %vm252, %v926, %v2004
      %v2054 = vsel %vm1127, %v2052, %v2010
      %v2055 = vsel %vm1127, %v2053, %v2012
      %v2056 = vsel %vm1129, %v2054, %v2016
      %v2057 = vsel %vm1129, %v2055, %v2016
      %v2058 = vsel %vm252, %v2019, %v2026
      %v2059 = vsel %vm252, %v2019, %v2028
      %v2060 = vsel %vm1127, %v2058, %v2035
      %v2061 = vsel %vm1127, %v2059, %v2037
      %v2062 = vsel %vm1129, %v2060, %v2044
      %v2063 = vsel %vm1129, %v2061, %v2046
      %v2068 = vrot.slane %v2056, 5
      %v2069 = vrot.slane %v2057, 5
      %v2070 = vsel %vm1071, %v2068, %v2069
      %v2071 = vrot.slane %v2062, 5
      %v2072 = vrot.slane %v2063, 5
      %v2073 = vsel %vm1071, %v2071, %v2072
      %v2074 = vrot.slane %v2049, 5
      %v2075 = vrot.slane %v2051, 5
      %v2076 = vsel %vm1071, %v2074, %v2075
      %v2080 = vpack.c.bf16 %v1989, %v1989
      %v2081 = vpack.c.bf16 %v1992, %v1992
      %v2082 = vpack.c.bf16 %v1995, %v1995
      %v2083 = vpack.c.bf16 %v1998, %v1998
      %v2084 = vpack.c.bf16 %v2070, %v2070
      %v2085 = vpack.c.bf16 %v2073, %v2073
      %v2086 = vpack.c.bf16 %v2076, %v2076
      %v2088 = vsel %vm252, %v2086, 0
      %2090 = vmatpush.bf16.msra.mxu0 %v1439
      %2091 = vmatpush.bf16.msra.mxu0 %v1438
      %2092 = vmatpush.bf16.msra.mxu0 %v1437
      %2093 = vmatpush.bf16.msra.mxu0 %v1436
      %2094 = vmatpush.bf16.msra.mxu0 %v1435
      %2095 = vmatpush.bf16.msra.mxu0 %v1434
      %2096 = vmatpush.bf16.msra.mxu0 %v1433
      %2097 = vmatpush.bf16.msra.mxu0 %v1432
      %2098 = vmatmul.bf16.gmra.mxu0 %v2080
      %v2099 = vpop.f32.mrf.mxu0
      %v2100 = vadd.f32 %v1230, %v2099
      %v2101 = vpop.f32.mrf.mxu0
      %2102 = vdwg.mxu0
      %2103 = vmatpush.bf16.msra.mxu0 %v1447
      %2104 = vmatpush.bf16.msra.mxu0 %v1446
      %2105 = vmatpush.bf16.msra.mxu0 %v1445
      %2106 = vmatpush.bf16.msra.mxu0 %v1444
      %2107 = vmatpush.bf16.msra.mxu0 %v1443
      %2108 = vmatpush.bf16.msra.mxu0 %v1442
      %2109 = vmatpush.bf16.msra.mxu0 %v1441
      %2110 = vmatpush.bf16.msra.mxu0 %v1440
      %2111 = vmatmul.bf16.gmra.mxu0 %v2081
      %v2112 = vpop.f32.mrf.mxu0
      %v2113 = vadd.f32 %v2100, %v2112
      %v2114 = vpop.f32.mrf.mxu0
      %2115 = vdwg.mxu0
      %2116 = vmatpush.bf16.msra.mxu0 %v1455
      %2117 = vmatpush.bf16.msra.mxu0 %v1454
      %2118 = vmatpush.bf16.msra.mxu0 %v1453
      %2119 = vmatpush.bf16.msra.mxu0 %v1452
      %2120 = vmatpush.bf16.msra.mxu0 %v1451
      %2121 = vmatpush.bf16.msra.mxu0 %v1450
      %2122 = vmatpush.bf16.msra.mxu0 %v1449
      %2123 = vmatpush.bf16.msra.mxu0 %v1448
      %2124 = vmatmul.bf16.gmra.mxu0 %v2082
      %v2125 = vpop.f32.mrf.mxu0
      %v2126 = vadd.f32 %v2113, %v2125
      %v2127 = vpop.f32.mrf.mxu0
      %2128 = vdwg.mxu0
      %2129 = vmatpush.bf16.msra.mxu0 %v1463
      %2130 = vmatpush.bf16.msra.mxu0 %v1462
      %2131 = vmatpush.bf16.msra.mxu0 %v1461
      %2132 = vmatpush.bf16.msra.mxu0 %v1460
      %2133 = vmatpush.bf16.msra.mxu0 %v1459
      %2134 = vmatpush.bf16.msra.mxu0 %v1458
      %2135 = vmatpush.bf16.msra.mxu0 %v1457
      %2136 = vmatpush.bf16.msra.mxu0 %v1456
      %2137 = vmatmul.bf16.gmra.mxu0 %v2083
      %v2138 = vpop.f32.mrf.mxu0
      %v2139 = vadd.f32 %v2126, %v2138
      %v2140 = vpop.f32.mrf.mxu0
      %2141 = vdwg.mxu0
      %2142 = vmatpush.bf16.msra.mxu0 %v1471
      %2143 = vmatpush.bf16.msra.mxu0 %v1470
      %2144 = vmatpush.bf16.msra.mxu0 %v1469
      %2145 = vmatpush.bf16.msra.mxu0 %v1468
      %2146 = vmatpush.bf16.msra.mxu0 %v1467
      %2147 = vmatpush.bf16.msra.mxu0 %v1466
      %2148 = vmatpush.bf16.msra.mxu0 %v1465
      %2149 = vmatpush.bf16.msra.mxu0 %v1464
      %2150 = vmatmul.bf16.gmra.mxu0 %v2084
      %v2151 = vpop.f32.mrf.mxu0
      %v2152 = vadd.f32 %v2139, %v2151
      %v2153 = vpop.f32.mrf.mxu0
      %2154 = vdwg.mxu0
      %2155 = vmatpush.bf16.msra.mxu0 %v1479
      %2156 = vmatpush.bf16.msra.mxu0 %v1478
      %2157 = vmatpush.bf16.msra.mxu0 %v1477
      %2158 = vmatpush.bf16.msra.mxu0 %v1476
      %2159 = vmatpush.bf16.msra.mxu0 %v1475
      %2160 = vmatpush.bf16.msra.mxu0 %v1474
      %2161 = vmatpush.bf16.msra.mxu0 %v1473
      %2162 = vmatpush.bf16.msra.mxu0 %v1472
      %2163 = vmatmul.bf16.gmra.mxu0 %v2085
      %v2164 = vpop.f32.mrf.mxu0
      %v2165 = vadd.f32 %v2152, %v2164
      %v2166 = vpop.f32.mrf.mxu0
      %2167 = vdwg.mxu0
      %2168 = vmatpush.bf16.msra.mxu0 0
      %2169 = vmatpush.bf16.msra.mxu0 0
      %2170 = vmatpush.bf16.msra.mxu0 0
      %2171 = vmatpush.bf16.msra.mxu0 0
      %2172 = vmatpush.bf16.msra.mxu0 0
      %2173 = vmatpush.bf16.msra.mxu0 0
      %2174 = vmatpush.bf16.msra.mxu0 %v1481
      %2175 = vmatpush.bf16.msra.mxu0 %v1480
      %2176 = vmatmul.bf16.gmra.mxu0 %v2088
      %v2177 = vpop.f32.mrf.mxu0
      %v2178 = vadd.f32 %v2165, %v2177
      %v2179 = vpop.f32.mrf.mxu0
      %2180 = vdwg.mxu0
      %v2181 = vmax.f32 %v2178, 0.0
      %2182 = vrot.lane.b32.xlu0 %v1698, 96
      %v2183 = vpop.permute.xlu0 %2182
      %2188 = vrot.lane.b32.xlu0 %v924, 32
      %v2189 = vpop.permute.xlu0 %2188
      %2190 = vrot.lane.b32.xlu0 %v925, 32
      %v2191 = vpop.permute.xlu0 %2190
      %2194 = vrot.lane.b32.xlu0 %v925, 64
      %v2195 = vpop.permute.xlu0 %2194
      %2196 = vrot.lane.b32.xlu0 %v926, 64
      %v2197 = vpop.permute.xlu0 %2196
      %2200 = vrot.lane.b32.xlu0 %v2000, 96
      %v2201 = vpop.permute.xlu0 %2200
      %2202 = vrot.lane.b32.xlu0 %v1999, 96
      %v2203 = vpop.permute.xlu0 %2202
      %2208 = vrot.lane.b32.xlu0 %v1762, 32
      %v2209 = vpop.permute.xlu0 %2208
      %2210 = vrot.lane.b32.xlu0 %v1761, 32
      %v2211 = vpop.permute.xlu0 %2210
      %2214 = vrot.lane.b32.xlu0 %v1765, 64
      %v2215 = vpop.permute.xlu0 %2214
      %2217 = vrot.lane.b32.xlu0 %v2022, 96
      %v2218 = vpop.permute.xlu0 %2217
      %v2220 = vsel %vm1129, %v1196, %v2183
      %v2221 = vsel %vm252, %v1121, %v1168
      %v2222 = vsel %vm1127, %v2221, %v1177
      %v2223 = vsel %vm1127, %v2221, %v1179
      %v2224 = vsel %vm1129, %v2222, %v1186
      %v2225 = vsel %vm1129, %v2223, %v1188
      %v2226 = vsel %vm252, %v1191, %v2189
      %v2227 = vsel %vm252, %v1193, %v2191
      %v2228 = vsel %vm1127, %v2226, %v2195
      %v2229 = vsel %vm1127, %v2227, %v2197
      %v2230 = vsel %vm1129, %v2228, %v2201
      %v2231 = vsel %vm1129, %v2229, %v2203
      %v2232 = vsel %vm252, %v2008, %v2209
      %v2233 = vsel %vm252, %v2007, %v2211
      %v2234 = vsel %vm1127, %v2232, %v2215
      %v2235 = vsel %vm1127, %v2233, %v2215
      %v2236 = vsel %vm1129, %v2234, %v2218
      %v2237 = vsel %vm1129, %v2235, %v2218
      %v2238 = vrot.slane %v927, 1
      %v2239 = vrot.slane %v928, 1
      %v2240 = vsel %vm1039, %v2238, %v2239
      %2241 = vrot.lane.b32.xlu0 %v2240, 32
      %v2242 = vpop.permute.xlu0 %2241
      %2243 = vrot.lane.b32.xlu0 %v2239, 32
      %v2244 = vpop.permute.xlu0 %2243
      %v2247 = vrot.slane %v927, 2
      %v2248 = vrot.slane %v928, 2
      %v2249 = vsel %vm1046, %v2247, %v2248
      %2250 = vrot.lane.b32.xlu0 %v2249, 64
      %v2251 = vpop.permute.xlu0 %2250
      %2252 = vrot.lane.b32.xlu0 %v2248, 64
      %v2253 = vpop.permute.xlu0 %2252
      %v2256 = vrot.slane %v928, 3
      %v2257 = vsel %vm1053, %v2019, %v2256
      %2258 = vrot.lane.b32.xlu0 %v2257, 96
      %v2259 = vpop.permute.xlu0 %2258
      %2260 = vrot.lane.b32.xlu0 %v2256, 96
      %v2261 = vpop.permute.xlu0 %2260
      %v2265 = vrot.slane %v929, 3
      %v2266 = vsel %vm1053, %v2256, %v2265
      %v2269 = vrot.slane %v929, 4
      %v2270 = vsel %vm1060, %v2023, %v2269
      %2271 = vrot.lane.b32.xlu0 %v2270, 32
      %v2272 = vpop.permute.xlu0 %2271
      %2273 = vrot.lane.b32.xlu0 %v2269, 32
      %v2274 = vpop.permute.xlu0 %2273
      %v2277 = vrot.slane %v929, 5
      %v2278 = vsel %vm1071, %v2032, %v2277
      %2279 = vrot.lane.b32.xlu0 %v2278, 64
      %v2280 = vpop.permute.xlu0 %2279
      %2281 = vrot.lane.b32.xlu0 %v2277, 64
      %v2282 = vpop.permute.xlu0 %2281
      %v2285 = vrot.slane %v929, 6
      %v2286 = vsel %vm1078, %v2041, %v2285
      %2287 = vrot.lane.b32.xlu0 %v2286, 96
      %v2288 = vpop.permute.xlu0 %2287
      %2289 = vrot.lane.b32.xlu0 %v2285, 96
      %v2290 = vpop.permute.xlu0 %2289
      %v2293 = vrot.slane %v929, 7
      %v2294 = vsel %vm252, %v927, %v2242
      %v2295 = vsel %vm252, %v928, %v2244
      %v2296 = vsel %vm1127, %v2294, %v2251
      %v2297 = vsel %vm1127, %v2295, %v2253
      %v2298 = vsel %vm1129, %v2296, %v2259
      %v2299 = vsel %vm1129, %v2297, %v2261
      %v2300 = vsel %vm252, %v2266, %v2272
      %v2301 = vsel %vm252, %v2265, %v2274
      %v2302 = vsel %vm1127, %v2300, %v2280
      %v2303 = vsel %vm1127, %v2301, %v2282
      %v2304 = vsel %vm1129, %v2302, %v2288
      %v2305 = vsel %vm1129, %v2303, %v2290
      %v2310 = vrot.slane %v2298, 5
      %v2311 = vrot.slane %v2304, 5
      %v2312 = vrot.slane %v2293, 5
      %v2313 = vrot.slane %v2299, 5
      %v2314 = vsel %vm1071, %v2310, %v2313
      %v2315 = vrot.slane %v2305, 5
      %v2316 = vsel %vm1071, %v2311, %v2315
      %v2317 = vsel %vm1071, %v2312, %v2312
      %v2324 = vpack.c.bf16 %v1199, %v2220
      %v2325 = vpack.c.bf16 %v2225, %v2224
      %v2326 = vpack.c.bf16 %v2231, %v2230
      %v2327 = vpack.c.bf16 %v2237, %v2236
      %v2328 = vpack.c.bf16 %v2314, %v2310
      %v2329 = vpack.c.bf16 %v2316, %v2311
      %v2330 = vpack.c.bf16 %v2317, %v2312
      %v2338 = vrot.slane %v2324, 2
      %v2339 = vrot.slane %v2325, 2
      %v2340 = vrot.slane %v2326, 2
      %v2341 = vrot.slane %v2327, 2
      %v2342 = vrot.slane %v2328, 2
      %v2343 = vrot.slane %v2329, 2
      %v2344 = vrot.slane %v2330, 2
      %v2352 = vsel %vm252, %v2344, 0
      %2354 = vmatpush.bf16.msra.mxu0 %v1439
      %2355 = vmatpush.bf16.msra.mxu0 %v1438
      %2356 = vmatpush.bf16.msra.mxu0 %v1437
      %2357 = vmatpush.bf16.msra.mxu0 %v1436
      %2358 = vmatpush.bf16.msra.mxu0 %v1435
      %2359 = vmatpush.bf16.msra.mxu0 %v1434
      %2360 = vmatpush.bf16.msra.mxu0 %v1433
      %2361 = vmatpush.bf16.msra.mxu0 %v1432
      %2362 = vmatmul.bf16.gmra.mxu0 %v2338
      %v2363 = vpop.f32.mrf.mxu0
      %v2364 = vadd.f32 %v1230, %v2363
      %v2365 = vpop.f32.mrf.mxu0
      %2366 = vdwg.mxu0
      %2367 = vmatpush.bf16.msra.mxu0 %v1447
      %2368 = vmatpush.bf16.msra.mxu0 %v1446
      %2369 = vmatpush.bf16.msra.mxu0 %v1445
      %2370 = vmatpush.bf16.msra.mxu0 %v1444
      %2371 = vmatpush.bf16.msra.mxu0 %v1443
      %2372 = vmatpush.bf16.msra.mxu0 %v1442
      %2373 = vmatpush.bf16.msra.mxu0 %v1441
      %2374 = vmatpush.bf16.msra.mxu0 %v1440
      %2375 = vmatmul.bf16.gmra.mxu0 %v2339
      %v2376 = vpop.f32.mrf.mxu0
      %v2377 = vadd.f32 %v2364, %v2376
      %v2378 = vpop.f32.mrf.mxu0
      %2379 = vdwg.mxu0
      %2380 = vmatpush.bf16.msra.mxu0 %v1455
      %2381 = vmatpush.bf16.msra.mxu0 %v1454
      %2382 = vmatpush.bf16.msra.mxu0 %v1453
      %2383 = vmatpush.bf16.msra.mxu0 %v1452
      %2384 = vmatpush.bf16.msra.mxu0 %v1451
      %2385 = vmatpush.bf16.msra.mxu0 %v1450
      %2386 = vmatpush.bf16.msra.mxu0 %v1449
      %2387 = vmatpush.bf16.msra.mxu0 %v1448
      %2388 = vmatmul.bf16.gmra.mxu0 %v2340
      %v2389 = vpop.f32.mrf.mxu0
      %v2390 = vadd.f32 %v2377, %v2389
      %v2391 = vpop.f32.mrf.mxu0
      %2392 = vdwg.mxu0
      %2393 = vmatpush.bf16.msra.mxu0 %v1463
      %2394 = vmatpush.bf16.msra.mxu0 %v1462
      %2395 = vmatpush.bf16.msra.mxu0 %v1461
      %2396 = vmatpush.bf16.msra.mxu0 %v1460
      %2397 = vmatpush.bf16.msra.mxu0 %v1459
      %2398 = vmatpush.bf16.msra.mxu0 %v1458
      %2399 = vmatpush.bf16.msra.mxu0 %v1457
      %2400 = vmatpush.bf16.msra.mxu0 %v1456
      %2401 = vmatmul.bf16.gmra.mxu0 %v2341
      %v2402 = vpop.f32.mrf.mxu0
      %v2403 = vadd.f32 %v2390, %v2402
      %v2404 = vpop.f32.mrf.mxu0
      %2405 = vdwg.mxu0
      %2406 = vmatpush.bf16.msra.mxu0 %v1471
      %2407 = vmatpush.bf16.msra.mxu0 %v1470
      %2408 = vmatpush.bf16.msra.mxu0 %v1469
      %2409 = vmatpush.bf16.msra.mxu0 %v1468
      %2410 = vmatpush.bf16.msra.mxu0 %v1467
      %2411 = vmatpush.bf16.msra.mxu0 %v1466
      %2412 = vmatpush.bf16.msra.mxu0 %v1465
      %2413 = vmatpush.bf16.msra.mxu0 %v1464
      %2414 = vmatmul.bf16.gmra.mxu0 %v2342
      %v2415 = vpop.f32.mrf.mxu0
      %v2416 = vadd.f32 %v2403, %v2415
      %v2417 = vpop.f32.mrf.mxu0
      %2418 = vdwg.mxu0
      %2419 = vmatpush.bf16.msra.mxu0 %v1479
      %2420 = vmatpush.bf16.msra.mxu0 %v1478
      %2421 = vmatpush.bf16.msra.mxu0 %v1477
      %2422 = vmatpush.bf16.msra.mxu0 %v1476
      %2423 = vmatpush.bf16.msra.mxu0 %v1475
      %2424 = vmatpush.bf16.msra.mxu0 %v1474
      %2425 = vmatpush.bf16.msra.mxu0 %v1473
      %2426 = vmatpush.bf16.msra.mxu0 %v1472
      %2427 = vmatmul.bf16.gmra.mxu0 %v2343
      %v2428 = vpop.f32.mrf.mxu0
      %v2429 = vadd.f32 %v2416, %v2428
      %v2430 = vpop.f32.mrf.mxu0
      %2431 = vdwg.mxu0
      %2432 = vmatpush.bf16.msra.mxu0 0
      %2433 = vmatpush.bf16.msra.mxu0 0
      %2434 = vmatpush.bf16.msra.mxu0 0
      %2435 = vmatpush.bf16.msra.mxu0 0
      %2436 = vmatpush.bf16.msra.mxu0 0
      %2437 = vmatpush.bf16.msra.mxu0 0
      %2438 = vmatpush.bf16.msra.mxu0 %v1481
      %2439 = vmatpush.bf16.msra.mxu0 %v1480
      %2440 = vmatmul.bf16.gmra.mxu0 %v2352
      %v2441 = vpop.f32.mrf.mxu0
      %v2442 = vadd.f32 %v2429, %v2441
      %v2443 = vpop.f32.mrf.mxu0
      %2444 = vdwg.mxu0
      %v2445 = vmax.f32 %v2442, 0.0
      %v2447 = vsel %vm1085, %v1192, %v1789
      %2449 = vrot.lane.b32.xlu0 %v926, 32
      %v2450 = vpop.permute.xlu0 %2449
      %2452 = vrot.lane.b32.xlu0 %v927, 64
      %v2453 = vpop.permute.xlu0 %2452
      %2455 = vrot.lane.b32.xlu0 %v2240, 96
      %v2456 = vpop.permute.xlu0 %2455
      %2459 = vrot.lane.b32.xlu0 %v2257, 32
      %v2460 = vpop.permute.xlu0 %2459
      %2462 = vrot.lane.b32.xlu0 %v2024, 64
      %v2463 = vpop.permute.xlu0 %2462
      %2465 = vrot.lane.b32.xlu0 %v2270, 96
      %v2466 = vpop.permute.xlu0 %2465
      %v2468 = vsel %vm252, %v1166, %v1768
      %v2469 = vsel %vm1127, %v2468, %v1776
      %v2470 = vsel %vm1129, %v2469, %v1784
      %v2471 = vsel %vm252, %v2447, %v2450
      %v2472 = vsel %vm1127, %v2471, %v2453
      %v2473 = vsel %vm1129, %v2472, %v2456
      %v2474 = vsel %vm252, %v2249, %v2460
      %v2475 = vsel %vm1127, %v2474, %v2463
      %v2476 = vsel %vm1129, %v2475, %v2466
      %v2477 = vrot.slane %v929, 1
      %v2478 = vsel %vm1039, %v2239, %v2477
      %2479 = vrot.lane.b32.xlu0 %v2478, 32
      %v2480 = vpop.permute.xlu0 %2479
      %2481 = vrot.lane.b32.xlu0 %v2477, 32
      %v2482 = vpop.permute.xlu0 %2481
      %v2485 = vrot.slane %v929, 2
      %v2486 = vsel %vm1046, %v2248, %v2485
      %2487 = vrot.lane.b32.xlu0 %v2486, 64
      %v2488 = vpop.permute.xlu0 %2487
      %2489 = vrot.lane.b32.xlu0 %v2485, 64
      %v2490 = vpop.permute.xlu0 %2489
      %2493 = vrot.lane.b32.xlu0 %v2265, 96
      %v2494 = vpop.permute.xlu0 %2493
      %v2497 = vrot.slane %v930, 3
      %v2500 = vrot.slane %v930, 4
      %v2501 = vrot.slane %v931, 4
      %v2502 = vsel %vm1060, %v2500, %v2501
      %2503 = vrot.lane.b32.xlu0 %v2500, 32
      %v2504 = vpop.permute.xlu0 %2503
      %2505 = vrot.lane.b32.xlu0 %v2502, 32
      %v2506 = vpop.permute.xlu0 %2505
      %v2509 = vrot.slane %v930, 5
      %v2510 = vrot.slane %v931, 5
      %v2511 = vsel %vm1071, %v2509, %v2510
      %2512 = vrot.lane.b32.xlu0 %v2509, 64
      %v2513 = vpop.permute.xlu0 %2512
      %2514 = vrot.lane.b32.xlu0 %v2511, 64
      %v2515 = vpop.permute.xlu0 %2514
      %v2518 = vrot.slane %v930, 6
      %v2519 = vrot.slane %v931, 6
      %v2520 = vsel %vm1078, %v2518, %v2519
      %2521 = vrot.lane.b32.xlu0 %v2518, 96
      %v2522 = vpop.permute.xlu0 %2521
      %2523 = vrot.lane.b32.xlu0 %v2520, 96
      %v2524 = vpop.permute.xlu0 %2523
      %v2527 = vrot.slane %v930, 7
      %v2528 = vrot.slane %v931, 7
      %v2529 = vsel %vm1085, %v2527, %v2528
      %v2530 = vsel %vm252, %v928, %v2480
      %v2531 = vsel %vm252, %v929, %v2482
      %v2532 = vsel %vm1127, %v2530, %v2488
      %v2533 = vsel %vm1127, %v2531, %v2490
      %v2534 = vsel %vm1129, %v2532, %v2494
      %v2535 = vsel %vm1129, %v2533, %v2494
      %v2536 = vsel %vm252, %v2497, %v2504
      %v2537 = vsel %vm252, %v2497, %v2506
      %v2538 = vsel %vm1127, %v2536, %v2513
      %v2539 = vsel %vm1127, %v2537, %v2515
      %v2540 = vsel %vm1129, %v2538, %v2522
      %v2541 = vsel %vm1129, %v2539, %v2524
      %v2546 = vrot.slane %v2534, 5
      %v2547 = vrot.slane %v2535, 5
      %v2548 = vsel %vm1071, %v2546, %v2547
      %v2549 = vrot.slane %v2540, 5
      %v2550 = vrot.slane %v2541, 5
      %v2551 = vsel %vm1071, %v2549, %v2550
      %v2552 = vrot.slane %v2527, 5
      %v2553 = vrot.slane %v2529, 5
      %v2554 = vsel %vm1071, %v2552, %v2553
      %v2558 = vpack.c.bf16 %v1794, %v1794
      %v2559 = vpack.c.bf16 %v2470, %v2470
      %v2560 = vpack.c.bf16 %v2473, %v2473
      %v2561 = vpack.c.bf16 %v2476, %v2476
      %v2562 = vpack.c.bf16 %v2548, %v2548
      %v2563 = vpack.c.bf16 %v2551, %v2551
      %v2564 = vpack.c.bf16 %v2554, %v2554
      %v2566 = vsel %vm252, %v2564, 0
      %2568 = vmatpush.bf16.msra.mxu0 %v1439
      %2569 = vmatpush.bf16.msra.mxu0 %v1438
      %2570 = vmatpush.bf16.msra.mxu0 %v1437
      %2571 = vmatpush.bf16.msra.mxu0 %v1436
      %2572 = vmatpush.bf16.msra.mxu0 %v1435
      %2573 = vmatpush.bf16.msra.mxu0 %v1434
      %2574 = vmatpush.bf16.msra.mxu0 %v1433
      %2575 = vmatpush.bf16.msra.mxu0 %v1432
      %2576 = vmatmul.bf16.gmra.mxu0 %v2558
      %v2577 = vpop.f32.mrf.mxu0
      %v2578 = vadd.f32 %v1230, %v2577
      %v2579 = vpop.f32.mrf.mxu0
      %2580 = vdwg.mxu0
      %2581 = vmatpush.bf16.msra.mxu0 %v1447
      %2582 = vmatpush.bf16.msra.mxu0 %v1446
      %2583 = vmatpush.bf16.msra.mxu0 %v1445
      %2584 = vmatpush.bf16.msra.mxu0 %v1444
      %2585 = vmatpush.bf16.msra.mxu0 %v1443
      %2586 = vmatpush.bf16.msra.mxu0 %v1442
      %2587 = vmatpush.bf16.msra.mxu0 %v1441
      %2588 = vmatpush.bf16.msra.mxu0 %v1440
      %2589 = vmatmul.bf16.gmra.mxu0 %v2559
      %v2590 = vpop.f32.mrf.mxu0
      %v2591 = vadd.f32 %v2578, %v2590
      %v2592 = vpop.f32.mrf.mxu0
      %2593 = vdwg.mxu0
      %2594 = vmatpush.bf16.msra.mxu0 %v1455
      %2595 = vmatpush.bf16.msra.mxu0 %v1454
      %2596 = vmatpush.bf16.msra.mxu0 %v1453
      %2597 = vmatpush.bf16.msra.mxu0 %v1452
      %2598 = vmatpush.bf16.msra.mxu0 %v1451
      %2599 = vmatpush.bf16.msra.mxu0 %v1450
      %2600 = vmatpush.bf16.msra.mxu0 %v1449
      %2601 = vmatpush.bf16.msra.mxu0 %v1448
      %2602 = vmatmul.bf16.gmra.mxu0 %v2560
      %v2603 = vpop.f32.mrf.mxu0
      %v2604 = vadd.f32 %v2591, %v2603
      %v2605 = vpop.f32.mrf.mxu0
      %2606 = vdwg.mxu0
      %2607 = vmatpush.bf16.msra.mxu0 %v1463
      %2608 = vmatpush.bf16.msra.mxu0 %v1462
      %2609 = vmatpush.bf16.msra.mxu0 %v1461
      %2610 = vmatpush.bf16.msra.mxu0 %v1460
      %2611 = vmatpush.bf16.msra.mxu0 %v1459
      %2612 = vmatpush.bf16.msra.mxu0 %v1458
      %2613 = vmatpush.bf16.msra.mxu0 %v1457
      %2614 = vmatpush.bf16.msra.mxu0 %v1456
      %2615 = vmatmul.bf16.gmra.mxu0 %v2561
      %v2616 = vpop.f32.mrf.mxu0
      %v2617 = vadd.f32 %v2604, %v2616
      %v2618 = vpop.f32.mrf.mxu0
      %2619 = vdwg.mxu0
      %2620 = vmatpush.bf16.msra.mxu0 %v1471
      %2621 = vmatpush.bf16.msra.mxu0 %v1470
      %2622 = vmatpush.bf16.msra.mxu0 %v1469
      %2623 = vmatpush.bf16.msra.mxu0 %v1468
      %2624 = vmatpush.bf16.msra.mxu0 %v1467
      %2625 = vmatpush.bf16.msra.mxu0 %v1466
      %2626 = vmatpush.bf16.msra.mxu0 %v1465
      %2627 = vmatpush.bf16.msra.mxu0 %v1464
      %2628 = vmatmul.bf16.gmra.mxu0 %v2562
      %v2629 = vpop.f32.mrf.mxu0
      %v2630 = vadd.f32 %v2617, %v2629
      %v2631 = vpop.f32.mrf.mxu0
      %2632 = vdwg.mxu0
      %2633 = vmatpush.bf16.msra.mxu0 %v1479
      %2634 = vmatpush.bf16.msra.mxu0 %v1478
      %2635 = vmatpush.bf16.msra.mxu0 %v1477
      %2636 = vmatpush.bf16.msra.mxu0 %v1476
      %2637 = vmatpush.bf16.msra.mxu0 %v1475
      %2638 = vmatpush.bf16.msra.mxu0 %v1474
      %2639 = vmatpush.bf16.msra.mxu0 %v1473
      %2640 = vmatpush.bf16.msra.mxu0 %v1472
      %2641 = vmatmul.bf16.gmra.mxu0 %v2563
      %v2642 = vpop.f32.mrf.mxu0
      %v2643 = vadd.f32 %v2630, %v2642
      %v2644 = vpop.f32.mrf.mxu0
      %2645 = vdwg.mxu0
      %2646 = vmatpush.bf16.msra.mxu0 0
      %2647 = vmatpush.bf16.msra.mxu0 0
      %2648 = vmatpush.bf16.msra.mxu0 0
      %2649 = vmatpush.bf16.msra.mxu0 0
      %2650 = vmatpush.bf16.msra.mxu0 0
      %2651 = vmatpush.bf16.msra.mxu0 0
      %2652 = vmatpush.bf16.msra.mxu0 %v1481
      %2653 = vmatpush.bf16.msra.mxu0 %v1480
      %2654 = vmatmul.bf16.gmra.mxu0 %v2566
      %v2655 = vpop.f32.mrf.mxu0
      %v2656 = vadd.f32 %v2643, %v2655
      %v2657 = vpop.f32.mrf.mxu0
      %2658 = vdwg.mxu0
      %v2659 = vmax.f32 %v2656, 0.0
      %2660 = vrot.lane.b32.xlu0 %v1762, 96
      %v2661 = vpop.permute.xlu0 %2660
      %2666 = vrot.lane.b32.xlu0 %v927, 32
      %v2667 = vpop.permute.xlu0 %2666
      %2668 = vrot.lane.b32.xlu0 %v928, 32
      %v2669 = vpop.permute.xlu0 %2668
      %2672 = vrot.lane.b32.xlu0 %v928, 64
      %v2673 = vpop.permute.xlu0 %2672
      %2674 = vrot.lane.b32.xlu0 %v929, 64
      %v2675 = vpop.permute.xlu0 %2674
      %2678 = vrot.lane.b32.xlu0 %v2478, 96
      %v2679 = vpop.permute.xlu0 %2678
      %2680 = vrot.lane.b32.xlu0 %v2477, 96
      %v2681 = vpop.permute.xlu0 %2680
      %2686 = vrot.lane.b32.xlu0 %v2266, 32
      %v2687 = vpop.permute.xlu0 %2686
      %2688 = vrot.lane.b32.xlu0 %v2265, 32
      %v2689 = vpop.permute.xlu0 %2688
      %2692 = vrot.lane.b32.xlu0 %v2269, 64
      %v2693 = vpop.permute.xlu0 %2692
      %2695 = vrot.lane.b32.xlu0 %v2500, 96
      %v2696 = vpop.permute.xlu0 %2695
      %v2698 = vsel %vm1129, %v2054, %v2661
      %v2699 = vsel %vm252, %v1765, %v2026
      %v2700 = vsel %vm1127, %v2699, %v2035
      %v2701 = vsel %vm1127, %v2699, %v2037
      %v2702 = vsel %vm1129, %v2700, %v2044
      %v2703 = vsel %vm1129, %v2701, %v2046
      %v2704 = vsel %vm252, %v2049, %v2667
      %v2705 = vsel %vm252, %v2051, %v2669
      %v2706 = vsel %vm1127, %v2704, %v2673
      %v2707 = vsel %vm1127, %v2705, %v2675
      %v2708 = vsel %vm1129, %v2706, %v2679
      %v2709 = vsel %vm1129, %v2707, %v2681
      %v2710 = vsel %vm252, %v2486, %v2687
      %v2711 = vsel %vm252, %v2485, %v2689
      %v2712 = vsel %vm1127, %v2710, %v2693
      %v2713 = vsel %vm1127, %v2711, %v2693
      %v2714 = vsel %vm1129, %v2712, %v2696
      %v2715 = vsel %vm1129, %v2713, %v2696
      %v2716 = vrot.slane %v930, 1
      %v2717 = vrot.slane %v931, 1
      %v2718 = vsel %vm1039, %v2716, %v2717
      %2719 = vrot.lane.b32.xlu0 %v2718, 32
      %v2720 = vpop.permute.xlu0 %2719
      %2721 = vrot.lane.b32.xlu0 %v2717, 32
      %v2722 = vpop.permute.xlu0 %2721
      %v2725 = vrot.slane %v930, 2
      %v2726 = vrot.slane %v931, 2
      %v2727 = vsel %vm1046, %v2725, %v2726
      %2728 = vrot.lane.b32.xlu0 %v2727, 64
      %v2729 = vpop.permute.xlu0 %2728
      %2730 = vrot.lane.b32.xlu0 %v2726, 64
      %v2731 = vpop.permute.xlu0 %2730
      %v2734 = vrot.slane %v931, 3
      %v2735 = vsel %vm1053, %v2497, %v2734
      %2736 = vrot.lane.b32.xlu0 %v2735, 96
      %v2737 = vpop.permute.xlu0 %2736
      %2738 = vrot.lane.b32.xlu0 %v2734, 96
      %v2739 = vpop.permute.xlu0 %2738
      %v2743 = vrot.slane %v932, 3
      %v2744 = vsel %vm1053, %v2734, %v2743
      %v2747 = vrot.slane %v932, 4
      %v2748 = vsel %vm1060, %v2501, %v2747
      %2749 = vrot.lane.b32.xlu0 %v2748, 32
      %v2750 = vpop.permute.xlu0 %2749
      %2751 = vrot.lane.b32.xlu0 %v2747, 32
      %v2752 = vpop.permute.xlu0 %2751
      %v2755 = vrot.slane %v932, 5
      %v2756 = vsel %vm1071, %v2510, %v2755
      %2757 = vrot.lane.b32.xlu0 %v2756, 64
      %v2758 = vpop.permute.xlu0 %2757
      %2759 = vrot.lane.b32.xlu0 %v2755, 64
      %v2760 = vpop.permute.xlu0 %2759
      %v2763 = vrot.slane %v932, 6
      %v2764 = vsel %vm1078, %v2519, %v2763
      %2765 = vrot.lane.b32.xlu0 %v2764, 96
      %v2766 = vpop.permute.xlu0 %2765
      %2767 = vrot.lane.b32.xlu0 %v2763, 96
      %v2768 = vpop.permute.xlu0 %2767
      %v2771 = vrot.slane %v932, 7
      %v2772 = vsel %vm252, %v930, %v2720
      %v2773 = vsel %vm252, %v931, %v2722
      %v2774 = vsel %vm1127, %v2772, %v2729
      %v2775 = vsel %vm1127, %v2773, %v2731
      %v2776 = vsel %vm1129, %v2774, %v2737
      %v2777 = vsel %vm1129, %v2775, %v2739
      %v2778 = vsel %vm252, %v2744, %v2750
      %v2779 = vsel %vm252, %v2743, %v2752
      %v2780 = vsel %vm1127, %v2778, %v2758
      %v2781 = vsel %vm1127, %v2779, %v2760
      %v2782 = vsel %vm1129, %v2780, %v2766
      %v2783 = vsel %vm1129, %v2781, %v2768
      %v2788 = vrot.slane %v2776, 5
      %v2789 = vrot.slane %v2782, 5
      %v2790 = vrot.slane %v2771, 5
      %v2791 = vrot.slane %v2777, 5
      %v2792 = vsel %vm1071, %v2788, %v2791
      %v2793 = vrot.slane %v2783, 5
      %v2794 = vsel %vm1071, %v2789, %v2793
      %v2795 = vsel %vm1071, %v2790, %v2790
      %v2802 = vpack.c.bf16 %v2057, %v2698
      %v2803 = vpack.c.bf16 %v2703, %v2702
      %v2804 = vpack.c.bf16 %v2709, %v2708
      %v2805 = vpack.c.bf16 %v2715, %v2714
      %v2806 = vpack.c.bf16 %v2792, %v2788
      %v2807 = vpack.c.bf16 %v2794, %v2789
      %v2808 = vpack.c.bf16 %v2795, %v2790
      %v2816 = vrot.slane %v2802, 2
      %v2817 = vrot.slane %v2803, 2
      %v2818 = vrot.slane %v2804, 2
      %v2819 = vrot.slane %v2805, 2
      %v2820 = vrot.slane %v2806, 2
      %v2821 = vrot.slane %v2807, 2
      %v2822 = vrot.slane %v2808, 2
      %v2830 = vsel %vm252, %v2822, 0
      %2832 = vmatpush.bf16.msra.mxu0 %v1439
      %2833 = vmatpush.bf16.msra.mxu0 %v1438
      %2834 = vmatpush.bf16.msra.mxu0 %v1437
      %2835 = vmatpush.bf16.msra.mxu0 %v1436
      %2836 = vmatpush.bf16.msra.mxu0 %v1435
      %2837 = vmatpush.bf16.msra.mxu0 %v1434
      %2838 = vmatpush.bf16.msra.mxu0 %v1433
      %2839 = vmatpush.bf16.msra.mxu0 %v1432
      %2840 = vmatmul.bf16.gmra.mxu0 %v2816
      %v2841 = vpop.f32.mrf.mxu0
      %v2842 = vadd.f32 %v1230, %v2841
      %v2843 = vpop.f32.mrf.mxu0
      %2844 = vdwg.mxu0
      %2845 = vmatpush.bf16.msra.mxu0 %v1447
      %2846 = vmatpush.bf16.msra.mxu0 %v1446
      %2847 = vmatpush.bf16.msra.mxu0 %v1445
      %2848 = vmatpush.bf16.msra.mxu0 %v1444
      %2849 = vmatpush.bf16.msra.mxu0 %v1443
      %2850 = vmatpush.bf16.msra.mxu0 %v1442
      %2851 = vmatpush.bf16.msra.mxu0 %v1441
      %2852 = vmatpush.bf16.msra.mxu0 %v1440
      %2853 = vmatmul.bf16.gmra.mxu0 %v2817
      %v2854 = vpop.f32.mrf.mxu0
      %v2855 = vadd.f32 %v2842, %v2854
      %v2856 = vpop.f32.mrf.mxu0
      %2857 = vdwg.mxu0
      %2858 = vmatpush.bf16.msra.mxu0 %v1455
      %2859 = vmatpush.bf16.msra.mxu0 %v1454
      %2860 = vmatpush.bf16.msra.mxu0 %v1453
      %2861 = vmatpush.bf16.msra.mxu0 %v1452
      %2862 = vmatpush.bf16.msra.mxu0 %v1451
      %2863 = vmatpush.bf16.msra.mxu0 %v1450
      %2864 = vmatpush.bf16.msra.mxu0 %v1449
      %2865 = vmatpush.bf16.msra.mxu0 %v1448
      %2866 = vmatmul.bf16.gmra.mxu0 %v2818
      %v2867 = vpop.f32.mrf.mxu0
      %v2868 = vadd.f32 %v2855, %v2867
      %v2869 = vpop.f32.mrf.mxu0
      %2870 = vdwg.mxu0
      %2871 = vmatpush.bf16.msra.mxu0 %v1463
      %2872 = vmatpush.bf16.msra.mxu0 %v1462
      %2873 = vmatpush.bf16.msra.mxu0 %v1461
      %2874 = vmatpush.bf16.msra.mxu0 %v1460
      %2875 = vmatpush.bf16.msra.mxu0 %v1459
      %2876 = vmatpush.bf16.msra.mxu0 %v1458
      %2877 = vmatpush.bf16.msra.mxu0 %v1457
      %2878 = vmatpush.bf16.msra.mxu0 %v1456
      %2879 = vmatmul.bf16.gmra.mxu0 %v2819
      %v2880 = vpop.f32.mrf.mxu0
      %v2881 = vadd.f32 %v2868, %v2880
      %v2882 = vpop.f32.mrf.mxu0
      %2883 = vdwg.mxu0
      %2884 = vmatpush.bf16.msra.mxu0 %v1471
      %2885 = vmatpush.bf16.msra.mxu0 %v1470
      %2886 = vmatpush.bf16.msra.mxu0 %v1469
      %2887 = vmatpush.bf16.msra.mxu0 %v1468
      %2888 = vmatpush.bf16.msra.mxu0 %v1467
      %2889 = vmatpush.bf16.msra.mxu0 %v1466
      %2890 = vmatpush.bf16.msra.mxu0 %v1465
      %2891 = vmatpush.bf16.msra.mxu0 %v1464
      %2892 = vmatmul.bf16.gmra.mxu0 %v2820
      %v2893 = vpop.f32.mrf.mxu0
      %v2894 = vadd.f32 %v2881, %v2893
      %v2895 = vpop.f32.mrf.mxu0
      %2896 = vdwg.mxu0
      %2897 = vmatpush.bf16.msra.mxu0 %v1479
      %2898 = vmatpush.bf16.msra.mxu0 %v1478
      %2899 = vmatpush.bf16.msra.mxu0 %v1477
      %2900 = vmatpush.bf16.msra.mxu0 %v1476
      %2901 = vmatpush.bf16.msra.mxu0 %v1475
      %2902 = vmatpush.bf16.msra.mxu0 %v1474
      %2903 = vmatpush.bf16.msra.mxu0 %v1473
      %2904 = vmatpush.bf16.msra.mxu0 %v1472
      %2905 = vmatmul.bf16.gmra.mxu0 %v2821
      %v2906 = vpop.f32.mrf.mxu0
      %v2907 = vadd.f32 %v2894, %v2906
      %v2908 = vpop.f32.mrf.mxu0
      %2909 = vdwg.mxu0
      %2910 = vmatpush.bf16.msra.mxu0 0
      %2911 = vmatpush.bf16.msra.mxu0 0
      %2912 = vmatpush.bf16.msra.mxu0 0
      %2913 = vmatpush.bf16.msra.mxu0 0
      %2914 = vmatpush.bf16.msra.mxu0 0
      %2915 = vmatpush.bf16.msra.mxu0 0
      %2916 = vmatpush.bf16.msra.mxu0 %v1481
      %2917 = vmatpush.bf16.msra.mxu0 %v1480
      %2918 = vmatmul.bf16.gmra.mxu0 %v2830
      %v2919 = vpop.f32.mrf.mxu0
      %v2920 = vadd.f32 %v2907, %v2919
      %v2921 = vpop.f32.mrf.mxu0
      %2922 = vdwg.mxu0
      %v2923 = vmax.f32 %v2920, 0.0
      %v2925 = vsel %vm1085, %v2050, %v2293
      %2927 = vrot.lane.b32.xlu0 %v929, 32
      %v2928 = vpop.permute.xlu0 %2927
      %2930 = vrot.lane.b32.xlu0 %v930, 64
      %v2931 = vpop.permute.xlu0 %2930
      %2933 = vrot.lane.b32.xlu0 %v2718, 96
      %v2934 = vpop.permute.xlu0 %2933
      %2937 = vrot.lane.b32.xlu0 %v2735, 32
      %v2938 = vpop.permute.xlu0 %2937
      %2940 = vrot.lane.b32.xlu0 %v2502, 64
      %v2941 = vpop.permute.xlu0 %2940
      %2943 = vrot.lane.b32.xlu0 %v2748, 96
      %v2944 = vpop.permute.xlu0 %2943
      %v2946 = vsel %vm252, %v2024, %v2272
      %v2947 = vsel %vm1127, %v2946, %v2280
      %v2948 = vsel %vm1129, %v2947, %v2288
      %v2949 = vsel %vm252, %v2925, %v2928
      %v2950 = vsel %vm1127, %v2949, %v2931
      %v2951 = vsel %vm1129, %v2950, %v2934
      %v2952 = vsel %vm252, %v2727, %v2938
      %v2953 = vsel %vm1127, %v2952, %v2941
      %v2954 = vsel %vm1129, %v2953, %v2944
      %v2955 = vrot.slane %v932, 1
      %v2956 = vsel %vm1039, %v2717, %v2955
      %2957 = vrot.lane.b32.xlu0 %v2956, 32
      %v2958 = vpop.permute.xlu0 %2957
      %2959 = vrot.lane.b32.xlu0 %v2955, 32
      %v2960 = vpop.permute.xlu0 %2959
      %v2963 = vrot.slane %v932, 2
      %v2964 = vsel %vm1046, %v2726, %v2963
      %2965 = vrot.lane.b32.xlu0 %v2964, 64
      %v2966 = vpop.permute.xlu0 %2965
      %2967 = vrot.lane.b32.xlu0 %v2963, 64
      %v2968 = vpop.permute.xlu0 %2967
      %2971 = vrot.lane.b32.xlu0 %v2743, 96
      %v2972 = vpop.permute.xlu0 %2971
      %v2975 = vrot.slane %v933, 3
      %v2978 = vrot.slane %v933, 4
      %v2979 = vrot.slane %v934, 4
      %v2980 = vsel %vm1060, %v2978, %v2979
      %2981 = vrot.lane.b32.xlu0 %v2978, 32
      %v2982 = vpop.permute.xlu0 %2981
      %2983 = vrot.lane.b32.xlu0 %v2980, 32
      %v2984 = vpop.permute.xlu0 %2983
      %v2987 = vrot.slane %v933, 5
      %v2988 = vrot.slane %v934, 5
      %v2989 = vsel %vm1071, %v2987, %v2988
      %2990 = vrot.lane.b32.xlu0 %v2987, 64
      %v2991 = vpop.permute.xlu0 %2990
      %2992 = vrot.lane.b32.xlu0 %v2989, 64
      %v2993 = vpop.permute.xlu0 %2992
      %v2996 = vrot.slane %v933, 6
      %v2997 = vrot.slane %v934, 6
      %v2998 = vsel %vm1078, %v2996, %v2997
      %2999 = vrot.lane.b32.xlu0 %v2996, 96
      %v3000 = vpop.permute.xlu0 %2999
      %3001 = vrot.lane.b32.xlu0 %v2998, 96
      %v3002 = vpop.permute.xlu0 %3001
      %v3005 = vrot.slane %v933, 7
      %v3006 = vrot.slane %v934, 7
      %v3007 = vsel %vm1085, %v3005, %v3006
      %v3008 = vsel %vm252, %v931, %v2958
      %v3009 = vsel %vm252, %v932, %v2960
      %v3010 = vsel %vm1127, %v3008, %v2966
      %v3011 = vsel %vm1127, %v3009, %v2968
      %v3012 = vsel %vm1129, %v3010, %v2972
      %v3013 = vsel %vm1129, %v3011, %v2972
      %v3014 = vsel %vm252, %v2975, %v2982
      %v3015 = vsel %vm252, %v2975, %v2984
      %v3016 = vsel %vm1127, %v3014, %v2991
      %v3017 = vsel %vm1127, %v3015, %v2993
      %v3018 = vsel %vm1129, %v3016, %v3000
      %v3019 = vsel %vm1129, %v3017, %v3002
      %v3024 = vrot.slane %v3012, 5
      %v3025 = vrot.slane %v3013, 5
      %v3026 = vsel %vm1071, %v3024, %v3025
      %v3027 = vrot.slane %v3018, 5
      %v3028 = vrot.slane %v3019, 5
      %v3029 = vsel %vm1071, %v3027, %v3028
      %v3030 = vrot.slane %v3005, 5
      %v3031 = vrot.slane %v3007, 5
      %v3032 = vsel %vm1071, %v3030, %v3031
      %v3036 = vpack.c.bf16 %v2298, %v2298
      %v3037 = vpack.c.bf16 %v2948, %v2948
      %v3038 = vpack.c.bf16 %v2951, %v2951
      %v3039 = vpack.c.bf16 %v2954, %v2954
      %v3040 = vpack.c.bf16 %v3026, %v3026
      %v3041 = vpack.c.bf16 %v3029, %v3029
      %v3042 = vpack.c.bf16 %v3032, %v3032
      %v3044 = vsel %vm252, %v3042, 0
      %3046 = vmatpush.bf16.msra.mxu0 %v1439
      %3047 = vmatpush.bf16.msra.mxu0 %v1438
      %3048 = vmatpush.bf16.msra.mxu0 %v1437
      %3049 = vmatpush.bf16.msra.mxu0 %v1436
      %3050 = vmatpush.bf16.msra.mxu0 %v1435
      %3051 = vmatpush.bf16.msra.mxu0 %v1434
      %3052 = vmatpush.bf16.msra.mxu0 %v1433
      %3053 = vmatpush.bf16.msra.mxu0 %v1432
      %3054 = vmatmul.bf16.gmra.mxu0 %v3036
      %v3055 = vpop.f32.mrf.mxu0
      %v3056 = vadd.f32 %v1230, %v3055
      %v3057 = vpop.f32.mrf.mxu0
      %3058 = vdwg.mxu0
      %3059 = vmatpush.bf16.msra.mxu0 %v1447
      %3060 = vmatpush.bf16.msra.mxu0 %v1446
      %3061 = vmatpush.bf16.msra.mxu0 %v1445
      %3062 = vmatpush.bf16.msra.mxu0 %v1444
      %3063 = vmatpush.bf16.msra.mxu0 %v1443
      %3064 = vmatpush.bf16.msra.mxu0 %v1442
      %3065 = vmatpush.bf16.msra.mxu0 %v1441
      %3066 = vmatpush.bf16.msra.mxu0 %v1440
      %3067 = vmatmul.bf16.gmra.mxu0 %v3037
      %v3068 = vpop.f32.mrf.mxu0
      %v3069 = vadd.f32 %v3056, %v3068
      %v3070 = vpop.f32.mrf.mxu0
      %3071 = vdwg.mxu0
      %3072 = vmatpush.bf16.msra.mxu0 %v1455
      %3073 = vmatpush.bf16.msra.mxu0 %v1454
      %3074 = vmatpush.bf16.msra.mxu0 %v1453
      %3075 = vmatpush.bf16.msra.mxu0 %v1452
      %3076 = vmatpush.bf16.msra.mxu0 %v1451
      %3077 = vmatpush.bf16.msra.mxu0 %v1450
      %3078 = vmatpush.bf16.msra.mxu0 %v1449
      %3079 = vmatpush.bf16.msra.mxu0 %v1448
      %3080 = vmatmul.bf16.gmra.mxu0 %v3038
      %v3081 = vpop.f32.mrf.mxu0
      %v3082 = vadd.f32 %v3069, %v3081
      %v3083 = vpop.f32.mrf.mxu0
      %3084 = vdwg.mxu0
      %3085 = vmatpush.bf16.msra.mxu0 %v1463
      %3086 = vmatpush.bf16.msra.mxu0 %v1462
      %3087 = vmatpush.bf16.msra.mxu0 %v1461
      %3088 = vmatpush.bf16.msra.mxu0 %v1460
      %3089 = vmatpush.bf16.msra.mxu0 %v1459
      %3090 = vmatpush.bf16.msra.mxu0 %v1458
      %3091 = vmatpush.bf16.msra.mxu0 %v1457
      %3092 = vmatpush.bf16.msra.mxu0 %v1456
      %3093 = vmatmul.bf16.gmra.mxu0 %v3039
      %v3094 = vpop.f32.mrf.mxu0
      %v3095 = vadd.f32 %v3082, %v3094
      %v3096 = vpop.f32.mrf.mxu0
      %3097 = vdwg.mxu0
      %3098 = vmatpush.bf16.msra.mxu0 %v1471
      %3099 = vmatpush.bf16.msra.mxu0 %v1470
      %3100 = vmatpush.bf16.msra.mxu0 %v1469
      %3101 = vmatpush.bf16.msra.mxu0 %v1468
      %3102 = vmatpush.bf16.msra.mxu0 %v1467
      %3103 = vmatpush.bf16.msra.mxu0 %v1466
      %3104 = vmatpush.bf16.msra.mxu0 %v1465
      %3105 = vmatpush.bf16.msra.mxu0 %v1464
      %3106 = vmatmul.bf16.gmra.mxu0 %v3040
      %v3107 = vpop.f32.mrf.mxu0
      %v3108 = vadd.f32 %v3095, %v3107
      %v3109 = vpop.f32.mrf.mxu0
      %3110 = vdwg.mxu0
      %3111 = vmatpush.bf16.msra.mxu0 %v1479
      %3112 = vmatpush.bf16.msra.mxu0 %v1478
      %3113 = vmatpush.bf16.msra.mxu0 %v1477
      %3114 = vmatpush.bf16.msra.mxu0 %v1476
      %3115 = vmatpush.bf16.msra.mxu0 %v1475
      %3116 = vmatpush.bf16.msra.mxu0 %v1474
      %3117 = vmatpush.bf16.msra.mxu0 %v1473
      %3118 = vmatpush.bf16.msra.mxu0 %v1472
      %3119 = vmatmul.bf16.gmra.mxu0 %v3041
      %v3120 = vpop.f32.mrf.mxu0
      %v3121 = vadd.f32 %v3108, %v3120
      %v3122 = vpop.f32.mrf.mxu0
      %3123 = vdwg.mxu0
      %3124 = vmatpush.bf16.msra.mxu0 0
      %3125 = vmatpush.bf16.msra.mxu0 0
      %3126 = vmatpush.bf16.msra.mxu0 0
      %3127 = vmatpush.bf16.msra.mxu0 0
      %3128 = vmatpush.bf16.msra.mxu0 0
      %3129 = vmatpush.bf16.msra.mxu0 0
      %3130 = vmatpush.bf16.msra.mxu0 %v1481
      %3131 = vmatpush.bf16.msra.mxu0 %v1480
      %3132 = vmatmul.bf16.gmra.mxu0 %v3044
      %v3133 = vpop.f32.mrf.mxu0
      %v3134 = vadd.f32 %v3121, %v3133
      %v3135 = vpop.f32.mrf.mxu0
      %3136 = vdwg.mxu0
      %v3137 = vmax.f32 %v3134, 0.0
      %3138 = vrot.lane.b32.xlu0 %v2266, 96
      %v3139 = vpop.permute.xlu0 %3138
      %3144 = vrot.lane.b32.xlu0 %v930, 32
      %v3145 = vpop.permute.xlu0 %3144
      %3146 = vrot.lane.b32.xlu0 %v931, 32
      %v3147 = vpop.permute.xlu0 %3146
      %3150 = vrot.lane.b32.xlu0 %v931, 64
      %v3151 = vpop.permute.xlu0 %3150
      %3152 = vrot.lane.b32.xlu0 %v932, 64
      %v3153 = vpop.permute.xlu0 %3152
      %3156 = vrot.lane.b32.xlu0 %v2956, 96
      %v3157 = vpop.permute.xlu0 %3156
      %3158 = vrot.lane.b32.xlu0 %v2955, 96
      %v3159 = vpop.permute.xlu0 %3158
      %3164 = vrot.lane.b32.xlu0 %v2744, 32
      %v3165 = vpop.permute.xlu0 %3164
      %3166 = vrot.lane.b32.xlu0 %v2743, 32
      %v3167 = vpop.permute.xlu0 %3166
      %3170 = vrot.lane.b32.xlu0 %v2747, 64
      %v3171 = vpop.permute.xlu0 %3170
      %3173 = vrot.lane.b32.xlu0 %v2978, 96
      %v3174 = vpop.permute.xlu0 %3173
      %v3176 = vsel %vm1129, %v2532, %v3139
      %v3177 = vsel %vm252, %v2269, %v2504
      %v3178 = vsel %vm1127, %v3177, %v2513
      %v3179 = vsel %vm1127, %v3177, %v2515
      %v3180 = vsel %vm1129, %v3178, %v2522
      %v3181 = vsel %vm1129, %v3179, %v2524
      %v3182 = vsel %vm252, %v2527, %v3145
      %v3183 = vsel %vm252, %v2529, %v3147
      %v3184 = vsel %vm1127, %v3182, %v3151
      %v3185 = vsel %vm1127, %v3183, %v3153
      %v3186 = vsel %vm1129, %v3184, %v3157
      %v3187 = vsel %vm1129, %v3185, %v3159
      %v3188 = vsel %vm252, %v2964, %v3165
      %v3189 = vsel %vm252, %v2963, %v3167
      %v3190 = vsel %vm1127, %v3188, %v3171
      %v3191 = vsel %vm1127, %v3189, %v3171
      %v3192 = vsel %vm1129, %v3190, %v3174
      %v3193 = vsel %vm1129, %v3191, %v3174
      %v3194 = vrot.slane %v933, 1
      %v3195 = vrot.slane %v934, 1
      %v3196 = vsel %vm1039, %v3194, %v3195
      %3197 = vrot.lane.b32.xlu0 %v3196, 32
      %v3198 = vpop.permute.xlu0 %3197
      %3199 = vrot.lane.b32.xlu0 %v3195, 32
      %v3200 = vpop.permute.xlu0 %3199
      %v3203 = vrot.slane %v933, 2
      %v3204 = vrot.slane %v934, 2
      %v3205 = vsel %vm1046, %v3203, %v3204
      %3206 = vrot.lane.b32.xlu0 %v3205, 64
      %v3207 = vpop.permute.xlu0 %3206
      %3208 = vrot.lane.b32.xlu0 %v3204, 64
      %v3209 = vpop.permute.xlu0 %3208
      %v3212 = vrot.slane %v934, 3
      %v3213 = vsel %vm1053, %v2975, %v3212
      %3214 = vrot.lane.b32.xlu0 %v3213, 96
      %v3215 = vpop.permute.xlu0 %3214
      %3216 = vrot.lane.b32.xlu0 %v3212, 96
      %v3217 = vpop.permute.xlu0 %3216
      %v3221 = vrot.slane %v935, 3
      %v3222 = vsel %vm1053, %v3212, %v3221
      %v3225 = vrot.slane %v935, 4
      %v3226 = vsel %vm1060, %v2979, %v3225
      %3227 = vrot.lane.b32.xlu0 %v3226, 32
      %v3228 = vpop.permute.xlu0 %3227
      %3229 = vrot.lane.b32.xlu0 %v3225, 32
      %v3230 = vpop.permute.xlu0 %3229
      %v3233 = vrot.slane %v935, 5
      %v3234 = vsel %vm1071, %v2988, %v3233
      %3235 = vrot.lane.b32.xlu0 %v3234, 64
      %v3236 = vpop.permute.xlu0 %3235
      %3237 = vrot.lane.b32.xlu0 %v3233, 64
      %v3238 = vpop.permute.xlu0 %3237
      %v3241 = vrot.slane %v935, 6
      %v3242 = vsel %vm1078, %v2997, %v3241
      %3243 = vrot.lane.b32.xlu0 %v3242, 96
      %v3244 = vpop.permute.xlu0 %3243
      %3245 = vrot.lane.b32.xlu0 %v3241, 96
      %v3246 = vpop.permute.xlu0 %3245
      %v3249 = vrot.slane %v935, 7
      %v3250 = vsel %vm252, %v933, %v3198
      %v3251 = vsel %vm252, %v934, %v3200
      %v3252 = vsel %vm1127, %v3250, %v3207
      %v3253 = vsel %vm1127, %v3251, %v3209
      %v3254 = vsel %vm1129, %v3252, %v3215
      %v3255 = vsel %vm1129, %v3253, %v3217
      %v3256 = vsel %vm252, %v3222, %v3228
      %v3257 = vsel %vm252, %v3221, %v3230
      %v3258 = vsel %vm1127, %v3256, %v3236
      %v3259 = vsel %vm1127, %v3257, %v3238
      %v3260 = vsel %vm1129, %v3258, %v3244
      %v3261 = vsel %vm1129, %v3259, %v3246
      %v3266 = vrot.slane %v3254, 5
      %v3267 = vrot.slane %v3260, 5
      %v3268 = vrot.slane %v3249, 5
      %v3269 = vrot.slane %v3255, 5
      %v3270 = vsel %vm1071, %v3266, %v3269
      %v3271 = vrot.slane %v3261, 5
      %v3272 = vsel %vm1071, %v3267, %v3271
      %v3273 = vsel %vm1071, %v3268, %v3268
      %v3280 = vpack.c.bf16 %v2535, %v3176
      %v3281 = vpack.c.bf16 %v3181, %v3180
      %v3282 = vpack.c.bf16 %v3187, %v3186
      %v3283 = vpack.c.bf16 %v3193, %v3192
      %v3284 = vpack.c.bf16 %v3270, %v3266
      %v3285 = vpack.c.bf16 %v3272, %v3267
      %v3286 = vpack.c.bf16 %v3273, %v3268
      %v3294 = vrot.slane %v3280, 2
      %v3295 = vrot.slane %v3281, 2
      %v3296 = vrot.slane %v3282, 2
      %v3297 = vrot.slane %v3283, 2
      %v3298 = vrot.slane %v3284, 2
      %v3299 = vrot.slane %v3285, 2
      %v3300 = vrot.slane %v3286, 2
      %v3308 = vsel %vm252, %v3300, 0
      %3310 = vmatpush.bf16.msra.mxu0 %v1439
      %3311 = vmatpush.bf16.msra.mxu0 %v1438
      %3312 = vmatpush.bf16.msra.mxu0 %v1437
      %3313 = vmatpush.bf16.msra.mxu0 %v1436
      %3314 = vmatpush.bf16.msra.mxu0 %v1435
      %3315 = vmatpush.bf16.msra.mxu0 %v1434
      %3316 = vmatpush.bf16.msra.mxu0 %v1433
      %3317 = vmatpush.bf16.msra.mxu0 %v1432
      %3318 = vmatmul.bf16.gmra.mxu0 %v3294
      %v3319 = vpop.f32.mrf.mxu0
      %v3320 = vadd.f32 %v1230, %v3319
      %v3321 = vpop.f32.mrf.mxu0
      %3322 = vdwg.mxu0
      %3323 = vmatpush.bf16.msra.mxu0 %v1447
      %3324 = vmatpush.bf16.msra.mxu0 %v1446
      %3325 = vmatpush.bf16.msra.mxu0 %v1445
      %3326 = vmatpush.bf16.msra.mxu0 %v1444
      %3327 = vmatpush.bf16.msra.mxu0 %v1443
      %3328 = vmatpush.bf16.msra.mxu0 %v1442
      %3329 = vmatpush.bf16.msra.mxu0 %v1441
      %3330 = vmatpush.bf16.msra.mxu0 %v1440
      %3331 = vmatmul.bf16.gmra.mxu0 %v3295
      %v3332 = vpop.f32.mrf.mxu0
      %v3333 = vadd.f32 %v3320, %v3332
      %v3334 = vpop.f32.mrf.mxu0
      %3335 = vdwg.mxu0
      %3336 = vmatpush.bf16.msra.mxu0 %v1455
      %3337 = vmatpush.bf16.msra.mxu0 %v1454
      %3338 = vmatpush.bf16.msra.mxu0 %v1453
      %3339 = vmatpush.bf16.msra.mxu0 %v1452
      %3340 = vmatpush.bf16.msra.mxu0 %v1451
      %3341 = vmatpush.bf16.msra.mxu0 %v1450
      %3342 = vmatpush.bf16.msra.mxu0 %v1449
      %3343 = vmatpush.bf16.msra.mxu0 %v1448
      %3344 = vmatmul.bf16.gmra.mxu0 %v3296
      %v3345 = vpop.f32.mrf.mxu0
      %v3346 = vadd.f32 %v3333, %v3345
      %v3347 = vpop.f32.mrf.mxu0
      %3348 = vdwg.mxu0
      %3349 = vmatpush.bf16.msra.mxu0 %v1463
      %3350 = vmatpush.bf16.msra.mxu0 %v1462
      %3351 = vmatpush.bf16.msra.mxu0 %v1461
      %3352 = vmatpush.bf16.msra.mxu0 %v1460
      %3353 = vmatpush.bf16.msra.mxu0 %v1459
      %3354 = vmatpush.bf16.msra.mxu0 %v1458
      %3355 = vmatpush.bf16.msra.mxu0 %v1457
      %3356 = vmatpush.bf16.msra.mxu0 %v1456
      %3357 = vmatmul.bf16.gmra.mxu0 %v3297
      %v3358 = vpop.f32.mrf.mxu0
      %v3359 = vadd.f32 %v3346, %v3358
      %v3360 = vpop.f32.mrf.mxu0
      %3361 = vdwg.mxu0
      %3362 = vmatpush.bf16.msra.mxu0 %v1471
      %3363 = vmatpush.bf16.msra.mxu0 %v1470
      %3364 = vmatpush.bf16.msra.mxu0 %v1469
      %3365 = vmatpush.bf16.msra.mxu0 %v1468
      %3366 = vmatpush.bf16.msra.mxu0 %v1467
      %3367 = vmatpush.bf16.msra.mxu0 %v1466
      %3368 = vmatpush.bf16.msra.mxu0 %v1465
      %3369 = vmatpush.bf16.msra.mxu0 %v1464
      %3370 = vmatmul.bf16.gmra.mxu0 %v3298
      %v3371 = vpop.f32.mrf.mxu0
      %v3372 = vadd.f32 %v3359, %v3371
      %v3373 = vpop.f32.mrf.mxu0
      %3374 = vdwg.mxu0
      %3375 = vmatpush.bf16.msra.mxu0 %v1479
      %3376 = vmatpush.bf16.msra.mxu0 %v1478
      %3377 = vmatpush.bf16.msra.mxu0 %v1477
      %3378 = vmatpush.bf16.msra.mxu0 %v1476
      %3379 = vmatpush.bf16.msra.mxu0 %v1475
      %3380 = vmatpush.bf16.msra.mxu0 %v1474
      %3381 = vmatpush.bf16.msra.mxu0 %v1473
      %3382 = vmatpush.bf16.msra.mxu0 %v1472
      %3383 = vmatmul.bf16.gmra.mxu0 %v3299
      %v3384 = vpop.f32.mrf.mxu0
      %v3385 = vadd.f32 %v3372, %v3384
      %v3386 = vpop.f32.mrf.mxu0
      %3387 = vdwg.mxu0
      %3388 = vmatpush.bf16.msra.mxu0 0
      %3389 = vmatpush.bf16.msra.mxu0 0
      %3390 = vmatpush.bf16.msra.mxu0 0
      %3391 = vmatpush.bf16.msra.mxu0 0
      %3392 = vmatpush.bf16.msra.mxu0 0
      %3393 = vmatpush.bf16.msra.mxu0 0
      %3394 = vmatpush.bf16.msra.mxu0 %v1481
      %3395 = vmatpush.bf16.msra.mxu0 %v1480
      %3396 = vmatmul.bf16.gmra.mxu0 %v3308
      %v3397 = vpop.f32.mrf.mxu0
      %v3398 = vadd.f32 %v3385, %v3397
      %v3399 = vpop.f32.mrf.mxu0
      %3400 = vdwg.mxu0
      %v3401 = vmax.f32 %v3398, 0.0
      %v3402 = vmax.f32 %v1626, %v1941
      %v3404 = vrot.slane %v3402, 1
      %v3406 = vmax.f32 %v3402, %v3404
      %v3407 = vmax.f32 %v2181, %v2445
      %v3409 = vrot.slane %v3407, 1
      %v3411 = vmax.f32 %v3407, %v3409
      %v3412 = vmax.f32 %v2659, %v2923
      %v3414 = vrot.slane %v3412, 1
      %v3416 = vmax.f32 %v3412, %v3414
      %v3417 = vmax.f32 %v3137, %v3401
      %v3419 = vrot.slane %v3417, 1
      %v3421 = vmax.f32 %v3417, %v3419
      %v3423 = vrot.slane %v3406, 1
      %v3425 = vrot.slane %v3406, 2
      %v3427 = vrot.slane %v3406, 3
      %v3430 = vrot.slane %v3411, 4
      %v3432 = vrot.slane %v3411, 5
      %v3434 = vrot.slane %v3411, 6
      %v3436 = vrot.slane %v3411, 7
      %v3439 = vrot.slane %v3416, 1
      %v3441 = vrot.slane %v3416, 2
      %v3443 = vrot.slane %v3416, 3
      %v3446 = vrot.slane %v3421, 4
      %v3448 = vrot.slane %v3421, 5
      %v3450 = vrot.slane %v3421, 6
      %v3452 = vrot.slane %v3421, 7
      %v3454 = vsel %vm1085, %v3406, %v3423
      %v3455 = vsel %vm1078, %v3454, %v3425
      %v3456 = vsel %vm1071, %v3455, %v3427
      %v3457 = vsel %vm1060, %v3456, %v3430
      %v3458 = vsel %vm1053, %v3457, %v3432
      %v3459 = vsel %vm1046, %v3458, %v3434
      %v3460 = vsel %vm1039, %v3459, %v3436
      %v3461 = vsel %vm1085, %v3416, %v3439
      %v3462 = vsel %vm1078, %v3461, %v3441
      %v3463 = vsel %vm1071, %v3462, %v3443
      %v3464 = vsel %vm1060, %v3463, %v3446
      %v3465 = vsel %vm1053, %v3464, %v3448
      %v3466 = vsel %vm1046, %v3465, %v3450
      %v3467 = vsel %vm1039, %v3466, %v3452
      %3468 = vst.msk [vmem:[%s224] sm:$0xff] %vm1127, %v3460
      %3469 = vst.msk [vmem:[%s224 + $0x8] sm:$0xff] %vm1127, %v3467
      %p3470 = scmp.lt.s32.totalorder %s16, 1
      %s3471 = scalar_select %p3470, %s16, 1
      %s3472 = smul.addr %s3471, 2
      %s3473 = smul.addr %s3472, 8
      %s3474 = scalar_lea.vmem %s5, %s3473
      // Predicated region
      $region41: #{cnn_mnist_forward.2} parent=39 // pred_check
        %p3475 = pneg %p144
      $region42: #{cnn_mnist_forward.2} parent=39 // pred_check_branch
        %3477 = sbr.rel (%p3475) target = $region44
      $region43: #{cnn_mnist_forward.2} parent=39 // pred_region
        _
      $region44: #{cnn_mnist_forward.2} parent=39 // pred_fallthru
        _
    $region40: #{cnn_mnist_forward.2} parent=5 // pred_fallthru
      _
    %p3478 = scmp.le.s32.totalorder 2, %s11
    // Predicated region
    $region45: #{cnn_mnist_forward.2} parent=5 // pred_check
      %p3479 = pneg %p3478
    $region46: #{cnn_mnist_forward.2} parent=5 // pred_check_branch
      %3481 = sbr.rel (%p3479) target = $region48
    $region47: #{cnn_mnist_forward.2} parent=5 // pred_region
      %s3482 = ssub.s32 %s11, 2
      // Predicated region
      $region49: #{cnn_mnist_forward.2} parent=47 // pred_check
        %p3483 = pneg %p150
      $region50: #{cnn_mnist_forward.2} parent=47 // pred_check_branch
        %3485 = sbr.rel (%p3483) target = $region52
      $region51: #{cnn_mnist_forward.2} parent=47 // pred_region
        %p3486 = scmp.lt.s32.totalorder %s17, 1
        %s3487 = scalar_select %p3486, %s17, 1
        %s3488 = smul.addr %s3487, 2
        %s3489 = smul.addr %s3488, 8
        %s3490 = scalar_lea.vmem %s5, %s3489
      $region52: #{cnn_mnist_forward.2} parent=47 // pred_fallthru
        _
    $region48: #{cnn_mnist_forward.2} parent=5 // pred_fallthru
      _
  $region6: #{cnn_mnist_forward.2} parent=0 // loop_footer
    %s15 = sadd.s32 1, %s11
  $region7: #{cnn_mnist_forward.2} parent=0 // loop_footer_branch
    %10 = sbr.rel target = $region3
  $region8: #{cnn_mnist_forward.2} parent=0 // loop_exit
    _

</llo_original>
